<compile_context>
chip_gen: v6e
topology: v6e:2x2x1
jax: 0.10.0
libtpu: 0.0.40
codegen_flags: <defaults>
</compile_context>

<pallas_src>
import jax
import jax.numpy as jnp
from jax.experimental import pallas as pl
from jax.experimental.pallas import tpu as pltpu

EPS = 1e-5


def _num_cout_blocks():
    """2 Cout tiles on multi-TensorCore chips (v7x/v4/v5p), else 1."""
    try:
        kind = jax.devices()[0].device_kind.lower()
    except Exception:
        return 1
    if any(tag in kind for tag in ("v7", "7x", "v4", "v5p")):
        return 2
    return 1


def model_forward(x_nchw, conv_w, gamma, beta):
    N, C, H, W = x_nchw.shape
    Cout = conv_w.shape[0]
    HW = H * W
    inv_cnt = 1.0 / float(N * HW)

    nblk = _num_cout_blocks()
    if Cout % nblk != 0 or (Cout // nblk) % 8 != 0:
        nblk = 1
    Cb = Cout // nblk

    x3d = x_nchw.reshape(N, C, HW)        # pure reshape (row-major), no copy
    wmat = conv_w.reshape(Cout, C)        # (Cout, Cin)
    g2 = gamma.reshape(Cout, 1)
    b2 = beta.reshape(Cout, 1)

    def fused_kernel(x_ref, w_ref, g_ref, bta_ref, o_ref):
        w = w_ref[...]                                          # (Cb, Cin) f32

        # Pass 1 (the only compute pass): ReLU + 1x1 conv per batch element.
        # The conv output is staged in the VMEM-resident output block; the
        # per-channel sum and sum-of-squares are accumulated directly from the
        # vreg-resident zn, so there is no second traversal for statistics.
        s = jnp.zeros((Cb, 1), jnp.float32)
        ss = jnp.zeros((Cb, 1), jnp.float32)
        for n in range(N):                                      # N=2 static unroll
            xn = jnp.maximum(x_ref[n], 0.0)                     # (Cin, HW)
            zn = jnp.dot(w, xn, preferred_element_type=jnp.float32)  # (Cb, HW)
            o_ref[n] = zn
            s = s + jnp.sum(zn, axis=1, keepdims=True)
            ss = ss + jnp.sum(zn * zn, axis=1, keepdims=True)

        mean = s * inv_cnt                                      # (Cb, 1)
        # Training-mode (biased) variance via E[z^2] - E[z]^2 (f32 accumulation).
        var = ss * inv_cnt - mean * mean
        inv_std = jax.lax.rsqrt(var + EPS)                      # (Cb, 1)

        scale = g_ref[...] * inv_std                            # (Cb, 1)
        shift = bta_ref[...] - mean * scale                     # (Cb, 1)

        # Pass 2 (final): normalize in place (lane-broadcast scale/shift).
        for n in range(N):
            o_ref[n] = o_ref[n] * scale + shift

    out3d = pl.pallas_call(
        fused_kernel,
        out_shape=jax.ShapeDtypeStruct((N, Cout, HW), jnp.float32),
        grid_spec=pltpu.PrefetchScalarGridSpec(
            num_scalar_prefetch=0,
            grid=(nblk,),
            in_specs=[
                pl.BlockSpec((N, C, HW), lambda j: (0, 0, 0)),   # x: VMEM-resident
                pl.BlockSpec((Cb, C), lambda j: (j, 0)),         # weight tile
                pl.BlockSpec((Cb, 1), lambda j: (j, 0)),         # gamma tile
                pl.BlockSpec((Cb, 1), lambda j: (j, 0)),         # beta tile
            ],
            out_specs=pl.BlockSpec((N, Cb, HW), lambda j: (0, j, 0)),
        ),
        compiler_params=pltpu.CompilerParams(
            dimension_semantics=("parallel",)),
    )(x3d, wmat, g2, b2)

    # TODO(synk): BatchNorm running-stat (momentum) update is a training-time
    # side effect that does not affect the forward output; not modeled here.
    return out3d.reshape(N, Cout, H, W)     # pure reshape back to NCHW


def reference_forward(x, conv_w, gamma, beta):
    """Pure-JAX reference matching PyTorch training-mode semantics."""
    y = jnp.maximum(x, 0.0)
    z = jnp.einsum('nchw,oc->nohw', y, conv_w.reshape(conv_w.shape[0], -1))
    mean = jnp.mean(z, axis=(0, 2, 3), keepdims=True)
    var = jnp.mean((z - mean) ** 2, axis=(0, 2, 3), keepdims=True)
    g = gamma.reshape(1, -1, 1, 1)
    b = beta.reshape(1, -1, 1, 1)
    return (z - mean) / jnp.sqrt(var + EPS) * g + b


if __name__ == "__main__":
    key = jax.random.PRNGKey(0)
    k_x, k_w, k_g, k_b = jax.random.split(key, 4)

    # Small shapes consistent with the module: channels fixed at 320 by the conv.
    N, C, H, W = 2, 320, 14, 14
    x = jax.random.normal(k_x, (N, C, H, W), dtype=jnp.float32)

    # Deterministic synthetic parameters (shapes from the module __init__).
    conv_w = jax.random.normal(k_w, (320, 320, 1, 1), dtype=jnp.float32) * 0.05
    gamma = 1.0 + 0.1 * jax.random.normal(k_g, (320,), dtype=jnp.float32)
    beta = 0.1 * jax.random.normal(k_b, (320,), dtype=jnp.float32)

    out = model_forward(x, conv_w, gamma, beta)
    out = jax.block_until_ready(out)

    ref = reference_forward(x, conv_w, gamma, beta)
    assert out.shape == (N, C, H, W)
    assert jnp.allclose(out, ref, rtol=1e-3, atol=1e-3), "mismatch vs reference"

    print("KERNEL_OK")
</pallas_src>

<mosaic_0001>
module attributes {stable_mosaic.version = 11 : i64} {
  func.func @fused_kernel(%arg0: i32, %arg1: memref<2x320x196xf32, #tpu.memory_space<vmem>>, %arg2: memref<320x320xf32, #tpu.memory_space<vmem>>, %arg3: memref<320x1xf32, #tpu.memory_space<vmem>>, %arg4: memref<320x1xf32, #tpu.memory_space<vmem>>, %arg5: memref<2x320x196xf32, #tpu.memory_space<vmem>>) attributes {dimension_semantics = [#tpu.dimension_semantics<parallel>], iteration_bounds = array<i64: 1>, scalar_prefetch = 0 : i64, scratch_operands = 0 : i64, tpu.core_type = #tpu.core_type<tc>, window_params = [{pipeline_mode = #tpu.pipeline_mode<synchronous>, transform_indices = @transform_0, window_bounds = array<i64: 2, 320, 196>}, {transform_indices = @transform_1, window_bounds = array<i64: 320, 320>}, {transform_indices = @transform_2, window_bounds = array<i64: 320, 1>}, {transform_indices = @transform_3, window_bounds = array<i64: 320, 1>}, {transform_indices = @transform_4, window_bounds = array<i64: 2, 320, 196>}]} {
    %c0 = arith.constant 0 : index
    %c0_0 = arith.constant 0 : index
    %0 = vector.load %arg2[%c0, %c0_0] : memref<320x320xf32, #tpu.memory_space<vmem>>, vector<320x320xf32>
    %cst = arith.constant 0.000000e+00 : f32
    %1 = vector.broadcast %cst : f32 to vector<320x1xf32>
    %cst_1 = arith.constant 0.000000e+00 : f32
    %2 = vector.broadcast %cst_1 : f32 to vector<320x1xf32>
    %c0_2 = arith.constant 0 : index
    %c0_3 = arith.constant 0 : index
    %c0_4 = arith.constant 0 : index
    %3 = vector.load %arg1[%c0_2, %c0_3, %c0_4] : memref<2x320x196xf32, #tpu.memory_space<vmem>>, vector<1x320x196xf32>
    %4 = vector.shape_cast %3 : vector<1x320x196xf32> to vector<320x196xf32>
    %cst_5 = arith.constant 0.000000e+00 : f32
    %5 = vector.broadcast %cst_5 : f32 to vector<320x196xf32>
    %6 = arith.maximumf %4, %5 : vector<320x196xf32>
    %cst_6 = arith.constant dense<0.000000e+00> : vector<320x196xf32>
    %7 = tpu.matmul %0, %6, %cst_6 {dimension_numbers = #tpu.dot_dimension_numbers<[1], [0], [0], [1], [0, 0, 1, 1], [], []>} : vector<320x320xf32>, vector<320x196xf32>, vector<320x196xf32> -> vector<320x196xf32>
    %c0_7 = arith.constant 0 : index
    %c0_8 = arith.constant 0 : index
    %c0_9 = arith.constant 0 : index
    %8 = vector.load %arg5[%c0_7, %c0_8, %c0_9] : memref<2x320x196xf32, #tpu.memory_space<vmem>>, vector<1x320x196xf32>
    %9 = vector.shape_cast %8 : vector<1x320x196xf32> to vector<320x196xf32>
    %10 = vector.shape_cast %7 : vector<320x196xf32> to vector<1x320x196xf32>
    tpu.vector_store %arg5[%c0_7, %c0_8, %c0_9], %10 {strides = array<i32>} : memref<2x320x196xf32, #tpu.memory_space<vmem>>, vector<1x320x196xf32>,
    %cst_10 = arith.constant dense<0.000000e+00> : vector<320xf32>
    %11 = vector.multi_reduction <add>, %7, %cst_10 [1] : vector<320x196xf32> to vector<320xf32>
    %12 = vector.shape_cast %11 : vector<320xf32> to vector<320x1xf32>
    %13 = arith.addf %1, %12 : vector<320x1xf32>
    %14 = arith.mulf %7, %7 : vector<320x196xf32>
    %cst_11 = arith.constant dense<0.000000e+00> : vector<320xf32>
    %15 = vector.multi_reduction <add>, %14, %cst_11 [1] : vector<320x196xf32> to vector<320xf32>
    %16 = vector.shape_cast %15 : vector<320xf32> to vector<320x1xf32>
    %17 = arith.addf %2, %16 : vector<320x1xf32>
    %c1 = arith.constant 1 : index
    %c0_12 = arith.constant 0 : index
    %c0_13 = arith.constant 0 : index
    %18 = vector.load %arg1[%c1, %c0_12, %c0_13] : memref<2x320x196xf32, #tpu.memory_space<vmem>>, vector<1x320x196xf32>
    %19 = vector.shape_cast %18 : vector<1x320x196xf32> to vector<320x196xf32>
    %cst_14 = arith.constant 0.000000e+00 : f32
    %20 = vector.broadcast %cst_14 : f32 to vector<320x196xf32>
    %21 = arith.maximumf %19, %20 : vector<320x196xf32>
    %cst_15 = arith.constant dense<0.000000e+00> : vector<320x196xf32>
    %22 = tpu.matmul %0, %21, %cst_15 {dimension_numbers = #tpu.dot_dimension_numbers<[1], [0], [0], [1], [0, 0, 1, 1], [], []>} : vector<320x320xf32>, vector<320x196xf32>, vector<320x196xf32> -> vector<320x196xf32>
    %c1_16 = arith.constant 1 : index
    %c0_17 = arith.constant 0 : index
    %c0_18 = arith.constant 0 : index
    %23 = vector.load %arg5[%c1_16, %c0_17, %c0_18] : memref<2x320x196xf32, #tpu.memory_space<vmem>>, vector<1x320x196xf32>
    %24 = vector.shape_cast %23 : vector<1x320x196xf32> to vector<320x196xf32>
    %25 = vector.shape_cast %22 : vector<320x196xf32> to vector<1x320x196xf32>
    tpu.vector_store %arg5[%c1_16, %c0_17, %c0_18], %25 {strides = array<i32>} : memref<2x320x196xf32, #tpu.memory_space<vmem>>, vector<1x320x196xf32>,
    %cst_19 = arith.constant dense<0.000000e+00> : vector<320xf32>
    %26 = vector.multi_reduction <add>, %22, %cst_19 [1] : vector<320x196xf32> to vector<320xf32>
    %27 = vector.shape_cast %26 : vector<320xf32> to vector<320x1xf32>
    %28 = arith.addf %13, %27 : vector<320x1xf32>
    %29 = arith.mulf %22, %22 : vector<320x196xf32>
    %cst_20 = arith.constant dense<0.000000e+00> : vector<320xf32>
    %30 = vector.multi_reduction <add>, %29, %cst_20 [1] : vector<320x196xf32> to vector<320xf32>
    %31 = vector.shape_cast %30 : vector<320xf32> to vector<320x1xf32>
    %32 = arith.addf %17, %31 : vector<320x1xf32>
    %cst_21 = arith.constant 0.00255102036 : f32
    %33 = vector.broadcast %cst_21 : f32 to vector<320x1xf32>
    %34 = arith.mulf %28, %33 : vector<320x1xf32>
    %cst_22 = arith.constant 0.00255102036 : f32
    %35 = vector.broadcast %cst_22 : f32 to vector<320x1xf32>
    %36 = arith.mulf %32, %35 : vector<320x1xf32>
    %37 = arith.mulf %34, %34 : vector<320x1xf32>
    %38 = arith.subf %36, %37 : vector<320x1xf32>
    %cst_23 = arith.constant 9.99999974E-6 : f32
    %39 = vector.broadcast %cst_23 : f32 to vector<320x1xf32>
    %40 = arith.addf %38, %39 : vector<320x1xf32>
    %41 = math.rsqrt %40 : vector<320x1xf32>
    %c0_24 = arith.constant 0 : index
    %c0_25 = arith.constant 0 : index
    %42 = vector.load %arg3[%c0_24, %c0_25] : memref<320x1xf32, #tpu.memory_space<vmem>>, vector<320x1xf32>
    %43 = arith.mulf %42, %41 : vector<320x1xf32>
    %c0_26 = arith.constant 0 : index
    %c0_27 = arith.constant 0 : index
    %44 = vector.load %arg4[%c0_26, %c0_27] : memref<320x1xf32, #tpu.memory_space<vmem>>, vector<320x1xf32>
    %45 = arith.mulf %34, %43 : vector<320x1xf32>
    %46 = arith.subf %44, %45 : vector<320x1xf32>
    %c0_28 = arith.constant 0 : index
    %c0_29 = arith.constant 0 : index
    %c0_30 = arith.constant 0 : index
    %47 = vector.load %arg5[%c0_28, %c0_29, %c0_30] : memref<2x320x196xf32, #tpu.memory_space<vmem>>, vector<1x320x196xf32>
    %48 = vector.shape_cast %47 : vector<1x320x196xf32> to vector<320x196xf32>
    %49 = vector.broadcast %43 : vector<320x1xf32> to vector<320x196xf32>
    %50 = arith.mulf %48, %49 : vector<320x196xf32>
    %51 = vector.broadcast %46 : vector<320x1xf32> to vector<320x196xf32>
    %52 = arith.addf %50, %51 : vector<320x196xf32>
    %c0_31 = arith.constant 0 : index
    %c0_32 = arith.constant 0 : index
    %c0_33 = arith.constant 0 : index
    %53 = vector.load %arg5[%c0_31, %c0_32, %c0_33] : memref<2x320x196xf32, #tpu.memory_space<vmem>>, vector<1x320x196xf32>
    %54 = vector.shape_cast %53 : vector<1x320x196xf32> to vector<320x196xf32>
    %55 = vector.shape_cast %52 : vector<320x196xf32> to vector<1x320x196xf32>
    tpu.vector_store %arg5[%c0_31, %c0_32, %c0_33], %55 {strides = array<i32>} : memref<2x320x196xf32, #tpu.memory_space<vmem>>, vector<1x320x196xf32>,
    %c1_34 = arith.constant 1 : index
    %c0_35 = arith.constant 0 : index
    %c0_36 = arith.constant 0 : index
    %56 = vector.load %arg5[%c1_34, %c0_35, %c0_36] : memref<2x320x196xf32, #tpu.memory_space<vmem>>, vector<1x320x196xf32>
    %57 = vector.shape_cast %56 : vector<1x320x196xf32> to vector<320x196xf32>
    %58 = vector.broadcast %43 : vector<320x1xf32> to vector<320x196xf32>
    %59 = arith.mulf %57, %58 : vector<320x196xf32>
    %60 = vector.broadcast %46 : vector<320x1xf32> to vector<320x196xf32>
    %61 = arith.addf %59, %60 : vector<320x196xf32>
    %c1_37 = arith.constant 1 : index
    %c0_38 = arith.constant 0 : index
    %c0_39 = arith.constant 0 : index
    %62 = vector.load %arg5[%c1_37, %c0_38, %c0_39] : memref<2x320x196xf32, #tpu.memory_space<vmem>>, vector<1x320x196xf32>
    %63 = vector.shape_cast %62 : vector<1x320x196xf32> to vector<320x196xf32>
    %64 = vector.shape_cast %61 : vector<320x196xf32> to vector<1x320x196xf32>
    tpu.vector_store %arg5[%c1_37, %c0_38, %c0_39], %64 {strides = array<i32>} : memref<2x320x196xf32, #tpu.memory_space<vmem>>, vector<1x320x196xf32>,
    return
  }
  func.func @transform_0(%arg0: i32) -> (i32, i32, i32) {
    %c0_i32 = arith.constant 0 : i32
    %c0_i32_0 = arith.constant 0 : i32
    %c0_i32_1 = arith.constant 0 : i32
    %c0_i32_2 = arith.constant 0 : i32
    return %c0_i32, %c0_i32_0, %c0_i32_1 : i32, i32, i32
  }
  func.func @transform_1(%arg0: i32) -> (i32, i32) {
    %c0_i32 = arith.constant 0 : i32
    %c0_i32_0 = arith.constant 0 : i32
    return %arg0, %c0_i32 : i32, i32
  }
  func.func @transform_2(%arg0: i32) -> (i32, i32) {
    %c0_i32 = arith.constant 0 : i32
    %c0_i32_0 = arith.constant 0 : i32
    return %arg0, %c0_i32 : i32, i32
  }
  func.func @transform_3(%arg0: i32) -> (i32, i32) {
    %c0_i32 = arith.constant 0 : i32
    %c0_i32_0 = arith.constant 0 : i32
    return %arg0, %c0_i32 : i32, i32
  }
  func.func @transform_4(%arg0: i32) -> (i32, i32, i32) {
    %c0_i32 = arith.constant 0 : i32
    %c0_i32_0 = arith.constant 0 : i32
    %c0_i32_1 = arith.constant 0 : i32
    return %c0_i32, %arg0, %c0_i32_0 : i32, i32, i32
  }
}

</mosaic_0001>

<llo_original>
// kernel: tpu_custom_call.1
$region0: #{tpu_custom_call.1}
  #allocation0 [shape = 'u32[]', space=smem, size = 0x4, offset = 0x4, fixed_abs, tag = 'smem constant byte address 0x4 - core index']
  #allocation1 [shape = 'u32[144,128]{1,0:T(1,128)}', space=vmem, size = 0x12000, scoped, tag = 'internal scratch']
  %s0 = inlined_call_operand.vmem [shape: f32[2,320,196], index: 0, kind: input, shape index: {}]
  %s1 = inlined_call_operand.vmem [shape: f32[320,320], index: 1, kind: input, shape index: {}]
  %s2 = inlined_call_operand.vmem [shape: f32[320,1], index: 2, kind: input, shape index: {}]
  %s3 = inlined_call_operand.vmem [shape: f32[320,1], index: 3, kind: input, shape index: {}]
  %s4 = inlined_call_operand.vmem [shape: f32[2,320,196], index: 4, kind: output, shape index: {}]
  %s5 = sld [smem:[#allocation0]]
  $region26: #{tpu_custom_call.1} parent=0
    _
  %s7 = ssub.s32 1, %s5
  %s8 = scalar_select 0, %s7, %s5
  // Predicated region
  $region2: #{tpu_custom_call.1} parent=0 // pred_check
    _
  $region3: #{tpu_custom_call.1} parent=0 // pred_check_branch
    %10 = sbr.rel (0) target = $region5
  $region4: #{tpu_custom_call.1} parent=0 // pred_region
    _
  $region5: #{tpu_custom_call.1} parent=0 // pred_fallthru
    _
  // Predicated region
  $region6: #{tpu_custom_call.1} parent=0 // pred_check
    _
  $region7: #{tpu_custom_call.1} parent=0 // pred_check_branch
    %12 = sbr.rel (0) target = $region9
  $region8: #{tpu_custom_call.1} parent=0 // pred_region
    _
  $region9: #{tpu_custom_call.1} parent=0 // pred_fallthru
    _
  // Predicated region
  $region10: #{tpu_custom_call.1} parent=0 // pred_check
    _
  $region11: #{tpu_custom_call.1} parent=0 // pred_check_branch
    %14 = sbr.rel (0) target = $region13
  $region12: #{tpu_custom_call.1} parent=0 // pred_region
    _
  $region13: #{tpu_custom_call.1} parent=0 // pred_fallthru
    _
  // Predicated region
  $region14: #{tpu_custom_call.1} parent=0 // pred_check
    _
  $region15: #{tpu_custom_call.1} parent=0 // pred_check_branch
    %16 = sbr.rel (0) target = $region17
  $region16: #{tpu_custom_call.1} parent=0 // pred_region
    _
  $region17: #{tpu_custom_call.1} parent=0 // pred_fallthru
    _
  %v17 = vld [vmem:[%s1] sm:$0xff]
  %v18 = vld [vmem:[%s1 + $0x8] sm:$0xff]
  %v19 = vld [vmem:[%s1 + $0x10] sm:$0xff]
  %v20 = vld [vmem:[%s1 + $0x18] sm:$0xff]
  %v21 = vld [vmem:[%s1 + $0x20] sm:$0xff]
  %v22 = vld [vmem:[%s1 + $0x28] sm:$0xff]
  %v23 = vld [vmem:[%s1 + $0x30] sm:$0xff]
  %v24 = vld [vmem:[%s1 + $0x38] sm:$0xff]
  %v25 = vld [vmem:[%s1 + $0x40] sm:$0xff]
  %v26 = vld [vmem:[%s1 + $0x48] sm:$0xff]
  %v27 = vld [vmem:[%s1 + $0x50] sm:$0xff]
  %v28 = vld [vmem:[%s1 + $0x58] sm:$0xff]
  %v29 = vld [vmem:[%s1 + $0x60] sm:$0xff]
  %v30 = vld [vmem:[%s1 + $0x68] sm:$0xff]
  %v31 = vld [vmem:[%s1 + $0x70] sm:$0xff]
  %v32 = vld [vmem:[%s1 + $0x78] sm:$0xff]
  %v33 = vld [vmem:[%s1 + $0x80] sm:$0xff]
  %v34 = vld [vmem:[%s1 + $0x88] sm:$0xff]
  %v35 = vld [vmem:[%s1 + $0x90] sm:$0xff]
  %v36 = vld [vmem:[%s1 + $0x98] sm:$0xff]
  %v37 = vld [vmem:[%s1 + $0xa0] sm:$0xff]
  %v38 = vld [vmem:[%s1 + $0xa8] sm:$0xff]
  %v39 = vld [vmem:[%s1 + $0xb0] sm:$0xff]
  %v40 = vld [vmem:[%s1 + $0xb8] sm:$0xff]
  %v41 = vld [vmem:[%s1 + $0xc0] sm:$0xff]
  %v42 = vld [vmem:[%s1 + $0xc8] sm:$0xff]
  %v43 = vld [vmem:[%s1 + $0xd0] sm:$0xff]
  %v44 = vld [vmem:[%s1 + $0xd8] sm:$0xff]
  %v45 = vld [vmem:[%s1 + $0xe0] sm:$0xff]
  %v46 = vld [vmem:[%s1 + $0xe8] sm:$0xff]
  %v47 = vld [vmem:[%s1 + $0xf0] sm:$0xff]
  %v48 = vld [vmem:[%s1 + $0xf8] sm:$0xff]
  %v49 = vld [vmem:[%s1 + $0x100] sm:$0xff]
  %v50 = vld [vmem:[%s1 + $0x108] sm:$0xff]
  %v51 = vld [vmem:[%s1 + $0x110] sm:$0xff]
  %v52 = vld [vmem:[%s1 + $0x118] sm:$0xff]
  %v53 = vld [vmem:[%s1 + $0x120] sm:$0xff]
  %v54 = vld [vmem:[%s1 + $0x128] sm:$0xff]
  %v55 = vld [vmem:[%s1 + $0x130] sm:$0xff]
  %v56 = vld [vmem:[%s1 + $0x138] sm:$0xff]
  %v57 = vld [vmem:[%s1 + $0x140] sm:$0xff]
  %v58 = vld [vmem:[%s1 + $0x148] sm:$0xff]
  %v59 = vld [vmem:[%s1 + $0x150] sm:$0xff]
  %v60 = vld [vmem:[%s1 + $0x158] sm:$0xff]
  %v61 = vld [vmem:[%s1 + $0x160] sm:$0xff]
  %v62 = vld [vmem:[%s1 + $0x168] sm:$0xff]
  %v63 = vld [vmem:[%s1 + $0x170] sm:$0xff]
  %v64 = vld [vmem:[%s1 + $0x178] sm:$0xff]
  %v65 = vld [vmem:[%s1 + $0x180] sm:$0xff]
  %v66 = vld [vmem:[%s1 + $0x188] sm:$0xff]
  %v67 = vld [vmem:[%s1 + $0x190] sm:$0xff]
  %v68 = vld [vmem:[%s1 + $0x198] sm:$0xff]
  %v69 = vld [vmem:[%s1 + $0x1a0] sm:$0xff]
  %v70 = vld [vmem:[%s1 + $0x1a8] sm:$0xff]
  %v71 = vld [vmem:[%s1 + $0x1b0] sm:$0xff]
  %v72 = vld [vmem:[%s1 + $0x1b8] sm:$0xff]
  %v73 = vld [vmem:[%s1 + $0x1c0] sm:$0xff]
  %v74 = vld [vmem:[%s1 + $0x1c8] sm:$0xff]
  %v75 = vld [vmem:[%s1 + $0x1d0] sm:$0xff]
  %v76 = vld [vmem:[%s1 + $0x1d8] sm:$0xff]
  %v77 = vld [vmem:[%s1 + $0x1e0] sm:$0xff]
  %v78 = vld [vmem:[%s1 + $0x1e8] sm:$0xff]
  %v79 = vld [vmem:[%s1 + $0x1f0] sm:$0xff]
  %v80 = vld [vmem:[%s1 + $0x1f8] sm:$0xff]
  %v81 = vld [vmem:[%s1 + $0x200] sm:$0xff]
  %v82 = vld [vmem:[%s1 + $0x208] sm:$0xff]
  %v83 = vld [vmem:[%s1 + $0x210] sm:$0xff]
  %v84 = vld [vmem:[%s1 + $0x218] sm:$0xff]
  %v85 = vld [vmem:[%s1 + $0x220] sm:$0xff]
  %v86 = vld [vmem:[%s1 + $0x228] sm:$0xff]
  %v87 = vld [vmem:[%s1 + $0x230] sm:$0xff]
  %v88 = vld [vmem:[%s1 + $0x238] sm:$0xff]
  %v89 = vld [vmem:[%s1 + $0x240] sm:$0xff]
  %v90 = vld [vmem:[%s1 + $0x248] sm:$0xff]
  %v91 = vld [vmem:[%s1 + $0x250] sm:$0xff]
  %v92 = vld [vmem:[%s1 + $0x258] sm:$0xff]
  %v93 = vld [vmem:[%s1 + $0x260] sm:$0xff]
  %v94 = vld [vmem:[%s1 + $0x268] sm:$0xff]
  %v95 = vld [vmem:[%s1 + $0x270] sm:$0xff]
  %v96 = vld [vmem:[%s1 + $0x278] sm:$0xff]
  %v97 = vld [vmem:[%s1 + $0x280] sm:$0xff]
  %v98 = vld [vmem:[%s1 + $0x288] sm:$0xff]
  %v99 = vld [vmem:[%s1 + $0x290] sm:$0xff]
  %v100 = vld [vmem:[%s1 + $0x298] sm:$0xff]
  %v101 = vld [vmem:[%s1 + $0x2a0] sm:$0xff]
  %v102 = vld [vmem:[%s1 + $0x2a8] sm:$0xff]
  %v103 = vld [vmem:[%s1 + $0x2b0] sm:$0xff]
  %v104 = vld [vmem:[%s1 + $0x2b8] sm:$0xff]
  %v105 = vld [vmem:[%s1 + $0x2c0] sm:$0xff]
  %v106 = vld [vmem:[%s1 + $0x2c8] sm:$0xff]
  %v107 = vld [vmem:[%s1 + $0x2d0] sm:$0xff]
  %v108 = vld [vmem:[%s1 + $0x2d8] sm:$0xff]
  %v109 = vld [vmem:[%s1 + $0x2e0] sm:$0xff]
  %v110 = vld [vmem:[%s1 + $0x2e8] sm:$0xff]
  %v111 = vld [vmem:[%s1 + $0x2f0] sm:$0xff]
  %v112 = vld [vmem:[%s1 + $0x2f8] sm:$0xff]
  %v113 = vld [vmem:[%s1 + $0x300] sm:$0xff]
  %v114 = vld [vmem:[%s1 + $0x308] sm:$0xff]
  %v115 = vld [vmem:[%s1 + $0x310] sm:$0xff]
  %v116 = vld [vmem:[%s1 + $0x318] sm:$0xff]
  %v117 = vld [vmem:[%s1 + $0x320] sm:$0xff]
  %v118 = vld [vmem:[%s1 + $0x328] sm:$0xff]
  %v119 = vld [vmem:[%s1 + $0x330] sm:$0xff]
  %v120 = vld [vmem:[%s1 + $0x338] sm:$0xff]
  %v121 = vld [vmem:[%s1 + $0x340] sm:$0xff]
  %v122 = vld [vmem:[%s1 + $0x348] sm:$0xff]
  %v123 = vld [vmem:[%s1 + $0x350] sm:$0xff]
  %v124 = vld [vmem:[%s1 + $0x358] sm:$0xff]
  %v125 = vld [vmem:[%s1 + $0x360] sm:$0xff]
  %v126 = vld [vmem:[%s1 + $0x368] sm:$0xff]
  %v127 = vld [vmem:[%s1 + $0x370] sm:$0xff]
  %v128 = vld [vmem:[%s1 + $0x378] sm:$0xff]
  %v129 = vld [vmem:[%s1 + $0x380] sm:$0xff]
  %v130 = vld [vmem:[%s1 + $0x388] sm:$0xff]
  %v131 = vld [vmem:[%s1 + $0x390] sm:$0xff]
  %v132 = vld [vmem:[%s1 + $0x398] sm:$0xff]
  %v133 = vld [vmem:[%s1 + $0x3a0] sm:$0xff]
  %v134 = vld [vmem:[%s1 + $0x3a8] sm:$0xff]
  %v135 = vld [vmem:[%s1 + $0x3b0] sm:$0xff]
  %v136 = vld [vmem:[%s1 + $0x3b8] sm:$0xff]
  %v137 = vld [vmem:[%s0] sm:$0xff]
  %v138 = vld [vmem:[%s0 + $0x8] sm:$0xff]
  %v139 = vld [vmem:[%s0 + $0x10] sm:$0xff]
  %v140 = vld [vmem:[%s0 + $0x18] sm:$0xff]
  %v141 = vld [vmem:[%s0 + $0x20] sm:$0xff]
  %v142 = vld [vmem:[%s0 + $0x28] sm:$0xff]
  %v143 = vld [vmem:[%s0 + $0x30] sm:$0xff]
  %v144 = vld [vmem:[%s0 + $0x38] sm:$0xff]
  %v145 = vld [vmem:[%s0 + $0x40] sm:$0xff]
  %v146 = vld [vmem:[%s0 + $0x48] sm:$0xff]
  %v147 = vld [vmem:[%s0 + $0x50] sm:$0xff]
  %v148 = vld [vmem:[%s0 + $0x58] sm:$0xff]
  %v149 = vld [vmem:[%s0 + $0x60] sm:$0xff]
  %v150 = vld [vmem:[%s0 + $0x68] sm:$0xff]
  %v151 = vld [vmem:[%s0 + $0x70] sm:$0xff]
  %v152 = vld [vmem:[%s0 + $0x78] sm:$0xff]
  %v153 = vld [vmem:[%s0 + $0x80] sm:$0xff]
  %v154 = vld [vmem:[%s0 + $0x88] sm:$0xff]
  %v155 = vld [vmem:[%s0 + $0x90] sm:$0xff]
  %v156 = vld [vmem:[%s0 + $0x98] sm:$0xff]
  %v157 = vld [vmem:[%s0 + $0xa0] sm:$0xff]
  %v158 = vld [vmem:[%s0 + $0xa8] sm:$0xff]
  %v159 = vld [vmem:[%s0 + $0xb0] sm:$0xff]
  %v160 = vld [vmem:[%s0 + $0xb8] sm:$0xff]
  %v161 = vld [vmem:[%s0 + $0xc0] sm:$0xff]
  %v162 = vld [vmem:[%s0 + $0xc8] sm:$0xff]
  %v163 = vld [vmem:[%s0 + $0xd0] sm:$0xff]
  %v164 = vld [vmem:[%s0 + $0xd8] sm:$0xff]
  %v165 = vld [vmem:[%s0 + $0xe0] sm:$0xff]
  %v166 = vld [vmem:[%s0 + $0xe8] sm:$0xff]
  %v167 = vld [vmem:[%s0 + $0xf0] sm:$0xff]
  %v168 = vld [vmem:[%s0 + $0xf8] sm:$0xff]
  %v169 = vld [vmem:[%s0 + $0x100] sm:$0xff]
  %v170 = vld [vmem:[%s0 + $0x108] sm:$0xff]
  %v171 = vld [vmem:[%s0 + $0x110] sm:$0xff]
  %v172 = vld [vmem:[%s0 + $0x118] sm:$0xff]
  %v173 = vld [vmem:[%s0 + $0x120] sm:$0xff]
  %v174 = vld [vmem:[%s0 + $0x128] sm:$0xff]
  %v175 = vld [vmem:[%s0 + $0x130] sm:$0xff]
  %v176 = vld [vmem:[%s0 + $0x138] sm:$0xff]
  %v177 = vld [vmem:[%s0 + $0x140] sm:$0xff]
  %v178 = vld [vmem:[%s0 + $0x148] sm:$0xff]
  %v179 = vld [vmem:[%s0 + $0x150] sm:$0xff]
  %v180 = vld [vmem:[%s0 + $0x158] sm:$0xff]
  %v181 = vld [vmem:[%s0 + $0x160] sm:$0xff]
  %v182 = vld [vmem:[%s0 + $0x168] sm:$0xff]
  %v183 = vld [vmem:[%s0 + $0x170] sm:$0xff]
  %v184 = vld [vmem:[%s0 + $0x178] sm:$0xff]
  %v185 = vld [vmem:[%s0 + $0x180] sm:$0xff]
  %v186 = vld [vmem:[%s0 + $0x188] sm:$0xff]
  %v187 = vld [vmem:[%s0 + $0x190] sm:$0xff]
  %v188 = vld [vmem:[%s0 + $0x198] sm:$0xff]
  %v189 = vld [vmem:[%s0 + $0x1a0] sm:$0xff]
  %v190 = vld [vmem:[%s0 + $0x1a8] sm:$0xff]
  %v191 = vld [vmem:[%s0 + $0x1b0] sm:$0xff]
  %v192 = vld [vmem:[%s0 + $0x1b8] sm:$0xff]
  %v193 = vld [vmem:[%s0 + $0x1c0] sm:$0xff]
  %v194 = vld [vmem:[%s0 + $0x1c8] sm:$0xff]
  %v195 = vld [vmem:[%s0 + $0x1d0] sm:$0xff]
  %v196 = vld [vmem:[%s0 + $0x1d8] sm:$0xff]
  %v197 = vld [vmem:[%s0 + $0x1e0] sm:$0xff]
  %v198 = vld [vmem:[%s0 + $0x1e8] sm:$0xff]
  %v199 = vld [vmem:[%s0 + $0x1f0] sm:$0xff]
  %v200 = vld [vmem:[%s0 + $0x1f8] sm:$0xff]
  %v201 = vld [vmem:[%s0 + $0x200] sm:$0xff]
  %v202 = vld [vmem:[%s0 + $0x208] sm:$0xff]
  %v203 = vld [vmem:[%s0 + $0x210] sm:$0xff]
  %v204 = vld [vmem:[%s0 + $0x218] sm:$0xff]
  %v205 = vld [vmem:[%s0 + $0x220] sm:$0xff]
  %v206 = vld [vmem:[%s0 + $0x228] sm:$0xff]
  %v207 = vld [vmem:[%s0 + $0x230] sm:$0xff]
  %v208 = vld [vmem:[%s0 + $0x238] sm:$0xff]
  %v209 = vld [vmem:[%s0 + $0x240] sm:$0xff]
  %v210 = vld [vmem:[%s0 + $0x248] sm:$0xff]
  %v211 = vld [vmem:[%s0 + $0x250] sm:$0xff]
  %v212 = vld [vmem:[%s0 + $0x258] sm:$0xff]
  %v213 = vld [vmem:[%s0 + $0x260] sm:$0xff]
  %v214 = vld [vmem:[%s0 + $0x268] sm:$0xff]
  %v215 = vld [vmem:[%s0 + $0x270] sm:$0xff]
  %v216 = vld [vmem:[%s0 + $0x278] sm:$0xff]
  %v217 = vmax.f32 %v137, 0.0
  %v218 = vmax.f32 %v138, 0.0
  %v219 = vmax.f32 %v139, 0.0
  %v220 = vmax.f32 %v140, 0.0
  %v221 = vmax.f32 %v141, 0.0
  %v222 = vmax.f32 %v142, 0.0
  %v223 = vmax.f32 %v143, 0.0
  %v224 = vmax.f32 %v144, 0.0
  %v225 = vmax.f32 %v145, 0.0
  %v226 = vmax.f32 %v146, 0.0
  %v227 = vmax.f32 %v147, 0.0
  %v228 = vmax.f32 %v148, 0.0
  %v229 = vmax.f32 %v149, 0.0
  %v230 = vmax.f32 %v150, 0.0
  %v231 = vmax.f32 %v151, 0.0
  %v232 = vmax.f32 %v152, 0.0
  %v233 = vmax.f32 %v153, 0.0
  %v234 = vmax.f32 %v154, 0.0
  %v235 = vmax.f32 %v155, 0.0
  %v236 = vmax.f32 %v156, 0.0
  %v237 = vmax.f32 %v157, 0.0
  %v238 = vmax.f32 %v158, 0.0
  %v239 = vmax.f32 %v159, 0.0
  %v240 = vmax.f32 %v160, 0.0
  %v241 = vmax.f32 %v161, 0.0
  %v242 = vmax.f32 %v162, 0.0
  %v243 = vmax.f32 %v163, 0.0
  %v244 = vmax.f32 %v164, 0.0
  %v245 = vmax.f32 %v165, 0.0
  %v246 = vmax.f32 %v166, 0.0
  %v247 = vmax.f32 %v167, 0.0
  %v248 = vmax.f32 %v168, 0.0
  %v249 = vmax.f32 %v169, 0.0
  %v250 = vmax.f32 %v170, 0.0
  %v251 = vmax.f32 %v171, 0.0
  %v252 = vmax.f32 %v172, 0.0
  %v253 = vmax.f32 %v173, 0.0
  %v254 = vmax.f32 %v174, 0.0
  %v255 = vmax.f32 %v175, 0.0
  %v256 = vmax.f32 %v176, 0.0
  %v257 = vmax.f32 %v177, 0.0
  %v258 = vmax.f32 %v178, 0.0
  %v259 = vmax.f32 %v179, 0.0
  %v260 = vmax.f32 %v180, 0.0
  %v261 = vmax.f32 %v181, 0.0
  %v262 = vmax.f32 %v182, 0.0
  %v263 = vmax.f32 %v183, 0.0
  %v264 = vmax.f32 %v184, 0.0
  %v265 = vmax.f32 %v185, 0.0
  %v266 = vmax.f32 %v186, 0.0
  %v267 = vmax.f32 %v187, 0.0
  %v268 = vmax.f32 %v188, 0.0
  %v269 = vmax.f32 %v189, 0.0
  %v270 = vmax.f32 %v190, 0.0
  %v271 = vmax.f32 %v191, 0.0
  %v272 = vmax.f32 %v192, 0.0
  %v273 = vmax.f32 %v193, 0.0
  %v274 = vmax.f32 %v194, 0.0
  %v275 = vmax.f32 %v195, 0.0
  %v276 = vmax.f32 %v196, 0.0
  %v277 = vmax.f32 %v197, 0.0
  %v278 = vmax.f32 %v198, 0.0
  %v279 = vmax.f32 %v199, 0.0
  %v280 = vmax.f32 %v200, 0.0
  %v281 = vmax.f32 %v201, 0.0
  %v282 = vmax.f32 %v202, 0.0
  %v283 = vmax.f32 %v203, 0.0
  %v284 = vmax.f32 %v204, 0.0
  %v285 = vmax.f32 %v205, 0.0
  %v286 = vmax.f32 %v206, 0.0
  %v287 = vmax.f32 %v207, 0.0
  %v288 = vmax.f32 %v208, 0.0
  %v289 = vmax.f32 %v209, 0.0
  %v290 = vmax.f32 %v210, 0.0
  %v291 = vmax.f32 %v211, 0.0
  %v292 = vmax.f32 %v212, 0.0
  %v293 = vmax.f32 %v213, 0.0
  %v294 = vmax.f32 %v214, 0.0
  %v295 = vmax.f32 %v215, 0.0
  %v296 = vmax.f32 %v216, 0.0
  %vm297 = vcmask 523264
  %v299 = vsel %vm297, %v19, 0
  %v302 = vsel %vm297, %v22, 0
  %v305 = vsel %vm297, %v25, 0
  %v308 = vsel %vm297, %v28, 0
  %v311 = vsel %vm297, %v31, 0
  %v314 = vsel %vm297, %v34, 0
  %v317 = vsel %vm297, %v37, 0
  %v320 = vsel %vm297, %v40, 0
  %v323 = vsel %vm297, %v43, 0
  %v326 = vsel %vm297, %v46, 0
  %v329 = vsel %vm297, %v49, 0
  %v332 = vsel %vm297, %v52, 0
  %v335 = vsel %vm297, %v55, 0
  %v338 = vsel %vm297, %v58, 0
  %v341 = vsel %vm297, %v61, 0
  %v344 = vsel %vm297, %v64, 0
  %v347 = vsel %vm297, %v67, 0
  %v350 = vsel %vm297, %v70, 0
  %v353 = vsel %vm297, %v73, 0
  %v356 = vsel %vm297, %v76, 0
  %v359 = vsel %vm297, %v79, 0
  %v362 = vsel %vm297, %v82, 0
  %v365 = vsel %vm297, %v85, 0
  %v368 = vsel %vm297, %v88, 0
  %v371 = vsel %vm297, %v91, 0
  %v374 = vsel %vm297, %v94, 0
  %v377 = vsel %vm297, %v97, 0
  %v380 = vsel %vm297, %v100, 0
  %v383 = vsel %vm297, %v103, 0
  %v386 = vsel %vm297, %v106, 0
  %v389 = vsel %vm297, %v109, 0
  %v392 = vsel %vm297, %v112, 0
  %v395 = vsel %vm297, %v115, 0
  %v398 = vsel %vm297, %v118, 0
  %v401 = vsel %vm297, %v121, 0
  %v404 = vsel %vm297, %v124, 0
  %v407 = vsel %vm297, %v127, 0
  %v410 = vsel %vm297, %v130, 0
  %v413 = vsel %vm297, %v133, 0
  %v416 = vsel %vm297, %v136, 0
  %418 = vmatprep.subr.mxu0 %v248
  %419 = vmatpush1.msra.mxu0 %v247
  %420 = vmatprep.subr.mxu0 %v246
  %421 = vmatpush1.msra.mxu0 %v245
  %422 = vmatprep.subr.mxu0 %v244
  %423 = vmatpush1.msra.mxu0 %v243
  %424 = vmatprep.subr.mxu0 %v242
  %425 = vmatpush1.msra.mxu0 %v241
  %426 = vmatprep.subr.mxu0 %v240
  %427 = vmatpush1.msra.mxu0 %v239
  %428 = vmatprep.subr.mxu0 %v238
  %429 = vmatpush1.msra.mxu0 %v237
  %430 = vmatprep.subr.mxu0 %v236
  %431 = vmatpush1.msra.mxu0 %v235
  %432 = vmatprep.subr.mxu0 %v234
  %433 = vmatpush1.msra.mxu0 %v233
  %434 = vmatprep.subr.mxu0 %v232
  %435 = vmatpush1.msra.mxu0 %v231
  %436 = vmatprep.subr.mxu0 %v230
  %437 = vmatpush1.msra.mxu0 %v229
  %438 = vmatprep.subr.mxu0 %v228
  %439 = vmatpush1.msra.mxu0 %v227
  %440 = vmatprep.subr.mxu0 %v226
  %441 = vmatpush1.msra.mxu0 %v225
  %442 = vmatprep.subr.mxu0 %v224
  %443 = vmatpush1.msra.mxu0 %v223
  %444 = vmatprep.subr.mxu0 %v222
  %445 = vmatpush1.msra.mxu0 %v221
  %446 = vmatprep.subr.mxu0 %v220
  %447 = vmatpush1.msra.mxu0 %v219
  %448 = vmatprep.subr.mxu0 %v218
  %449 = vmatpush1.msra.mxu0 %v217
  %450 = vmatprep.subr.mxu0 %v280
  %451 = vmatpush2.msra.mxu0 %v279
  %452 = vmatprep.subr.mxu0 %v278
  %453 = vmatpush2.msra.mxu0 %v277
  %454 = vmatprep.subr.mxu0 %v276
  %455 = vmatpush2.msra.mxu0 %v275
  %456 = vmatprep.subr.mxu0 %v274
  %457 = vmatpush2.msra.mxu0 %v273
  %458 = vmatprep.subr.mxu0 %v272
  %459 = vmatpush2.msra.mxu0 %v271
  %460 = vmatprep.subr.mxu0 %v270
  %461 = vmatpush2.msra.mxu0 %v269
  %462 = vmatprep.subr.mxu0 %v268
  %463 = vmatpush2.msra.mxu0 %v267
  %464 = vmatprep.subr.mxu0 %v266
  %465 = vmatpush2.msra.mxu0 %v265
  %466 = vmatprep.subr.mxu0 %v264
  %467 = vmatpush2.msra.mxu0 %v263
  %468 = vmatprep.subr.mxu0 %v262
  %469 = vmatpush2.msra.mxu0 %v261
  %470 = vmatprep.subr.mxu0 %v260
  %471 = vmatpush2.msra.mxu0 %v259
  %472 = vmatprep.subr.mxu0 %v258
  %473 = vmatpush2.msra.mxu0 %v257
  %474 = vmatprep.subr.mxu0 %v256
  %475 = vmatpush2.msra.mxu0 %v255
  %476 = vmatprep.subr.mxu0 %v254
  %477 = vmatpush2.msra.mxu0 %v253
  %478 = vmatprep.subr.mxu0 %v252
  %479 = vmatpush2.msra.mxu0 %v251
  %480 = vmatprep.subr.mxu0 %v250
  %481 = vmatpush2.msra.mxu0 %v249
  %482 = vmatprep.mubr.f32.mxu0 %v18
  %483 = vmatmul.mubr.f32.gmra.mxu0 %v17
  %v484 = vpop.f32.mrf.mxu0
  %v485 = vadd.f32 0.0, %v484
  %v486 = vpop.f32.mrf.mxu0
  %v487 = vadd.f32 0.0, %v486
  %488 = vmatprep.mubr.f32.mxu0 %v21
  %489 = vmatmul.mubr.f32.gmra.mxu0 %v20
  %v490 = vpop.f32.mrf.mxu0
  %v491 = vadd.f32 0.0, %v490
  %v492 = vpop.f32.mrf.mxu0
  %v493 = vadd.f32 0.0, %v492
  %494 = vmatprep.mubr.f32.mxu0 %v24
  %495 = vmatmul.mubr.f32.gmra.mxu0 %v23
  %v496 = vpop.f32.mrf.mxu0
  %v497 = vadd.f32 0.0, %v496
  %v498 = vpop.f32.mrf.mxu0
  %v499 = vadd.f32 0.0, %v498
  %500 = vmatprep.mubr.f32.mxu0 %v27
  %501 = vmatmul.mubr.f32.gmra.mxu0 %v26
  %v502 = vpop.f32.mrf.mxu0
  %v503 = vadd.f32 0.0, %v502
  %v504 = vpop.f32.mrf.mxu0
  %v505 = vadd.f32 0.0, %v504
  %506 = vmatprep.mubr.f32.mxu0 %v30
  %507 = vmatmul.mubr.f32.gmra.mxu0 %v29
  %v508 = vpop.f32.mrf.mxu0
  %v509 = vadd.f32 0.0, %v508
  %v510 = vpop.f32.mrf.mxu0
  %v511 = vadd.f32 0.0, %v510
  %512 = vmatprep.mubr.f32.mxu0 %v33
  %513 = vmatmul.mubr.f32.gmra.mxu0 %v32
  %v514 = vpop.f32.mrf.mxu0
  %v515 = vadd.f32 0.0, %v514
  %v516 = vpop.f32.mrf.mxu0
  %v517 = vadd.f32 0.0, %v516
  %518 = vmatprep.mubr.f32.mxu0 %v36
  %519 = vmatmul.mubr.f32.gmra.mxu0 %v35
  %v520 = vpop.f32.mrf.mxu0
  %v521 = vadd.f32 0.0, %v520
  %v522 = vpop.f32.mrf.mxu0
  %v523 = vadd.f32 0.0, %v522
  %524 = vmatprep.mubr.f32.mxu0 %v39
  %525 = vmatmul.mubr.f32.gmra.mxu0 %v38
  %v526 = vpop.f32.mrf.mxu0
  %v527 = vadd.f32 0.0, %v526
  %v528 = vpop.f32.mrf.mxu0
  %v529 = vadd.f32 0.0, %v528
  %530 = vmatprep.mubr.f32.mxu0 %v42
  %531 = vmatmul.mubr.f32.gmra.mxu0 %v41
  %v532 = vpop.f32.mrf.mxu0
  %v533 = vadd.f32 0.0, %v532
  %v534 = vpop.f32.mrf.mxu0
  %v535 = vadd.f32 0.0, %v534
  %536 = vmatprep.mubr.f32.mxu0 %v45
  %537 = vmatmul.mubr.f32.gmra.mxu0 %v44
  %v538 = vpop.f32.mrf.mxu0
  %v539 = vadd.f32 0.0, %v538
  %v540 = vpop.f32.mrf.mxu0
  %v541 = vadd.f32 0.0, %v540
  %542 = vmatprep.mubr.f32.mxu0 %v48
  %543 = vmatmul.mubr.f32.gmra.mxu0 %v47
  %v544 = vpop.f32.mrf.mxu0
  %v545 = vadd.f32 0.0, %v544
  %v546 = vpop.f32.mrf.mxu0
  %v547 = vadd.f32 0.0, %v546
  %548 = vmatprep.mubr.f32.mxu0 %v51
  %549 = vmatmul.mubr.f32.gmra.mxu0 %v50
  %v550 = vpop.f32.mrf.mxu0
  %v551 = vadd.f32 0.0, %v550
  %v552 = vpop.f32.mrf.mxu0
  %v553 = vadd.f32 0.0, %v552
  %554 = vmatprep.mubr.f32.mxu0 %v54
  %555 = vmatmul.mubr.f32.gmra.mxu0 %v53
  %v556 = vpop.f32.mrf.mxu0
  %v557 = vadd.f32 0.0, %v556
  %v558 = vpop.f32.mrf.mxu0
  %v559 = vadd.f32 0.0, %v558
  %560 = vmatprep.mubr.f32.mxu0 %v57
  %561 = vmatmul.mubr.f32.gmra.mxu0 %v56
  %v562 = vpop.f32.mrf.mxu0
  %v563 = vadd.f32 0.0, %v562
  %v564 = vpop.f32.mrf.mxu0
  %v565 = vadd.f32 0.0, %v564
  %566 = vmatprep.mubr.f32.mxu0 %v60
  %567 = vmatmul.mubr.f32.gmra.mxu0 %v59
  %v568 = vpop.f32.mrf.mxu0
  %v569 = vadd.f32 0.0, %v568
  %v570 = vpop.f32.mrf.mxu0
  %v571 = vadd.f32 0.0, %v570
  %572 = vmatprep.mubr.f32.mxu0 %v63
  %573 = vmatmul.mubr.f32.gmra.mxu0 %v62
  %v574 = vpop.f32.mrf.mxu0
  %v575 = vadd.f32 0.0, %v574
  %v576 = vpop.f32.mrf.mxu0
  %v577 = vadd.f32 0.0, %v576
  %578 = vmatprep.mubr.f32.mxu0 %v66
  %579 = vmatmul.mubr.f32.gmra.mxu0 %v65
  %v580 = vpop.f32.mrf.mxu0
  %v581 = vadd.f32 0.0, %v580
  %v582 = vpop.f32.mrf.mxu0
  %v583 = vadd.f32 0.0, %v582
  %584 = vmatprep.mubr.f32.mxu0 %v69
  %585 = vmatmul.mubr.f32.gmra.mxu0 %v68
  %v586 = vpop.f32.mrf.mxu0
  %v587 = vadd.f32 0.0, %v586
  %v588 = vpop.f32.mrf.mxu0
  %v589 = vadd.f32 0.0, %v588
  %590 = vmatprep.mubr.f32.mxu0 %v72
  %591 = vmatmul.mubr.f32.gmra.mxu0 %v71
  %v592 = vpop.f32.mrf.mxu0
  %v593 = vadd.f32 0.0, %v592
  %v594 = vpop.f32.mrf.mxu0
  %v595 = vadd.f32 0.0, %v594
  %596 = vmatprep.mubr.f32.mxu0 %v75
  %597 = vmatmul.mubr.f32.gmra.mxu0 %v74
  %v598 = vpop.f32.mrf.mxu0
  %v599 = vadd.f32 0.0, %v598
  %v600 = vpop.f32.mrf.mxu0
  %v601 = vadd.f32 0.0, %v600
  %602 = vmatprep.mubr.f32.mxu0 %v78
  %603 = vmatmul.mubr.f32.gmra.mxu0 %v77
  %v604 = vpop.f32.mrf.mxu0
  %v605 = vadd.f32 0.0, %v604
  %v606 = vpop.f32.mrf.mxu0
  %v607 = vadd.f32 0.0, %v606
  %608 = vmatprep.mubr.f32.mxu0 %v81
  %609 = vmatmul.mubr.f32.gmra.mxu0 %v80
  %v610 = vpop.f32.mrf.mxu0
  %v611 = vadd.f32 0.0, %v610
  %v612 = vpop.f32.mrf.mxu0
  %v613 = vadd.f32 0.0, %v612
  %614 = vmatprep.mubr.f32.mxu0 %v84
  %615 = vmatmul.mubr.f32.gmra.mxu0 %v83
  %v616 = vpop.f32.mrf.mxu0
  %v617 = vadd.f32 0.0, %v616
  %v618 = vpop.f32.mrf.mxu0
  %v619 = vadd.f32 0.0, %v618
  %620 = vmatprep.mubr.f32.mxu0 %v87
  %621 = vmatmul.mubr.f32.gmra.mxu0 %v86
  %v622 = vpop.f32.mrf.mxu0
  %v623 = vadd.f32 0.0, %v622
  %v624 = vpop.f32.mrf.mxu0
  %v625 = vadd.f32 0.0, %v624
  %626 = vmatprep.mubr.f32.mxu0 %v90
  %627 = vmatmul.mubr.f32.gmra.mxu0 %v89
  %v628 = vpop.f32.mrf.mxu0
  %v629 = vadd.f32 0.0, %v628
  %v630 = vpop.f32.mrf.mxu0
  %v631 = vadd.f32 0.0, %v630
  %632 = vmatprep.mubr.f32.mxu0 %v93
  %633 = vmatmul.mubr.f32.gmra.mxu0 %v92
  %v634 = vpop.f32.mrf.mxu0
  %v635 = vadd.f32 0.0, %v634
  %v636 = vpop.f32.mrf.mxu0
  %v637 = vadd.f32 0.0, %v636
  %638 = vmatprep.mubr.f32.mxu0 %v96
  %639 = vmatmul.mubr.f32.gmra.mxu0 %v95
  %v640 = vpop.f32.mrf.mxu0
  %v641 = vadd.f32 0.0, %v640
  %v642 = vpop.f32.mrf.mxu0
  %v643 = vadd.f32 0.0, %v642
  %644 = vmatprep.mubr.f32.mxu0 %v99
  %645 = vmatmul.mubr.f32.gmra.mxu0 %v98
  %v646 = vpop.f32.mrf.mxu0
  %v647 = vadd.f32 0.0, %v646
  %v648 = vpop.f32.mrf.mxu0
  %v649 = vadd.f32 0.0, %v648
  %650 = vmatprep.mubr.f32.mxu0 %v102
  %651 = vmatmul.mubr.f32.gmra.mxu0 %v101
  %v652 = vpop.f32.mrf.mxu0
  %v653 = vadd.f32 0.0, %v652
  %v654 = vpop.f32.mrf.mxu0
  %v655 = vadd.f32 0.0, %v654
  %656 = vmatprep.mubr.f32.mxu0 %v105
  %657 = vmatmul.mubr.f32.gmra.mxu0 %v104
  %v658 = vpop.f32.mrf.mxu0
  %v659 = vadd.f32 0.0, %v658
  %v660 = vpop.f32.mrf.mxu0
  %v661 = vadd.f32 0.0, %v660
  %662 = vmatprep.mubr.f32.mxu0 %v108
  %663 = vmatmul.mubr.f32.gmra.mxu0 %v107
  %v664 = vpop.f32.mrf.mxu0
  %v665 = vadd.f32 0.0, %v664
  %v666 = vpop.f32.mrf.mxu0
  %v667 = vadd.f32 0.0, %v666
  %668 = vmatprep.mubr.f32.mxu0 %v111
  %669 = vmatmul.mubr.f32.gmra.mxu0 %v110
  %v670 = vpop.f32.mrf.mxu0
  %v671 = vadd.f32 0.0, %v670
  %v672 = vpop.f32.mrf.mxu0
  %v673 = vadd.f32 0.0, %v672
  %674 = vmatprep.mubr.f32.mxu0 %v114
  %675 = vmatmul.mubr.f32.gmra.mxu0 %v113
  %v676 = vpop.f32.mrf.mxu0
  %v677 = vadd.f32 0.0, %v676
  %v678 = vpop.f32.mrf.mxu0
  %v679 = vadd.f32 0.0, %v678
  %680 = vmatprep.mubr.f32.mxu0 %v117
  %681 = vmatmul.mubr.f32.gmra.mxu0 %v116
  %v682 = vpop.f32.mrf.mxu0
  %v683 = vadd.f32 0.0, %v682
  %v684 = vpop.f32.mrf.mxu0
  %v685 = vadd.f32 0.0, %v684
  %686 = vmatprep.mubr.f32.mxu0 %v120
  %687 = vmatmul.mubr.f32.gmra.mxu0 %v119
  %v688 = vpop.f32.mrf.mxu0
  %v689 = vadd.f32 0.0, %v688
  %v690 = vpop.f32.mrf.mxu0
  %v691 = vadd.f32 0.0, %v690
  %692 = vmatprep.mubr.f32.mxu0 %v123
  %693 = vmatmul.mubr.f32.gmra.mxu0 %v122
  %v694 = vpop.f32.mrf.mxu0
  %v695 = vadd.f32 0.0, %v694
  %v696 = vpop.f32.mrf.mxu0
  %v697 = vadd.f32 0.0, %v696
  %698 = vmatprep.mubr.f32.mxu0 %v126
  %699 = vmatmul.mubr.f32.gmra.mxu0 %v125
  %v700 = vpop.f32.mrf.mxu0
  %v701 = vadd.f32 0.0, %v700
  %v702 = vpop.f32.mrf.mxu0
  %v703 = vadd.f32 0.0, %v702
  %704 = vmatprep.mubr.f32.mxu0 %v129
  %705 = vmatmul.mubr.f32.gmra.mxu0 %v128
  %v706 = vpop.f32.mrf.mxu0
  %v707 = vadd.f32 0.0, %v706
  %v708 = vpop.f32.mrf.mxu0
  %v709 = vadd.f32 0.0, %v708
  %710 = vmatprep.mubr.f32.mxu0 %v132
  %711 = vmatmul.mubr.f32.gmra.mxu0 %v131
  %v712 = vpop.f32.mrf.mxu0
  %v713 = vadd.f32 0.0, %v712
  %v714 = vpop.f32.mrf.mxu0
  %v715 = vadd.f32 0.0, %v714
  %716 = vmatprep.mubr.f32.mxu0 %v135
  %717 = vmatmul.mubr.f32.gmra.mxu0 %v134
  %v718 = vpop.f32.mrf.mxu0
  %v719 = vadd.f32 0.0, %v718
  %v720 = vpop.f32.mrf.mxu0
  %v721 = vadd.f32 0.0, %v720
  %722 = vdwg.mxu0
  %723 = vmatprep.subr.mxu0 0.0
  %724 = vmatpush1.msra.mxu0 0.0
  %725 = vmatprep.subr.mxu0 0.0
  %726 = vmatpush1.msra.mxu0 0.0
  %727 = vmatprep.subr.mxu0 0.0
  %728 = vmatpush1.msra.mxu0 0.0
  %729 = vmatprep.subr.mxu0 0.0
  %730 = vmatpush1.msra.mxu0 0.0
  %731 = vmatprep.subr.mxu0 0.0
  %732 = vmatpush1.msra.mxu0 0.0
  %733 = vmatprep.subr.mxu0 0.0
  %734 = vmatpush1.msra.mxu0 0.0
  %735 = vmatprep.subr.mxu0 0.0
  %736 = vmatpush1.msra.mxu0 0.0
  %737 = vmatprep.subr.mxu0 0.0
  %738 = vmatpush1.msra.mxu0 0.0
  %739 = vmatprep.subr.mxu0 %v296
  %740 = vmatpush1.msra.mxu0 %v295
  %741 = vmatprep.subr.mxu0 %v294
  %742 = vmatpush1.msra.mxu0 %v293
  %743 = vmatprep.subr.mxu0 %v292
  %744 = vmatpush1.msra.mxu0 %v291
  %745 = vmatprep.subr.mxu0 %v290
  %746 = vmatpush1.msra.mxu0 %v289
  %747 = vmatprep.subr.mxu0 %v288
  %748 = vmatpush1.msra.mxu0 %v287
  %749 = vmatprep.subr.mxu0 %v286
  %750 = vmatpush1.msra.mxu0 %v285
  %751 = vmatprep.subr.mxu0 %v284
  %752 = vmatpush1.msra.mxu0 %v283
  %753 = vmatprep.subr.mxu0 %v282
  %754 = vmatpush1.msra.mxu0 %v281
  %755 = vmatprep.subr.mxu0 0.0
  %756 = vmatpush2.msra.mxu0 0.0
  %757 = vmatprep.subr.mxu0 0.0
  %758 = vmatpush2.msra.mxu0 0.0
  %759 = vmatprep.subr.mxu0 0.0
  %760 = vmatpush2.msra.mxu0 0.0
  %761 = vmatprep.subr.mxu0 0.0
  %762 = vmatpush2.msra.mxu0 0.0
  %763 = vmatprep.subr.mxu0 0.0
  %764 = vmatpush2.msra.mxu0 0.0
  %765 = vmatprep.subr.mxu0 0.0
  %766 = vmatpush2.msra.mxu0 0.0
  %767 = vmatprep.subr.mxu0 0.0
  %768 = vmatpush2.msra.mxu0 0.0
  %769 = vmatprep.subr.mxu0 0.0
  %770 = vmatpush2.msra.mxu0 0.0
  %771 = vmatprep.subr.mxu0 0.0
  %772 = vmatpush2.msra.mxu0 0.0
  %773 = vmatprep.subr.mxu0 0.0
  %774 = vmatpush2.msra.mxu0 0.0
  %775 = vmatprep.subr.mxu0 0.0
  %776 = vmatpush2.msra.mxu0 0.0
  %777 = vmatprep.subr.mxu0 0.0
  %778 = vmatpush2.msra.mxu0 0.0
  %779 = vmatprep.subr.mxu0 0.0
  %780 = vmatpush2.msra.mxu0 0.0
  %781 = vmatprep.subr.mxu0 0.0
  %782 = vmatpush2.msra.mxu0 0.0
  %783 = vmatprep.subr.mxu0 0.0
  %784 = vmatpush2.msra.mxu0 0.0
  %785 = vmatprep.subr.mxu0 0.0
  %786 = vmatpush2.msra.mxu0 0.0
  %787 = vmatprep.mubr.f32.mxu0 0.0
  %788 = vmatmul.mubr.f32.gmra.mxu0 %v299
  %v789 = vpop.f32.mrf.mxu0
  %v790 = vadd.f32 %v485, %v789
  %v791 = vpop.f32.mrf.mxu0
  %v792 = vadd.f32 %v487, %v791
  %793 = vmatprep.mubr.f32.mxu0 0.0
  %794 = vmatmul.mubr.f32.gmra.mxu0 %v302
  %v795 = vpop.f32.mrf.mxu0
  %v796 = vadd.f32 %v491, %v795
  %v797 = vpop.f32.mrf.mxu0
  %v798 = vadd.f32 %v493, %v797
  %799 = vmatprep.mubr.f32.mxu0 0.0
  %800 = vmatmul.mubr.f32.gmra.mxu0 %v305
  %v801 = vpop.f32.mrf.mxu0
  %v802 = vadd.f32 %v497, %v801
  %v803 = vpop.f32.mrf.mxu0
  %v804 = vadd.f32 %v499, %v803
  %805 = vmatprep.mubr.f32.mxu0 0.0
  %806 = vmatmul.mubr.f32.gmra.mxu0 %v308
  %v807 = vpop.f32.mrf.mxu0
  %v808 = vadd.f32 %v503, %v807
  %v809 = vpop.f32.mrf.mxu0
  %v810 = vadd.f32 %v505, %v809
  %811 = vmatprep.mubr.f32.mxu0 0.0
  %812 = vmatmul.mubr.f32.gmra.mxu0 %v311
  %v813 = vpop.f32.mrf.mxu0
  %v814 = vadd.f32 %v509, %v813
  %v815 = vpop.f32.mrf.mxu0
  %v816 = vadd.f32 %v511, %v815
  %817 = vmatprep.mubr.f32.mxu0 0.0
  %818 = vmatmul.mubr.f32.gmra.mxu0 %v314
  %v819 = vpop.f32.mrf.mxu0
  %v820 = vadd.f32 %v515, %v819
  %v821 = vpop.f32.mrf.mxu0
  %v822 = vadd.f32 %v517, %v821
  %823 = vmatprep.mubr.f32.mxu0 0.0
  %824 = vmatmul.mubr.f32.gmra.mxu0 %v317
  %v825 = vpop.f32.mrf.mxu0
  %v826 = vadd.f32 %v521, %v825
  %v827 = vpop.f32.mrf.mxu0
  %v828 = vadd.f32 %v523, %v827
  %829 = vmatprep.mubr.f32.mxu0 0.0
  %830 = vmatmul.mubr.f32.gmra.mxu0 %v320
  %v831 = vpop.f32.mrf.mxu0
  %v832 = vadd.f32 %v527, %v831
  %v833 = vpop.f32.mrf.mxu0
  %v834 = vadd.f32 %v529, %v833
  %835 = vmatprep.mubr.f32.mxu0 0.0
  %836 = vmatmul.mubr.f32.gmra.mxu0 %v323
  %v837 = vpop.f32.mrf.mxu0
  %v838 = vadd.f32 %v533, %v837
  %v839 = vpop.f32.mrf.mxu0
  %v840 = vadd.f32 %v535, %v839
  %841 = vmatprep.mubr.f32.mxu0 0.0
  %842 = vmatmul.mubr.f32.gmra.mxu0 %v326
  %v843 = vpop.f32.mrf.mxu0
  %v844 = vadd.f32 %v539, %v843
  %v845 = vpop.f32.mrf.mxu0
  %v846 = vadd.f32 %v541, %v845
  %847 = vmatprep.mubr.f32.mxu0 0.0
  %848 = vmatmul.mubr.f32.gmra.mxu0 %v329
  %v849 = vpop.f32.mrf.mxu0
  %v850 = vadd.f32 %v545, %v849
  %v851 = vpop.f32.mrf.mxu0
  %v852 = vadd.f32 %v547, %v851
  %853 = vmatprep.mubr.f32.mxu0 0.0
  %854 = vmatmul.mubr.f32.gmra.mxu0 %v332
  %v855 = vpop.f32.mrf.mxu0
  %v856 = vadd.f32 %v551, %v855
  %v857 = vpop.f32.mrf.mxu0
  %v858 = vadd.f32 %v553, %v857
  %859 = vmatprep.mubr.f32.mxu0 0.0
  %860 = vmatmul.mubr.f32.gmra.mxu0 %v335
  %v861 = vpop.f32.mrf.mxu0
  %v862 = vadd.f32 %v557, %v861
  %v863 = vpop.f32.mrf.mxu0
  %v864 = vadd.f32 %v559, %v863
  %865 = vmatprep.mubr.f32.mxu0 0.0
  %866 = vmatmul.mubr.f32.gmra.mxu0 %v338
  %v867 = vpop.f32.mrf.mxu0
  %v868 = vadd.f32 %v563, %v867
  %v869 = vpop.f32.mrf.mxu0
  %v870 = vadd.f32 %v565, %v869
  %871 = vmatprep.mubr.f32.mxu0 0.0
  %872 = vmatmul.mubr.f32.gmra.mxu0 %v341
  %v873 = vpop.f32.mrf.mxu0
  %v874 = vadd.f32 %v569, %v873
  %v875 = vpop.f32.mrf.mxu0
  %v876 = vadd.f32 %v571, %v875
  %877 = vmatprep.mubr.f32.mxu0 0.0
  %878 = vmatmul.mubr.f32.gmra.mxu0 %v344
  %v879 = vpop.f32.mrf.mxu0
  %v880 = vadd.f32 %v575, %v879
  %v881 = vpop.f32.mrf.mxu0
  %v882 = vadd.f32 %v577, %v881
  %883 = vmatprep.mubr.f32.mxu0 0.0
  %884 = vmatmul.mubr.f32.gmra.mxu0 %v347
  %v885 = vpop.f32.mrf.mxu0
  %v886 = vadd.f32 %v581, %v885
  %v887 = vpop.f32.mrf.mxu0
  %v888 = vadd.f32 %v583, %v887
  %889 = vmatprep.mubr.f32.mxu0 0.0
  %890 = vmatmul.mubr.f32.gmra.mxu0 %v350
  %v891 = vpop.f32.mrf.mxu0
  %v892 = vadd.f32 %v587, %v891
  %v893 = vpop.f32.mrf.mxu0
  %v894 = vadd.f32 %v589, %v893
  %895 = vmatprep.mubr.f32.mxu0 0.0
  %896 = vmatmul.mubr.f32.gmra.mxu0 %v353
  %v897 = vpop.f32.mrf.mxu0
  %v898 = vadd.f32 %v593, %v897
  %v899 = vpop.f32.mrf.mxu0
  %v900 = vadd.f32 %v595, %v899
  %901 = vmatprep.mubr.f32.mxu0 0.0
  %902 = vmatmul.mubr.f32.gmra.mxu0 %v356
  %v903 = vpop.f32.mrf.mxu0
  %v904 = vadd.f32 %v599, %v903
  %v905 = vpop.f32.mrf.mxu0
  %v906 = vadd.f32 %v601, %v905
  %907 = vmatprep.mubr.f32.mxu0 0.0
  %908 = vmatmul.mubr.f32.gmra.mxu0 %v359
  %v909 = vpop.f32.mrf.mxu0
  %v910 = vadd.f32 %v605, %v909
  %v911 = vpop.f32.mrf.mxu0
  %v912 = vadd.f32 %v607, %v911
  %913 = vmatprep.mubr.f32.mxu0 0.0
  %914 = vmatmul.mubr.f32.gmra.mxu0 %v362
  %v915 = vpop.f32.mrf.mxu0
  %v916 = vadd.f32 %v611, %v915
  %v917 = vpop.f32.mrf.mxu0
  %v918 = vadd.f32 %v613, %v917
  %919 = vmatprep.mubr.f32.mxu0 0.0
  %920 = vmatmul.mubr.f32.gmra.mxu0 %v365
  %v921 = vpop.f32.mrf.mxu0
  %v922 = vadd.f32 %v617, %v921
  %v923 = vpop.f32.mrf.mxu0
  %v924 = vadd.f32 %v619, %v923
  %925 = vmatprep.mubr.f32.mxu0 0.0
  %926 = vmatmul.mubr.f32.gmra.mxu0 %v368
  %v927 = vpop.f32.mrf.mxu0
  %v928 = vadd.f32 %v623, %v927
  %v929 = vpop.f32.mrf.mxu0
  %v930 = vadd.f32 %v625, %v929
  %931 = vmatprep.mubr.f32.mxu0 0.0
  %932 = vmatmul.mubr.f32.gmra.mxu0 %v371
  %v933 = vpop.f32.mrf.mxu0
  %v934 = vadd.f32 %v629, %v933
  %v935 = vpop.f32.mrf.mxu0
  %v936 = vadd.f32 %v631, %v935
  %937 = vmatprep.mubr.f32.mxu0 0.0
  %938 = vmatmul.mubr.f32.gmra.mxu0 %v374
  %v939 = vpop.f32.mrf.mxu0
  %v940 = vadd.f32 %v635, %v939
  %v941 = vpop.f32.mrf.mxu0
  %v942 = vadd.f32 %v637, %v941
  %943 = vmatprep.mubr.f32.mxu0 0.0
  %944 = vmatmul.mubr.f32.gmra.mxu0 %v377
  %v945 = vpop.f32.mrf.mxu0
  %v946 = vadd.f32 %v641, %v945
  %v947 = vpop.f32.mrf.mxu0
  %v948 = vadd.f32 %v643, %v947
  %949 = vmatprep.mubr.f32.mxu0 0.0
  %950 = vmatmul.mubr.f32.gmra.mxu0 %v380
  %v951 = vpop.f32.mrf.mxu0
  %v952 = vadd.f32 %v647, %v951
  %v953 = vpop.f32.mrf.mxu0
  %v954 = vadd.f32 %v649, %v953
  %955 = vmatprep.mubr.f32.mxu0 0.0
  %956 = vmatmul.mubr.f32.gmra.mxu0 %v383
  %v957 = vpop.f32.mrf.mxu0
  %v958 = vadd.f32 %v653, %v957
  %v959 = vpop.f32.mrf.mxu0
  %v960 = vadd.f32 %v655, %v959
  %961 = vmatprep.mubr.f32.mxu0 0.0
  %962 = vmatmul.mubr.f32.gmra.mxu0 %v386
  %v963 = vpop.f32.mrf.mxu0
  %v964 = vadd.f32 %v659, %v963
  %v965 = vpop.f32.mrf.mxu0
  %v966 = vadd.f32 %v661, %v965
  %967 = vmatprep.mubr.f32.mxu0 0.0
  %968 = vmatmul.mubr.f32.gmra.mxu0 %v389
  %v969 = vpop.f32.mrf.mxu0
  %v970 = vadd.f32 %v665, %v969
  %v971 = vpop.f32.mrf.mxu0
  %v972 = vadd.f32 %v667, %v971
  %973 = vmatprep.mubr.f32.mxu0 0.0
  %974 = vmatmul.mubr.f32.gmra.mxu0 %v392
  %v975 = vpop.f32.mrf.mxu0
  %v976 = vadd.f32 %v671, %v975
  %v977 = vpop.f32.mrf.mxu0
  %v978 = vadd.f32 %v673, %v977
  %979 = vmatprep.mubr.f32.mxu0 0.0
  %980 = vmatmul.mubr.f32.gmra.mxu0 %v395
  %v981 = vpop.f32.mrf.mxu0
  %v982 = vadd.f32 %v677, %v981
  %v983 = vpop.f32.mrf.mxu0
  %v984 = vadd.f32 %v679, %v983
  %985 = vmatprep.mubr.f32.mxu0 0.0
  %986 = vmatmul.mubr.f32.gmra.mxu0 %v398
  %v987 = vpop.f32.mrf.mxu0
  %v988 = vadd.f32 %v683, %v987
  %v989 = vpop.f32.mrf.mxu0
  %v990 = vadd.f32 %v685, %v989
  %991 = vmatprep.mubr.f32.mxu0 0.0
  %992 = vmatmul.mubr.f32.gmra.mxu0 %v401
  %v993 = vpop.f32.mrf.mxu0
  %v994 = vadd.f32 %v689, %v993
  %v995 = vpop.f32.mrf.mxu0
  %v996 = vadd.f32 %v691, %v995
  %997 = vmatprep.mubr.f32.mxu0 0.0
  %998 = vmatmul.mubr.f32.gmra.mxu0 %v404
  %v999 = vpop.f32.mrf.mxu0
  %v1000 = vadd.f32 %v695, %v999
  %v1001 = vpop.f32.mrf.mxu0
  %v1002 = vadd.f32 %v697, %v1001
  %1003 = vmatprep.mubr.f32.mxu0 0.0
  %1004 = vmatmul.mubr.f32.gmra.mxu0 %v407
  %v1005 = vpop.f32.mrf.mxu0
  %v1006 = vadd.f32 %v701, %v1005
  %v1007 = vpop.f32.mrf.mxu0
  %v1008 = vadd.f32 %v703, %v1007
  %1009 = vmatprep.mubr.f32.mxu0 0.0
  %1010 = vmatmul.mubr.f32.gmra.mxu0 %v410
  %v1011 = vpop.f32.mrf.mxu0
  %v1012 = vadd.f32 %v707, %v1011
  %v1013 = vpop.f32.mrf.mxu0
  %v1014 = vadd.f32 %v709, %v1013
  %1015 = vmatprep.mubr.f32.mxu0 0.0
  %1016 = vmatmul.mubr.f32.gmra.mxu0 %v413
  %v1017 = vpop.f32.mrf.mxu0
  %v1018 = vadd.f32 %v713, %v1017
  %v1019 = vpop.f32.mrf.mxu0
  %v1020 = vadd.f32 %v715, %v1019
  %1021 = vmatprep.mubr.f32.mxu0 0.0
  %1022 = vmatmul.mubr.f32.gmra.mxu0 %v416
  %v1023 = vpop.f32.mrf.mxu0
  %v1024 = vadd.f32 %v719, %v1023
  %v1025 = vpop.f32.mrf.mxu0
  %v1026 = vadd.f32 %v721, %v1025
  %1027 = vdwg.mxu0
  %1028 = vst [vmem:[%s4] sm:$0xff] %v790
  %vm1029 = vcmask 556032
  %1030 = vst.msk [vmem:[%s4 + $0x8] sm:$0xff] %vm1029, %v792
  %1031 = vst [vmem:[%s4 + $0x10] sm:$0xff] %v796
  %1032 = vst.msk [vmem:[%s4 + $0x18] sm:$0xff] %vm1029, %v798
  %1033 = vst [vmem:[%s4 + $0x20] sm:$0xff] %v802
  %1034 = vst.msk [vmem:[%s4 + $0x28] sm:$0xff] %vm1029, %v804
  %1035 = vst [vmem:[%s4 + $0x30] sm:$0xff] %v808
  %1036 = vst.msk [vmem:[%s4 + $0x38] sm:$0xff] %vm1029, %v810
  %1037 = vst [vmem:[%s4 + $0x40] sm:$0xff] %v814
  %1038 = vst.msk [vmem:[%s4 + $0x48] sm:$0xff] %vm1029, %v816
  %1039 = vst [vmem:[%s4 + $0x50] sm:$0xff] %v820
  %1040 = vst.msk [vmem:[%s4 + $0x58] sm:$0xff] %vm1029, %v822
  %1041 = vst [vmem:[%s4 + $0x60] sm:$0xff] %v826
  %1042 = vst.msk [vmem:[%s4 + $0x68] sm:$0xff] %vm1029, %v828
  %1043 = vst [vmem:[%s4 + $0x70] sm:$0xff] %v832
  %1044 = vst.msk [vmem:[%s4 + $0x78] sm:$0xff] %vm1029, %v834
  %1045 = vst [vmem:[%s4 + $0x80] sm:$0xff] %v838
  %1046 = vst.msk [vmem:[%s4 + $0x88] sm:$0xff] %vm1029, %v840
  %1047 = vst [vmem:[%s4 + $0x90] sm:$0xff] %v844
  %1048 = vst.msk [vmem:[%s4 + $0x98] sm:$0xff] %vm1029, %v846
  %1049 = vst [vmem:[%s4 + $0xa0] sm:$0xff] %v850
  %1050 = vst.msk [vmem:[%s4 + $0xa8] sm:$0xff] %vm1029, %v852
  %1051 = vst [vmem:[%s4 + $0xb0] sm:$0xff] %v856
  %1052 = vst.msk [vmem:[%s4 + $0xb8] sm:$0xff] %vm1029, %v858
  %1053 = vst [vmem:[%s4 + $0xc0] sm:$0xff] %v862
  %1054 = vst.msk [vmem:[%s4 + $0xc8] sm:$0xff] %vm1029, %v864
  %1055 = vst [vmem:[%s4 + $0xd0] sm:$0xff] %v868
  %1056 = vst.msk [vmem:[%s4 + $0xd8] sm:$0xff] %vm1029, %v870
  %1057 = vst [vmem:[%s4 + $0xe0] sm:$0xff] %v874
  %1058 = vst.msk [vmem:[%s4 + $0xe8] sm:$0xff] %vm1029, %v876
  %1059 = vst [vmem:[%s4 + $0xf0] sm:$0xff] %v880
  %1060 = vst.msk [vmem:[%s4 + $0xf8] sm:$0xff] %vm1029, %v882
  %1061 = vst [vmem:[%s4 + $0x100] sm:$0xff] %v886
  %1062 = vst.msk [vmem:[%s4 + $0x108] sm:$0xff] %vm1029, %v888
  %1063 = vst [vmem:[%s4 + $0x110] sm:$0xff] %v892
  %1064 = vst.msk [vmem:[%s4 + $0x118] sm:$0xff] %vm1029, %v894
  %1065 = vst [vmem:[%s4 + $0x120] sm:$0xff] %v898
  %1066 = vst.msk [vmem:[%s4 + $0x128] sm:$0xff] %vm1029, %v900
  %1067 = vst [vmem:[%s4 + $0x130] sm:$0xff] %v904
  %1068 = vst.msk [vmem:[%s4 + $0x138] sm:$0xff] %vm1029, %v906
  %1069 = vst [vmem:[%s4 + $0x140] sm:$0xff] %v910
  %1070 = vst.msk [vmem:[%s4 + $0x148] sm:$0xff] %vm1029, %v912
  %1071 = vst [vmem:[%s4 + $0x150] sm:$0xff] %v916
  %1072 = vst.msk [vmem:[%s4 + $0x158] sm:$0xff] %vm1029, %v918
  %1073 = vst [vmem:[%s4 + $0x160] sm:$0xff] %v922
  %1074 = vst.msk [vmem:[%s4 + $0x168] sm:$0xff] %vm1029, %v924
  %1075 = vst [vmem:[%s4 + $0x170] sm:$0xff] %v928
  %1076 = vst.msk [vmem:[%s4 + $0x178] sm:$0xff] %vm1029, %v930
  %1077 = vst [vmem:[%s4 + $0x180] sm:$0xff] %v934
  %1078 = vst.msk [vmem:[%s4 + $0x188] sm:$0xff] %vm1029, %v936
  %1079 = vst [vmem:[%s4 + $0x190] sm:$0xff] %v940
  %1080 = vst.msk [vmem:[%s4 + $0x198] sm:$0xff] %vm1029, %v942
  %1081 = vst [vmem:[%s4 + $0x1a0] sm:$0xff] %v946
  %1082 = vst.msk [vmem:[%s4 + $0x1a8] sm:$0xff] %vm1029, %v948
  %1083 = vst [vmem:[%s4 + $0x1b0] sm:$0xff] %v952
  %1084 = vst.msk [vmem:[%s4 + $0x1b8] sm:$0xff] %vm1029, %v954
  %1085 = vst [vmem:[%s4 + $0x1c0] sm:$0xff] %v958
  %1086 = vst.msk [vmem:[%s4 + $0x1c8] sm:$0xff] %vm1029, %v960
  %1087 = vst [vmem:[%s4 + $0x1d0] sm:$0xff] %v964
  %1088 = vst.msk [vmem:[%s4 + $0x1d8] sm:$0xff] %vm1029, %v966
  %1089 = vst [vmem:[%s4 + $0x1e0] sm:$0xff] %v970
  %1090 = vst.msk [vmem:[%s4 + $0x1e8] sm:$0xff] %vm1029, %v972
  %1091 = vst [vmem:[%s4 + $0x1f0] sm:$0xff] %v976
  %1092 = vst.msk [vmem:[%s4 + $0x1f8] sm:$0xff] %vm1029, %v978
  %1093 = vst [vmem:[%s4 + $0x200] sm:$0xff] %v982
  %1094 = vst.msk [vmem:[%s4 + $0x208] sm:$0xff] %vm1029, %v984
  %1095 = vst [vmem:[%s4 + $0x210] sm:$0xff] %v988
  %1096 = vst.msk [vmem:[%s4 + $0x218] sm:$0xff] %vm1029, %v990
  %1097 = vst [vmem:[%s4 + $0x220] sm:$0xff] %v994
  %1098 = vst.msk [vmem:[%s4 + $0x228] sm:$0xff] %vm1029, %v996
  %1099 = vst [vmem:[%s4 + $0x230] sm:$0xff] %v1000
  %1100 = vst.msk [vmem:[%s4 + $0x238] sm:$0xff] %vm1029, %v1002
  %1101 = vst [vmem:[%s4 + $0x240] sm:$0xff] %v1006
  %1102 = vst.msk [vmem:[%s4 + $0x248] sm:$0xff] %vm1029, %v1008
  %1103 = vst [vmem:[%s4 + $0x250] sm:$0xff] %v1012
  %1104 = vst.msk [vmem:[%s4 + $0x258] sm:$0xff] %vm1029, %v1014
  %1105 = vst [vmem:[%s4 + $0x260] sm:$0xff] %v1018
  %1106 = vst.msk [vmem:[%s4 + $0x268] sm:$0xff] %vm1029, %v1020
  %1107 = vst [vmem:[%s4 + $0x270] sm:$0xff] %v1024
  %1108 = vst.msk [vmem:[%s4 + $0x278] sm:$0xff] %vm1029, %v1026
  %v1109 = vsel %vm1029, %v792, 0.0
  %v1110 = vadd.f32 %v790, %v1109
  %1111 = vadd.xlane.f32.xlu0 %v1110
  %v1112 = vpop.xlane.xlu0 %1111
  %v1113 = vsel %vm1029, %v798, 0.0
  %v1114 = vadd.f32 %v796, %v1113
  %1115 = vadd.xlane.f32.xlu0 %v1114
  %v1116 = vpop.xlane.xlu0 %1115
  %v1117 = vsel %vm1029, %v804, 0.0
  %v1118 = vadd.f32 %v802, %v1117
  %1119 = vadd.xlane.f32.xlu0 %v1118
  %v1120 = vpop.xlane.xlu0 %1119
  %v1121 = vsel %vm1029, %v810, 0.0
  %v1122 = vadd.f32 %v808, %v1121
  %1123 = vadd.xlane.f32.xlu0 %v1122
  %v1124 = vpop.xlane.xlu0 %1123
  %v1125 = vsel %vm1029, %v816, 0.0
  %v1126 = vadd.f32 %v814, %v1125
  %1127 = vadd.xlane.f32.xlu0 %v1126
  %v1128 = vpop.xlane.xlu0 %1127
  %v1129 = vsel %vm1029, %v822, 0.0
  %v1130 = vadd.f32 %v820, %v1129
  %1131 = vadd.xlane.f32.xlu0 %v1130
  %v1132 = vpop.xlane.xlu0 %1131
  %v1133 = vsel %vm1029, %v828, 0.0
  %v1134 = vadd.f32 %v826, %v1133
  %1135 = vadd.xlane.f32.xlu0 %v1134
  %v1136 = vpop.xlane.xlu0 %1135
  %v1137 = vsel %vm1029, %v834, 0.0
  %v1138 = vadd.f32 %v832, %v1137
  %1139 = vadd.xlane.f32.xlu0 %v1138
  %v1140 = vpop.xlane.xlu0 %1139
  %v1141 = vsel %vm1029, %v840, 0.0
  %v1142 = vadd.f32 %v838, %v1141
  %1143 = vadd.xlane.f32.xlu0 %v1142
  %v1144 = vpop.xlane.xlu0 %1143
  %v1145 = vsel %vm1029, %v846, 0.0
  %v1146 = vadd.f32 %v844, %v1145
  %1147 = vadd.xlane.f32.xlu0 %v1146
  %v1148 = vpop.xlane.xlu0 %1147
  %v1149 = vsel %vm1029, %v852, 0.0
  %v1150 = vadd.f32 %v850, %v1149
  %1151 = vadd.xlane.f32.xlu0 %v1150
  %v1152 = vpop.xlane.xlu0 %1151
  %v1153 = vsel %vm1029, %v858, 0.0
  %v1154 = vadd.f32 %v856, %v1153
  %1155 = vadd.xlane.f32.xlu0 %v1154
  %v1156 = vpop.xlane.xlu0 %1155
  %v1157 = vsel %vm1029, %v864, 0.0
  %v1158 = vadd.f32 %v862, %v1157
  %1159 = vadd.xlane.f32.xlu0 %v1158
  %v1160 = vpop.xlane.xlu0 %1159
  %v1161 = vsel %vm1029, %v870, 0.0
  %v1162 = vadd.f32 %v868, %v1161
  %1163 = vadd.xlane.f32.xlu0 %v1162
  %v1164 = vpop.xlane.xlu0 %1163
  %v1165 = vsel %vm1029, %v876, 0.0
  %v1166 = vadd.f32 %v874, %v1165
  %1167 = vadd.xlane.f32.xlu0 %v1166
  %v1168 = vpop.xlane.xlu0 %1167
  %v1169 = vsel %vm1029, %v882, 0.0
  %v1170 = vadd.f32 %v880, %v1169
  %1171 = vadd.xlane.f32.xlu0 %v1170
  %v1172 = vpop.xlane.xlu0 %1171
  %v1173 = vsel %vm1029, %v888, 0.0
  %v1174 = vadd.f32 %v886, %v1173
  %1175 = vadd.xlane.f32.xlu0 %v1174
  %v1176 = vpop.xlane.xlu0 %1175
  %v1177 = vsel %vm1029, %v894, 0.0
  %v1178 = vadd.f32 %v892, %v1177
  %1179 = vadd.xlane.f32.xlu0 %v1178
  %v1180 = vpop.xlane.xlu0 %1179
  %v1181 = vsel %vm1029, %v900, 0.0
  %v1182 = vadd.f32 %v898, %v1181
  %1183 = vadd.xlane.f32.xlu0 %v1182
  %v1184 = vpop.xlane.xlu0 %1183
  %v1185 = vsel %vm1029, %v906, 0.0
  %v1186 = vadd.f32 %v904, %v1185
  %1187 = vadd.xlane.f32.xlu0 %v1186
  %v1188 = vpop.xlane.xlu0 %1187
  %v1189 = vsel %vm1029, %v912, 0.0
  %v1190 = vadd.f32 %v910, %v1189
  %1191 = vadd.xlane.f32.xlu0 %v1190
  %v1192 = vpop.xlane.xlu0 %1191
  %v1193 = vsel %vm1029, %v918, 0.0
  %v1194 = vadd.f32 %v916, %v1193
  %1195 = vadd.xlane.f32.xlu0 %v1194
  %v1196 = vpop.xlane.xlu0 %1195
  %v1197 = vsel %vm1029, %v924, 0.0
  %v1198 = vadd.f32 %v922, %v1197
  %1199 = vadd.xlane.f32.xlu0 %v1198
  %v1200 = vpop.xlane.xlu0 %1199
  %v1201 = vsel %vm1029, %v930, 0.0
  %v1202 = vadd.f32 %v928, %v1201
  %1203 = vadd.xlane.f32.xlu0 %v1202
  %v1204 = vpop.xlane.xlu0 %1203
  %v1205 = vsel %vm1029, %v936, 0.0
  %v1206 = vadd.f32 %v934, %v1205
  %1207 = vadd.xlane.f32.xlu0 %v1206
  %v1208 = vpop.xlane.xlu0 %1207
  %v1209 = vsel %vm1029, %v942, 0.0
  %v1210 = vadd.f32 %v940, %v1209
  %1211 = vadd.xlane.f32.xlu0 %v1210
  %v1212 = vpop.xlane.xlu0 %1211
  %v1213 = vsel %vm1029, %v948, 0.0
  %v1214 = vadd.f32 %v946, %v1213
  %1215 = vadd.xlane.f32.xlu0 %v1214
  %v1216 = vpop.xlane.xlu0 %1215
  %v1217 = vsel %vm1029, %v954, 0.0
  %v1218 = vadd.f32 %v952, %v1217
  %1219 = vadd.xlane.f32.xlu0 %v1218
  %v1220 = vpop.xlane.xlu0 %1219
  %v1221 = vsel %vm1029, %v960, 0.0
  %v1222 = vadd.f32 %v958, %v1221
  %1223 = vadd.xlane.f32.xlu0 %v1222
  %v1224 = vpop.xlane.xlu0 %1223
  %v1225 = vsel %vm1029, %v966, 0.0
  %v1226 = vadd.f32 %v964, %v1225
  %1227 = vadd.xlane.f32.xlu0 %v1226
  %v1228 = vpop.xlane.xlu0 %1227
  %v1229 = vsel %vm1029, %v972, 0.0
  %v1230 = vadd.f32 %v970, %v1229
  %1231 = vadd.xlane.f32.xlu0 %v1230
  %v1232 = vpop.xlane.xlu0 %1231
  %v1233 = vsel %vm1029, %v978, 0.0
  %v1234 = vadd.f32 %v976, %v1233
  %1235 = vadd.xlane.f32.xlu0 %v1234
  %v1236 = vpop.xlane.xlu0 %1235
  %v1237 = vsel %vm1029, %v984, 0.0
  %v1238 = vadd.f32 %v982, %v1237
  %1239 = vadd.xlane.f32.xlu0 %v1238
  %v1240 = vpop.xlane.xlu0 %1239
  %v1241 = vsel %vm1029, %v990, 0.0
  %v1242 = vadd.f32 %v988, %v1241
  %1243 = vadd.xlane.f32.xlu0 %v1242
  %v1244 = vpop.xlane.xlu0 %1243
  %v1245 = vsel %vm1029, %v996, 0.0
  %v1246 = vadd.f32 %v994, %v1245
  %1247 = vadd.xlane.f32.xlu0 %v1246
  %v1248 = vpop.xlane.xlu0 %1247
  %v1249 = vsel %vm1029, %v1002, 0.0
  %v1250 = vadd.f32 %v1000, %v1249
  %1251 = vadd.xlane.f32.xlu0 %v1250
  %v1252 = vpop.xlane.xlu0 %1251
  %v1253 = vsel %vm1029, %v1008, 0.0
  %v1254 = vadd.f32 %v1006, %v1253
  %1255 = vadd.xlane.f32.xlu0 %v1254
  %v1256 = vpop.xlane.xlu0 %1255
  %v1257 = vsel %vm1029, %v1014, 0.0
  %v1258 = vadd.f32 %v1012, %v1257
  %1259 = vadd.xlane.f32.xlu0 %v1258
  %v1260 = vpop.xlane.xlu0 %1259
  %v1261 = vsel %vm1029, %v1020, 0.0
  %v1262 = vadd.f32 %v1018, %v1261
  %1263 = vadd.xlane.f32.xlu0 %v1262
  %v1264 = vpop.xlane.xlu0 %1263
  %v1265 = vsel %vm1029, %v1026, 0.0
  %v1266 = vadd.f32 %v1024, %v1265
  %1267 = vadd.xlane.f32.xlu0 %v1266
  %v1268 = vpop.xlane.xlu0 %1267
  %v1269 = vadd.f32 %v1112, 0.0
  %v1270 = vadd.f32 %v1116, 0.0
  %v1271 = vadd.f32 %v1120, 0.0
  %v1272 = vadd.f32 %v1124, 0.0
  %v1273 = vadd.f32 %v1128, 0.0
  %v1274 = vadd.f32 %v1132, 0.0
  %v1275 = vadd.f32 %v1136, 0.0
  %v1276 = vadd.f32 %v1140, 0.0
  %v1277 = vadd.f32 %v1144, 0.0
  %v1278 = vadd.f32 %v1148, 0.0
  %v1279 = vadd.f32 %v1152, 0.0
  %v1280 = vadd.f32 %v1156, 0.0
  %v1281 = vadd.f32 %v1160, 0.0
  %v1282 = vadd.f32 %v1164, 0.0
  %v1283 = vadd.f32 %v1168, 0.0
  %v1284 = vadd.f32 %v1172, 0.0
  %v1285 = vadd.f32 %v1176, 0.0
  %v1286 = vadd.f32 %v1180, 0.0
  %v1287 = vadd.f32 %v1184, 0.0
  %v1288 = vadd.f32 %v1188, 0.0
  %v1289 = vadd.f32 %v1192, 0.0
  %v1290 = vadd.f32 %v1196, 0.0
  %v1291 = vadd.f32 %v1200, 0.0
  %v1292 = vadd.f32 %v1204, 0.0
  %v1293 = vadd.f32 %v1208, 0.0
  %v1294 = vadd.f32 %v1212, 0.0
  %v1295 = vadd.f32 %v1216, 0.0
  %v1296 = vadd.f32 %v1220, 0.0
  %v1297 = vadd.f32 %v1224, 0.0
  %v1298 = vadd.f32 %v1228, 0.0
  %v1299 = vadd.f32 %v1232, 0.0
  %v1300 = vadd.f32 %v1236, 0.0
  %v1301 = vadd.f32 %v1240, 0.0
  %v1302 = vadd.f32 %v1244, 0.0
  %v1303 = vadd.f32 %v1248, 0.0
  %v1304 = vadd.f32 %v1252, 0.0
  %v1305 = vadd.f32 %v1256, 0.0
  %v1306 = vadd.f32 %v1260, 0.0
  %v1307 = vadd.f32 %v1264, 0.0
  %v1308 = vadd.f32 %v1268, 0.0
  %v1309 = vmul.f32 %v790, %v790
  %v1310 = vmul.f32 %v792, %v792
  %v1311 = vmul.f32 %v796, %v796
  %v1312 = vmul.f32 %v798, %v798
  %v1313 = vmul.f32 %v802, %v802
  %v1314 = vmul.f32 %v804, %v804
  %v1315 = vmul.f32 %v808, %v808
  %v1316 = vmul.f32 %v810, %v810
  %v1317 = vmul.f32 %v814, %v814
  %v1318 = vmul.f32 %v816, %v816
  %v1319 = vmul.f32 %v820, %v820
  %v1320 = vmul.f32 %v822, %v822
  %v1321 = vmul.f32 %v826, %v826
  %v1322 = vmul.f32 %v828, %v828
  %v1323 = vmul.f32 %v832, %v832
  %v1324 = vmul.f32 %v834, %v834
  %v1325 = vmul.f32 %v838, %v838
  %v1326 = vmul.f32 %v840, %v840
  %v1327 = vmul.f32 %v844, %v844
  %v1328 = vmul.f32 %v846, %v846
  %v1329 = vmul.f32 %v850, %v850
  %v1330 = vmul.f32 %v852, %v852
  %v1331 = vmul.f32 %v856, %v856
  %v1332 = vmul.f32 %v858, %v858
  %v1333 = vmul.f32 %v862, %v862
  %v1334 = vmul.f32 %v864, %v864
  %v1335 = vmul.f32 %v868, %v868
  %v1336 = vmul.f32 %v870, %v870
  %v1337 = vmul.f32 %v874, %v874
  %v1338 = vmul.f32 %v876, %v876
  %v1339 = vmul.f32 %v880, %v880
  %v1340 = vmul.f32 %v882, %v882
  %v1341 = vmul.f32 %v886, %v886
  %v1342 = vmul.f32 %v888, %v888
  %v1343 = vmul.f32 %v892, %v892
  %v1344 = vmul.f32 %v894, %v894
  %v1345 = vmul.f32 %v898, %v898
  %v1346 = vmul.f32 %v900, %v900
  %v1347 = vmul.f32 %v904, %v904
  %v1348 = vmul.f32 %v906, %v906
  %v1349 = vmul.f32 %v910, %v910
  %v1350 = vmul.f32 %v912, %v912
  %v1351 = vmul.f32 %v916, %v916
  %v1352 = vmul.f32 %v918, %v918
  %v1353 = vmul.f32 %v922, %v922
  %v1354 = vmul.f32 %v924, %v924
  %v1355 = vmul.f32 %v928, %v928
  %v1356 = vmul.f32 %v930, %v930
  %v1357 = vmul.f32 %v934, %v934
  %v1358 = vmul.f32 %v936, %v936
  %v1359 = vmul.f32 %v940, %v940
  %v1360 = vmul.f32 %v942, %v942
  %v1361 = vmul.f32 %v946, %v946
  %v1362 = vmul.f32 %v948, %v948
  %v1363 = vmul.f32 %v952, %v952
  %v1364 = vmul.f32 %v954, %v954
  %v1365 = vmul.f32 %v958, %v958
  %v1366 = vmul.f32 %v960, %v960
  %v1367 = vmul.f32 %v964, %v964
  %v1368 = vmul.f32 %v966, %v966
  %v1369 = vmul.f32 %v970, %v970
  %v1370 = vmul.f32 %v972, %v972
  %v1371 = vmul.f32 %v976, %v976
  %v1372 = vmul.f32 %v978, %v978
  %v1373 = vmul.f32 %v982, %v982
  %v1374 = vmul.f32 %v984, %v984
  %v1375 = vmul.f32 %v988, %v988
  %v1376 = vmul.f32 %v990, %v990
  %v1377 = vmul.f32 %v994, %v994
  %v1378 = vmul.f32 %v996, %v996
  %v1379 = vmul.f32 %v1000, %v1000
  %v1380 = vmul.f32 %v1002, %v1002
  %v1381 = vmul.f32 %v1006, %v1006
  %v1382 = vmul.f32 %v1008, %v1008
  %v1383 = vmul.f32 %v1012, %v1012
  %v1384 = vmul.f32 %v1014, %v1014
  %v1385 = vmul.f32 %v1018, %v1018
  %v1386 = vmul.f32 %v1020, %v1020
  %v1387 = vmul.f32 %v1024, %v1024
  %v1388 = vmul.f32 %v1026, %v1026
  %v1389 = vsel %vm1029, %v1310, 0.0
  %v1390 = vadd.f32 %v1309, %v1389
  %1391 = vadd.xlane.f32.xlu0 %v1390
  %v1392 = vpop.xlane.xlu0 %1391
  %v1393 = vsel %vm1029, %v1312, 0.0
  %v1394 = vadd.f32 %v1311, %v1393
  %1395 = vadd.xlane.f32.xlu0 %v1394
  %v1396 = vpop.xlane.xlu0 %1395
  %v1397 = vsel %vm1029, %v1314, 0.0
  %v1398 = vadd.f32 %v1313, %v1397
  %1399 = vadd.xlane.f32.xlu0 %v1398
  %v1400 = vpop.xlane.xlu0 %1399
  %v1401 = vsel %vm1029, %v1316, 0.0
  %v1402 = vadd.f32 %v1315, %v1401
  %1403 = vadd.xlane.f32.xlu0 %v1402
  %v1404 = vpop.xlane.xlu0 %1403
  %v1405 = vsel %vm1029, %v1318, 0.0
  %v1406 = vadd.f32 %v1317, %v1405
  %1407 = vadd.xlane.f32.xlu0 %v1406
  %v1408 = vpop.xlane.xlu0 %1407
  %v1409 = vsel %vm1029, %v1320, 0.0
  %v1410 = vadd.f32 %v1319, %v1409
  %1411 = vadd.xlane.f32.xlu0 %v1410
  %v1412 = vpop.xlane.xlu0 %1411
  %v1413 = vsel %vm1029, %v1322, 0.0
  %v1414 = vadd.f32 %v1321, %v1413
  %1415 = vadd.xlane.f32.xlu0 %v1414
  %v1416 = vpop.xlane.xlu0 %1415
  %v1417 = vsel %vm1029, %v1324, 0.0
  %v1418 = vadd.f32 %v1323, %v1417
  %1419 = vadd.xlane.f32.xlu0 %v1418
  %v1420 = vpop.xlane.xlu0 %1419
  %v1421 = vsel %vm1029, %v1326, 0.0
  %v1422 = vadd.f32 %v1325, %v1421
  %1423 = vadd.xlane.f32.xlu0 %v1422
  %v1424 = vpop.xlane.xlu0 %1423
  %v1425 = vsel %vm1029, %v1328, 0.0
  %v1426 = vadd.f32 %v1327, %v1425
  %1427 = vadd.xlane.f32.xlu0 %v1426
  %v1428 = vpop.xlane.xlu0 %1427
  %v1429 = vsel %vm1029, %v1330, 0.0
  %v1430 = vadd.f32 %v1329, %v1429
  %1431 = vadd.xlane.f32.xlu0 %v1430
  %v1432 = vpop.xlane.xlu0 %1431
  %v1433 = vsel %vm1029, %v1332, 0.0
  %v1434 = vadd.f32 %v1331, %v1433
  %1435 = vadd.xlane.f32.xlu0 %v1434
  %v1436 = vpop.xlane.xlu0 %1435
  %v1437 = vsel %vm1029, %v1334, 0.0
  %v1438 = vadd.f32 %v1333, %v1437
  %1439 = vadd.xlane.f32.xlu0 %v1438
  %v1440 = vpop.xlane.xlu0 %1439
  %v1441 = vsel %vm1029, %v1336, 0.0
  %v1442 = vadd.f32 %v1335, %v1441
  %1443 = vadd.xlane.f32.xlu0 %v1442
  %v1444 = vpop.xlane.xlu0 %1443
  %v1445 = vsel %vm1029, %v1338, 0.0
  %v1446 = vadd.f32 %v1337, %v1445
  %1447 = vadd.xlane.f32.xlu0 %v1446
  %v1448 = vpop.xlane.xlu0 %1447
  %v1449 = vsel %vm1029, %v1340, 0.0
  %v1450 = vadd.f32 %v1339, %v1449
  %1451 = vadd.xlane.f32.xlu0 %v1450
  %v1452 = vpop.xlane.xlu0 %1451
  %v1453 = vsel %vm1029, %v1342, 0.0
  %v1454 = vadd.f32 %v1341, %v1453
  %1455 = vadd.xlane.f32.xlu0 %v1454
  %v1456 = vpop.xlane.xlu0 %1455
  %v1457 = vsel %vm1029, %v1344, 0.0
  %v1458 = vadd.f32 %v1343, %v1457
  %1459 = vadd.xlane.f32.xlu0 %v1458
  %v1460 = vpop.xlane.xlu0 %1459
  %v1461 = vsel %vm1029, %v1346, 0.0
  %v1462 = vadd.f32 %v1345, %v1461
  %1463 = vadd.xlane.f32.xlu0 %v1462
  %v1464 = vpop.xlane.xlu0 %1463
  %v1465 = vsel %vm1029, %v1348, 0.0
  %v1466 = vadd.f32 %v1347, %v1465
  %1467 = vadd.xlane.f32.xlu0 %v1466
  %v1468 = vpop.xlane.xlu0 %1467
  %v1469 = vsel %vm1029, %v1350, 0.0
  %v1470 = vadd.f32 %v1349, %v1469
  %1471 = vadd.xlane.f32.xlu0 %v1470
  %v1472 = vpop.xlane.xlu0 %1471
  %v1473 = vsel %vm1029, %v1352, 0.0
  %v1474 = vadd.f32 %v1351, %v1473
  %1475 = vadd.xlane.f32.xlu0 %v1474
  %v1476 = vpop.xlane.xlu0 %1475
  %v1477 = vsel %vm1029, %v1354, 0.0
  %v1478 = vadd.f32 %v1353, %v1477
  %1479 = vadd.xlane.f32.xlu0 %v1478
  %v1480 = vpop.xlane.xlu0 %1479
  %v1481 = vsel %vm1029, %v1356, 0.0
  %v1482 = vadd.f32 %v1355, %v1481
  %1483 = vadd.xlane.f32.xlu0 %v1482
  %v1484 = vpop.xlane.xlu0 %1483
  %v1485 = vsel %vm1029, %v1358, 0.0
  %v1486 = vadd.f32 %v1357, %v1485
  %1487 = vadd.xlane.f32.xlu0 %v1486
  %v1488 = vpop.xlane.xlu0 %1487
  %v1489 = vsel %vm1029, %v1360, 0.0
  %v1490 = vadd.f32 %v1359, %v1489
  %1491 = vadd.xlane.f32.xlu0 %v1490
  %v1492 = vpop.xlane.xlu0 %1491
  %v1493 = vsel %vm1029, %v1362, 0.0
  %v1494 = vadd.f32 %v1361, %v1493
  %1495 = vadd.xlane.f32.xlu0 %v1494
  %v1496 = vpop.xlane.xlu0 %1495
  %v1497 = vsel %vm1029, %v1364, 0.0
  %v1498 = vadd.f32 %v1363, %v1497
  %1499 = vadd.xlane.f32.xlu0 %v1498
  %v1500 = vpop.xlane.xlu0 %1499
  %v1501 = vsel %vm1029, %v1366, 0.0
  %v1502 = vadd.f32 %v1365, %v1501
  %1503 = vadd.xlane.f32.xlu0 %v1502
  %v1504 = vpop.xlane.xlu0 %1503
  %v1505 = vsel %vm1029, %v1368, 0.0
  %v1506 = vadd.f32 %v1367, %v1505
  %1507 = vadd.xlane.f32.xlu0 %v1506
  %v1508 = vpop.xlane.xlu0 %1507
  %v1509 = vsel %vm1029, %v1370, 0.0
  %v1510 = vadd.f32 %v1369, %v1509
  %1511 = vadd.xlane.f32.xlu0 %v1510
  %v1512 = vpop.xlane.xlu0 %1511
  %v1513 = vsel %vm1029, %v1372, 0.0
  %v1514 = vadd.f32 %v1371, %v1513
  %1515 = vadd.xlane.f32.xlu0 %v1514
  %v1516 = vpop.xlane.xlu0 %1515
  %v1517 = vsel %vm1029, %v1374, 0.0
  %v1518 = vadd.f32 %v1373, %v1517
  %1519 = vadd.xlane.f32.xlu0 %v1518
  %v1520 = vpop.xlane.xlu0 %1519
  %v1521 = vsel %vm1029, %v1376, 0.0
  %v1522 = vadd.f32 %v1375, %v1521
  %1523 = vadd.xlane.f32.xlu0 %v1522
  %v1524 = vpop.xlane.xlu0 %1523
  %v1525 = vsel %vm1029, %v1378, 0.0
  %v1526 = vadd.f32 %v1377, %v1525
  %1527 = vadd.xlane.f32.xlu0 %v1526
  %v1528 = vpop.xlane.xlu0 %1527
  %v1529 = vsel %vm1029, %v1380, 0.0
  %v1530 = vadd.f32 %v1379, %v1529
  %1531 = vadd.xlane.f32.xlu0 %v1530
  %v1532 = vpop.xlane.xlu0 %1531
  %v1533 = vsel %vm1029, %v1382, 0.0
  %v1534 = vadd.f32 %v1381, %v1533
  %1535 = vadd.xlane.f32.xlu0 %v1534
  %v1536 = vpop.xlane.xlu0 %1535
  %v1537 = vsel %vm1029, %v1384, 0.0
  %v1538 = vadd.f32 %v1383, %v1537
  %1539 = vadd.xlane.f32.xlu0 %v1538
  %v1540 = vpop.xlane.xlu0 %1539
  %v1541 = vsel %vm1029, %v1386, 0.0
  %v1542 = vadd.f32 %v1385, %v1541
  %1543 = vadd.xlane.f32.xlu0 %v1542
  %v1544 = vpop.xlane.xlu0 %1543
  %v1545 = vsel %vm1029, %v1388, 0.0
  %v1546 = vadd.f32 %v1387, %v1545
  %1547 = vadd.xlane.f32.xlu0 %v1546
  %v1548 = vpop.xlane.xlu0 %1547
  %v1549 = vadd.f32 %v1392, 0.0
  %v1550 = vadd.f32 %v1396, 0.0
  %v1551 = vadd.f32 %v1400, 0.0
  %v1552 = vadd.f32 %v1404, 0.0
  %v1553 = vadd.f32 %v1408, 0.0
  %v1554 = vadd.f32 %v1412, 0.0
  %v1555 = vadd.f32 %v1416, 0.0
  %v1556 = vadd.f32 %v1420, 0.0
  %v1557 = vadd.f32 %v1424, 0.0
  %v1558 = vadd.f32 %v1428, 0.0
  %v1559 = vadd.f32 %v1432, 0.0
  %v1560 = vadd.f32 %v1436, 0.0
  %v1561 = vadd.f32 %v1440, 0.0
  %v1562 = vadd.f32 %v1444, 0.0
  %v1563 = vadd.f32 %v1448, 0.0
  %v1564 = vadd.f32 %v1452, 0.0
  %v1565 = vadd.f32 %v1456, 0.0
  %v1566 = vadd.f32 %v1460, 0.0
  %v1567 = vadd.f32 %v1464, 0.0
  %v1568 = vadd.f32 %v1468, 0.0
  %v1569 = vadd.f32 %v1472, 0.0
  %v1570 = vadd.f32 %v1476, 0.0
  %v1571 = vadd.f32 %v1480, 0.0
  %v1572 = vadd.f32 %v1484, 0.0
  %v1573 = vadd.f32 %v1488, 0.0
  %v1574 = vadd.f32 %v1492, 0.0
  %v1575 = vadd.f32 %v1496, 0.0
  %v1576 = vadd.f32 %v1500, 0.0
  %v1577 = vadd.f32 %v1504, 0.0
  %v1578 = vadd.f32 %v1508, 0.0
  %v1579 = vadd.f32 %v1512, 0.0
  %v1580 = vadd.f32 %v1516, 0.0
  %v1581 = vadd.f32 %v1520, 0.0
  %v1582 = vadd.f32 %v1524, 0.0
  %v1583 = vadd.f32 %v1528, 0.0
  %v1584 = vadd.f32 %v1532, 0.0
  %v1585 = vadd.f32 %v1536, 0.0
  %v1586 = vadd.f32 %v1540, 0.0
  %v1587 = vadd.f32 %v1544, 0.0
  %v1588 = vadd.f32 %v1548, 0.0
  %s1589 = scalar_lea.vmem %s0, 640
  %v1590 = vld [vmem:[%s1589] sm:$0xff]
  %v1591 = vld [vmem:[%s1589 + $0x8] sm:$0xff]
  %v1592 = vld [vmem:[%s1589 + $0x10] sm:$0xff]
  %v1593 = vld [vmem:[%s1589 + $0x18] sm:$0xff]
  %v1594 = vld [vmem:[%s1589 + $0x20] sm:$0xff]
  %v1595 = vld [vmem:[%s1589 + $0x28] sm:$0xff]
  %v1596 = vld [vmem:[%s1589 + $0x30] sm:$0xff]
  %v1597 = vld [vmem:[%s1589 + $0x38] sm:$0xff]
  %v1598 = vld [vmem:[%s1589 + $0x40] sm:$0xff]
  %v1599 = vld [vmem:[%s1589 + $0x48] sm:$0xff]
  %v1600 = vld [vmem:[%s1589 + $0x50] sm:$0xff]
  %v1601 = vld [vmem:[%s1589 + $0x58] sm:$0xff]
  %v1602 = vld [vmem:[%s1589 + $0x60] sm:$0xff]
  %v1603 = vld [vmem:[%s1589 + $0x68] sm:$0xff]
  %v1604 = vld [vmem:[%s1589 + $0x70] sm:$0xff]
  %v1605 = vld [vmem:[%s1589 + $0x78] sm:$0xff]
  %v1606 = vld [vmem:[%s1589 + $0x80] sm:$0xff]
  %v1607 = vld [vmem:[%s1589 + $0x88] sm:$0xff]
  %v1608 = vld [vmem:[%s1589 + $0x90] sm:$0xff]
  %v1609 = vld [vmem:[%s1589 + $0x98] sm:$0xff]
  %v1610 = vld [vmem:[%s1589 + $0xa0] sm:$0xff]
  %v1611 = vld [vmem:[%s1589 + $0xa8] sm:$0xff]
  %v1612 = vld [vmem:[%s1589 + $0xb0] sm:$0xff]
  %v1613 = vld [vmem:[%s1589 + $0xb8] sm:$0xff]
  %v1614 = vld [vmem:[%s1589 + $0xc0] sm:$0xff]
  %v1615 = vld [vmem:[%s1589 + $0xc8] sm:$0xff]
  %v1616 = vld [vmem:[%s1589 + $0xd0] sm:$0xff]
  %v1617 = vld [vmem:[%s1589 + $0xd8] sm:$0xff]
  %v1618 = vld [vmem:[%s1589 + $0xe0] sm:$0xff]
  %v1619 = vld [vmem:[%s1589 + $0xe8] sm:$0xff]
  %v1620 = vld [vmem:[%s1589 + $0xf0] sm:$0xff]
  %v1621 = vld [vmem:[%s1589 + $0xf8] sm:$0xff]
  %v1622 = vld [vmem:[%s1589 + $0x100] sm:$0xff]
  %v1623 = vld [vmem:[%s1589 + $0x108] sm:$0xff]
  %v1624 = vld [vmem:[%s1589 + $0x110] sm:$0xff]
  %v1625 = vld [vmem:[%s1589 + $0x118] sm:$0xff]
  %v1626 = vld [vmem:[%s1589 + $0x120] sm:$0xff]
  %v1627 = vld [vmem:[%s1589 + $0x128] sm:$0xff]
  %v1628 = vld [vmem:[%s1589 + $0x130] sm:$0xff]
  %v1629 = vld [vmem:[%s1589 + $0x138] sm:$0xff]
  %v1630 = vld [vmem:[%s1589 + $0x140] sm:$0xff]
  %v1631 = vld [vmem:[%s1589 + $0x148] sm:$0xff]
  %v1632 = vld [vmem:[%s1589 + $0x150] sm:$0xff]
  %v1633 = vld [vmem:[%s1589 + $0x158] sm:$0xff]
  %v1634 = vld [vmem:[%s1589 + $0x160] sm:$0xff]
  %v1635 = vld [vmem:[%s1589 + $0x168] sm:$0xff]
  %v1636 = vld [vmem:[%s1589 + $0x170] sm:$0xff]
  %v1637 = vld [vmem:[%s1589 + $0x178] sm:$0xff]
  %v1638 = vld [vmem:[%s1589 + $0x180] sm:$0xff]
  %v1639 = vld [vmem:[%s1589 + $0x188] sm:$0xff]
  %v1640 = vld [vmem:[%s1589 + $0x190] sm:$0xff]
  %v1641 = vld [vmem:[%s1589 + $0x198] sm:$0xff]
  %v1642 = vld [vmem:[%s1589 + $0x1a0] sm:$0xff]
  %v1643 = vld [vmem:[%s1589 + $0x1a8] sm:$0xff]
  %v1644 = vld [vmem:[%s1589 + $0x1b0] sm:$0xff]
  %v1645 = vld [vmem:[%s1589 + $0x1b8] sm:$0xff]
  %v1646 = vld [vmem:[%s1589 + $0x1c0] sm:$0xff]
  %v1647 = vld [vmem:[%s1589 + $0x1c8] sm:$0xff]
  %v1648 = vld [vmem:[%s1589 + $0x1d0] sm:$0xff]
  %v1649 = vld [vmem:[%s1589 + $0x1d8] sm:$0xff]
  %v1650 = vld [vmem:[%s1589 + $0x1e0] sm:$0xff]
  %v1651 = vld [vmem:[%s1589 + $0x1e8] sm:$0xff]
  %v1652 = vld [vmem:[%s1589 + $0x1f0] sm:$0xff]
  %v1653 = vld [vmem:[%s1589 + $0x1f8] sm:$0xff]
  %v1654 = vld [vmem:[%s1589 + $0x200] sm:$0xff]
  %v1655 = vld [vmem:[%s1589 + $0x208] sm:$0xff]
  %v1656 = vld [vmem:[%s1589 + $0x210] sm:$0xff]
  %v1657 = vld [vmem:[%s1589 + $0x218] sm:$0xff]
  %v1658 = vld [vmem:[%s1589 + $0x220] sm:$0xff]
  %v1659 = vld [vmem:[%s1589 + $0x228] sm:$0xff]
  %v1660 = vld [vmem:[%s1589 + $0x230] sm:$0xff]
  %v1661 = vld [vmem:[%s1589 + $0x238] sm:$0xff]
  %v1662 = vld [vmem:[%s1589 + $0x240] sm:$0xff]
  %v1663 = vld [vmem:[%s1589 + $0x248] sm:$0xff]
  %v1664 = vld [vmem:[%s1589 + $0x250] sm:$0xff]
  %v1665 = vld [vmem:[%s1589 + $0x258] sm:$0xff]
  %v1666 = vld [vmem:[%s1589 + $0x260] sm:$0xff]
  %v1667 = vld [vmem:[%s1589 + $0x268] sm:$0xff]
  %v1668 = vld [vmem:[%s1589 + $0x270] sm:$0xff]
  %v1669 = vld [vmem:[%s1589 + $0x278] sm:$0xff]
  %v1670 = vmax.f32 %v1590, 0.0
  %v1671 = vmax.f32 %v1591, 0.0
  %v1672 = vmax.f32 %v1592, 0.0
  %v1673 = vmax.f32 %v1593, 0.0
  %v1674 = vmax.f32 %v1594, 0.0
  %v1675 = vmax.f32 %v1595, 0.0
  %v1676 = vmax.f32 %v1596, 0.0
  %v1677 = vmax.f32 %v1597, 0.0
  %v1678 = vmax.f32 %v1598, 0.0
  %v1679 = vmax.f32 %v1599, 0.0
  %v1680 = vmax.f32 %v1600, 0.0
  %v1681 = vmax.f32 %v1601, 0.0
  %v1682 = vmax.f32 %v1602, 0.0
  %v1683 = vmax.f32 %v1603, 0.0
  %v1684 = vmax.f32 %v1604, 0.0
  %v1685 = vmax.f32 %v1605, 0.0
  %v1686 = vmax.f32 %v1606, 0.0
  %v1687 = vmax.f32 %v1607, 0.0
  %v1688 = vmax.f32 %v1608, 0.0
  %v1689 = vmax.f32 %v1609, 0.0
  %v1690 = vmax.f32 %v1610, 0.0
  %v1691 = vmax.f32 %v1611, 0.0
  %v1692 = vmax.f32 %v1612, 0.0
  %v1693 = vmax.f32 %v1613, 0.0
  %v1694 = vmax.f32 %v1614, 0.0
  %v1695 = vmax.f32 %v1615, 0.0
  %v1696 = vmax.f32 %v1616, 0.0
  %v1697 = vmax.f32 %v1617, 0.0
  %v1698 = vmax.f32 %v1618, 0.0
  %v1699 = vmax.f32 %v1619, 0.0
  %v1700 = vmax.f32 %v1620, 0.0
  %v1701 = vmax.f32 %v1621, 0.0
  %v1702 = vmax.f32 %v1622, 0.0
  %v1703 = vmax.f32 %v1623, 0.0
  %v1704 = vmax.f32 %v1624, 0.0
  %v1705 = vmax.f32 %v1625, 0.0
  %v1706 = vmax.f32 %v1626, 0.0
  %v1707 = vmax.f32 %v1627, 0.0
  %v1708 = vmax.f32 %v1628, 0.0
  %v1709 = vmax.f32 %v1629, 0.0
  %v1710 = vmax.f32 %v1630, 0.0
  %v1711 = vmax.f32 %v1631, 0.0
  %v1712 = vmax.f32 %v1632, 0.0
  %v1713 = vmax.f32 %v1633, 0.0
  %v1714 = vmax.f32 %v1634, 0.0
  %v1715 = vmax.f32 %v1635, 0.0
  %v1716 = vmax.f32 %v1636, 0.0
  %v1717 = vmax.f32 %v1637, 0.0
  %v1718 = vmax.f32 %v1638, 0.0
  %v1719 = vmax.f32 %v1639, 0.0
  %v1720 = vmax.f32 %v1640, 0.0
  %v1721 = vmax.f32 %v1641, 0.0
  %v1722 = vmax.f32 %v1642, 0.0
  %v1723 = vmax.f32 %v1643, 0.0
  %v1724 = vmax.f32 %v1644, 0.0
  %v1725 = vmax.f32 %v1645, 0.0
  %v1726 = vmax.f32 %v1646, 0.0
  %v1727 = vmax.f32 %v1647, 0.0
  %v1728 = vmax.f32 %v1648, 0.0
  %v1729 = vmax.f32 %v1649, 0.0
  %v1730 = vmax.f32 %v1650, 0.0
  %v1731 = vmax.f32 %v1651, 0.0
  %v1732 = vmax.f32 %v1652, 0.0
  %v1733 = vmax.f32 %v1653, 0.0
  %v1734 = vmax.f32 %v1654, 0.0
  %v1735 = vmax.f32 %v1655, 0.0
  %v1736 = vmax.f32 %v1656, 0.0
  %v1737 = vmax.f32 %v1657, 0.0
  %v1738 = vmax.f32 %v1658, 0.0
  %v1739 = vmax.f32 %v1659, 0.0
  %v1740 = vmax.f32 %v1660, 0.0
  %v1741 = vmax.f32 %v1661, 0.0
  %v1742 = vmax.f32 %v1662, 0.0
  %v1743 = vmax.f32 %v1663, 0.0
  %v1744 = vmax.f32 %v1664, 0.0
  %v1745 = vmax.f32 %v1665, 0.0
  %v1746 = vmax.f32 %v1666, 0.0
  %v1747 = vmax.f32 %v1667, 0.0
  %v1748 = vmax.f32 %v1668, 0.0
  %v1749 = vmax.f32 %v1669, 0.0
  %1750 = vmatprep.subr.mxu0 %v1701
  %1751 = vmatpush1.msra.mxu0 %v1700
  %1752 = vmatprep.subr.mxu0 %v1699
  %1753 = vmatpush1.msra.mxu0 %v1698
  %1754 = vmatprep.subr.mxu0 %v1697
  %1755 = vmatpush1.msra.mxu0 %v1696
  %1756 = vmatprep.subr.mxu0 %v1695
  %1757 = vmatpush1.msra.mxu0 %v1694
  %1758 = vmatprep.subr.mxu0 %v1693
  %1759 = vmatpush1.msra.mxu0 %v1692
  %1760 = vmatprep.subr.mxu0 %v1691
  %1761 = vmatpush1.msra.mxu0 %v1690
  %1762 = vmatprep.subr.mxu0 %v1689
  %1763 = vmatpush1.msra.mxu0 %v1688
  %1764 = vmatprep.subr.mxu0 %v1687
  %1765 = vmatpush1.msra.mxu0 %v1686
  %1766 = vmatprep.subr.mxu0 %v1685
  %1767 = vmatpush1.msra.mxu0 %v1684
  %1768 = vmatprep.subr.mxu0 %v1683
  %1769 = vmatpush1.msra.mxu0 %v1682
  %1770 = vmatprep.subr.mxu0 %v1681
  %1771 = vmatpush1.msra.mxu0 %v1680
  %1772 = vmatprep.subr.mxu0 %v1679
  %1773 = vmatpush1.msra.mxu0 %v1678
  %1774 = vmatprep.subr.mxu0 %v1677
  %1775 = vmatpush1.msra.mxu0 %v1676
  %1776 = vmatprep.subr.mxu0 %v1675
  %1777 = vmatpush1.msra.mxu0 %v1674
  %1778 = vmatprep.subr.mxu0 %v1673
  %1779 = vmatpush1.msra.mxu0 %v1672
  %1780 = vmatprep.subr.mxu0 %v1671
  %1781 = vmatpush1.msra.mxu0 %v1670
  %1782 = vmatprep.subr.mxu0 %v1733
  %1783 = vmatpush2.msra.mxu0 %v1732
  %1784 = vmatprep.subr.mxu0 %v1731
  %1785 = vmatpush2.msra.mxu0 %v1730
  %1786 = vmatprep.subr.mxu0 %v1729
  %1787 = vmatpush2.msra.mxu0 %v1728
  %1788 = vmatprep.subr.mxu0 %v1727
  %1789 = vmatpush2.msra.mxu0 %v1726
  %1790 = vmatprep.subr.mxu0 %v1725
  %1791 = vmatpush2.msra.mxu0 %v1724
  %1792 = vmatprep.subr.mxu0 %v1723
  %1793 = vmatpush2.msra.mxu0 %v1722
  %1794 = vmatprep.subr.mxu0 %v1721
  %1795 = vmatpush2.msra.mxu0 %v1720
  %1796 = vmatprep.subr.mxu0 %v1719
  %1797 = vmatpush2.msra.mxu0 %v1718
  %1798 = vmatprep.subr.mxu0 %v1717
  %1799 = vmatpush2.msra.mxu0 %v1716
  %1800 = vmatprep.subr.mxu0 %v1715
  %1801 = vmatpush2.msra.mxu0 %v1714
  %1802 = vmatprep.subr.mxu0 %v1713
  %1803 = vmatpush2.msra.mxu0 %v1712
  %1804 = vmatprep.subr.mxu0 %v1711
  %1805 = vmatpush2.msra.mxu0 %v1710
  %1806 = vmatprep.subr.mxu0 %v1709
  %1807 = vmatpush2.msra.mxu0 %v1708
  %1808 = vmatprep.subr.mxu0 %v1707
  %1809 = vmatpush2.msra.mxu0 %v1706
  %1810 = vmatprep.subr.mxu0 %v1705
  %1811 = vmatpush2.msra.mxu0 %v1704
  %1812 = vmatprep.subr.mxu0 %v1703
  %1813 = vmatpush2.msra.mxu0 %v1702
  %1814 = vmatprep.mubr.f32.mxu0 %v18
  %1815 = vmatmul.mubr.f32.gmra.mxu0 %v17
  %v1816 = vpop.f32.mrf.mxu0
  %v1817 = vadd.f32 0.0, %v1816
  %v1818 = vpop.f32.mrf.mxu0
  %v1819 = vadd.f32 0.0, %v1818
  %1820 = vmatprep.mubr.f32.mxu0 %v21
  %1821 = vmatmul.mubr.f32.gmra.mxu0 %v20
  %v1822 = vpop.f32.mrf.mxu0
  %v1823 = vadd.f32 0.0, %v1822
  %v1824 = vpop.f32.mrf.mxu0
  %v1825 = vadd.f32 0.0, %v1824
  %1826 = vmatprep.mubr.f32.mxu0 %v24
  %1827 = vmatmul.mubr.f32.gmra.mxu0 %v23
  %v1828 = vpop.f32.mrf.mxu0
  %v1829 = vadd.f32 0.0, %v1828
  %v1830 = vpop.f32.mrf.mxu0
  %v1831 = vadd.f32 0.0, %v1830
  %1832 = vmatprep.mubr.f32.mxu0 %v27
  %1833 = vmatmul.mubr.f32.gmra.mxu0 %v26
  %v1834 = vpop.f32.mrf.mxu0
  %v1835 = vadd.f32 0.0, %v1834
  %v1836 = vpop.f32.mrf.mxu0
  %v1837 = vadd.f32 0.0, %v1836
  %1838 = vmatprep.mubr.f32.mxu0 %v30
  %1839 = vmatmul.mubr.f32.gmra.mxu0 %v29
  %v1840 = vpop.f32.mrf.mxu0
  %v1841 = vadd.f32 0.0, %v1840
  %v1842 = vpop.f32.mrf.mxu0
  %v1843 = vadd.f32 0.0, %v1842
  %1844 = vmatprep.mubr.f32.mxu0 %v33
  %1845 = vmatmul.mubr.f32.gmra.mxu0 %v32
  %v1846 = vpop.f32.mrf.mxu0
  %v1847 = vadd.f32 0.0, %v1846
  %v1848 = vpop.f32.mrf.mxu0
  %v1849 = vadd.f32 0.0, %v1848
  %1850 = vmatprep.mubr.f32.mxu0 %v36
  %1851 = vmatmul.mubr.f32.gmra.mxu0 %v35
  %v1852 = vpop.f32.mrf.mxu0
  %v1853 = vadd.f32 0.0, %v1852
  %v1854 = vpop.f32.mrf.mxu0
  %v1855 = vadd.f32 0.0, %v1854
  %1856 = vmatprep.mubr.f32.mxu0 %v39
  %1857 = vmatmul.mubr.f32.gmra.mxu0 %v38
  %v1858 = vpop.f32.mrf.mxu0
  %v1859 = vadd.f32 0.0, %v1858
  %v1860 = vpop.f32.mrf.mxu0
  %v1861 = vadd.f32 0.0, %v1860
  %1862 = vmatprep.mubr.f32.mxu0 %v42
  %1863 = vmatmul.mubr.f32.gmra.mxu0 %v41
  %v1864 = vpop.f32.mrf.mxu0
  %v1865 = vadd.f32 0.0, %v1864
  %v1866 = vpop.f32.mrf.mxu0
  %v1867 = vadd.f32 0.0, %v1866
  %1868 = vmatprep.mubr.f32.mxu0 %v45
  %1869 = vmatmul.mubr.f32.gmra.mxu0 %v44
  %v1870 = vpop.f32.mrf.mxu0
  %v1871 = vadd.f32 0.0, %v1870
  %v1872 = vpop.f32.mrf.mxu0
  %v1873 = vadd.f32 0.0, %v1872
  %1874 = vmatprep.mubr.f32.mxu0 %v48
  %1875 = vmatmul.mubr.f32.gmra.mxu0 %v47
  %v1876 = vpop.f32.mrf.mxu0
  %v1877 = vadd.f32 0.0, %v1876
  %v1878 = vpop.f32.mrf.mxu0
  %v1879 = vadd.f32 0.0, %v1878
  %1880 = vmatprep.mubr.f32.mxu0 %v51
  %1881 = vmatmul.mubr.f32.gmra.mxu0 %v50
  %v1882 = vpop.f32.mrf.mxu0
  %v1883 = vadd.f32 0.0, %v1882
  %v1884 = vpop.f32.mrf.mxu0
  %v1885 = vadd.f32 0.0, %v1884
  %1886 = vmatprep.mubr.f32.mxu0 %v54
  %1887 = vmatmul.mubr.f32.gmra.mxu0 %v53
  %v1888 = vpop.f32.mrf.mxu0
  %v1889 = vadd.f32 0.0, %v1888
  %v1890 = vpop.f32.mrf.mxu0
  %v1891 = vadd.f32 0.0, %v1890
  %1892 = vmatprep.mubr.f32.mxu0 %v57
  %1893 = vmatmul.mubr.f32.gmra.mxu0 %v56
  %v1894 = vpop.f32.mrf.mxu0
  %v1895 = vadd.f32 0.0, %v1894
  %v1896 = vpop.f32.mrf.mxu0
  %v1897 = vadd.f32 0.0, %v1896
  %1898 = vmatprep.mubr.f32.mxu0 %v60
  %1899 = vmatmul.mubr.f32.gmra.mxu0 %v59
  %v1900 = vpop.f32.mrf.mxu0
  %v1901 = vadd.f32 0.0, %v1900
  %v1902 = vpop.f32.mrf.mxu0
  %v1903 = vadd.f32 0.0, %v1902
  %1904 = vmatprep.mubr.f32.mxu0 %v63
  %1905 = vmatmul.mubr.f32.gmra.mxu0 %v62
  %v1906 = vpop.f32.mrf.mxu0
  %v1907 = vadd.f32 0.0, %v1906
  %v1908 = vpop.f32.mrf.mxu0
  %v1909 = vadd.f32 0.0, %v1908
  %1910 = vmatprep.mubr.f32.mxu0 %v66
  %1911 = vmatmul.mubr.f32.gmra.mxu0 %v65
  %v1912 = vpop.f32.mrf.mxu0
  %v1913 = vadd.f32 0.0, %v1912
  %v1914 = vpop.f32.mrf.mxu0
  %v1915 = vadd.f32 0.0, %v1914
  %1916 = vmatprep.mubr.f32.mxu0 %v69
  %1917 = vmatmul.mubr.f32.gmra.mxu0 %v68
  %v1918 = vpop.f32.mrf.mxu0
  %v1919 = vadd.f32 0.0, %v1918
  %v1920 = vpop.f32.mrf.mxu0
  %v1921 = vadd.f32 0.0, %v1920
  %1922 = vmatprep.mubr.f32.mxu0 %v72
  %1923 = vmatmul.mubr.f32.gmra.mxu0 %v71
  %v1924 = vpop.f32.mrf.mxu0
  %v1925 = vadd.f32 0.0, %v1924
  %v1926 = vpop.f32.mrf.mxu0
  %v1927 = vadd.f32 0.0, %v1926
  %1928 = vmatprep.mubr.f32.mxu0 %v75
  %1929 = vmatmul.mubr.f32.gmra.mxu0 %v74
  %v1930 = vpop.f32.mrf.mxu0
  %v1931 = vadd.f32 0.0, %v1930
  %v1932 = vpop.f32.mrf.mxu0
  %v1933 = vadd.f32 0.0, %v1932
  %1934 = vmatprep.mubr.f32.mxu0 %v78
  %1935 = vmatmul.mubr.f32.gmra.mxu0 %v77
  %v1936 = vpop.f32.mrf.mxu0
  %v1937 = vadd.f32 0.0, %v1936
  %v1938 = vpop.f32.mrf.mxu0
  %v1939 = vadd.f32 0.0, %v1938
  %1940 = vmatprep.mubr.f32.mxu0 %v81
  %1941 = vmatmul.mubr.f32.gmra.mxu0 %v80
  %v1942 = vpop.f32.mrf.mxu0
  %v1943 = vadd.f32 0.0, %v1942
  %v1944 = vpop.f32.mrf.mxu0
  %v1945 = vadd.f32 0.0, %v1944
  %1946 = vmatprep.mubr.f32.mxu0 %v84
  %1947 = vmatmul.mubr.f32.gmra.mxu0 %v83
  %v1948 = vpop.f32.mrf.mxu0
  %v1949 = vadd.f32 0.0, %v1948
  %v1950 = vpop.f32.mrf.mxu0
  %v1951 = vadd.f32 0.0, %v1950
  %1952 = vmatprep.mubr.f32.mxu0 %v87
  %1953 = vmatmul.mubr.f32.gmra.mxu0 %v86
  %v1954 = vpop.f32.mrf.mxu0
  %v1955 = vadd.f32 0.0, %v1954
  %v1956 = vpop.f32.mrf.mxu0
  %v1957 = vadd.f32 0.0, %v1956
  %1958 = vmatprep.mubr.f32.mxu0 %v90
  %1959 = vmatmul.mubr.f32.gmra.mxu0 %v89
  %v1960 = vpop.f32.mrf.mxu0
  %v1961 = vadd.f32 0.0, %v1960
  %v1962 = vpop.f32.mrf.mxu0
  %v1963 = vadd.f32 0.0, %v1962
  %1964 = vmatprep.mubr.f32.mxu0 %v93
  %1965 = vmatmul.mubr.f32.gmra.mxu0 %v92
  %v1966 = vpop.f32.mrf.mxu0
  %v1967 = vadd.f32 0.0, %v1966
  %v1968 = vpop.f32.mrf.mxu0
  %v1969 = vadd.f32 0.0, %v1968
  %1970 = vmatprep.mubr.f32.mxu0 %v96
  %1971 = vmatmul.mubr.f32.gmra.mxu0 %v95
  %v1972 = vpop.f32.mrf.mxu0
  %v1973 = vadd.f32 0.0, %v1972
  %v1974 = vpop.f32.mrf.mxu0
  %v1975 = vadd.f32 0.0, %v1974
  %1976 = vmatprep.mubr.f32.mxu0 %v99
  %1977 = vmatmul.mubr.f32.gmra.mxu0 %v98
  %v1978 = vpop.f32.mrf.mxu0
  %v1979 = vadd.f32 0.0, %v1978
  %v1980 = vpop.f32.mrf.mxu0
  %v1981 = vadd.f32 0.0, %v1980
  %1982 = vmatprep.mubr.f32.mxu0 %v102
  %1983 = vmatmul.mubr.f32.gmra.mxu0 %v101
  %v1984 = vpop.f32.mrf.mxu0
  %v1985 = vadd.f32 0.0, %v1984
  %v1986 = vpop.f32.mrf.mxu0
  %v1987 = vadd.f32 0.0, %v1986
  %1988 = vmatprep.mubr.f32.mxu0 %v105
  %1989 = vmatmul.mubr.f32.gmra.mxu0 %v104
  %v1990 = vpop.f32.mrf.mxu0
  %v1991 = vadd.f32 0.0, %v1990
  %v1992 = vpop.f32.mrf.mxu0
  %v1993 = vadd.f32 0.0, %v1992
  %1994 = vmatprep.mubr.f32.mxu0 %v108
  %1995 = vmatmul.mubr.f32.gmra.mxu0 %v107
  %v1996 = vpop.f32.mrf.mxu0
  %v1997 = vadd.f32 0.0, %v1996
  %v1998 = vpop.f32.mrf.mxu0
  %v1999 = vadd.f32 0.0, %v1998
  %2000 = vmatprep.mubr.f32.mxu0 %v111
  %2001 = vmatmul.mubr.f32.gmra.mxu0 %v110
  %v2002 = vpop.f32.mrf.mxu0
  %v2003 = vadd.f32 0.0, %v2002
  %v2004 = vpop.f32.mrf.mxu0
  %v2005 = vadd.f32 0.0, %v2004
  %2006 = vmatprep.mubr.f32.mxu0 %v114
  %2007 = vmatmul.mubr.f32.gmra.mxu0 %v113
  %v2008 = vpop.f32.mrf.mxu0
  %v2009 = vadd.f32 0.0, %v2008
  %v2010 = vpop.f32.mrf.mxu0
  %v2011 = vadd.f32 0.0, %v2010
  %2012 = vmatprep.mubr.f32.mxu0 %v117
  %2013 = vmatmul.mubr.f32.gmra.mxu0 %v116
  %v2014 = vpop.f32.mrf.mxu0
  %v2015 = vadd.f32 0.0, %v2014
  %v2016 = vpop.f32.mrf.mxu0
  %v2017 = vadd.f32 0.0, %v2016
  %2018 = vmatprep.mubr.f32.mxu0 %v120
  %2019 = vmatmul.mubr.f32.gmra.mxu0 %v119
  %v2020 = vpop.f32.mrf.mxu0
  %v2021 = vadd.f32 0.0, %v2020
  %v2022 = vpop.f32.mrf.mxu0
  %v2023 = vadd.f32 0.0, %v2022
  %2024 = vmatprep.mubr.f32.mxu0 %v123
  %2025 = vmatmul.mubr.f32.gmra.mxu0 %v122
  %v2026 = vpop.f32.mrf.mxu0
  %v2027 = vadd.f32 0.0, %v2026
  %v2028 = vpop.f32.mrf.mxu0
  %v2029 = vadd.f32 0.0, %v2028
  %2030 = vmatprep.mubr.f32.mxu0 %v126
  %2031 = vmatmul.mubr.f32.gmra.mxu0 %v125
  %v2032 = vpop.f32.mrf.mxu0
  %v2033 = vadd.f32 0.0, %v2032
  %v2034 = vpop.f32.mrf.mxu0
  %v2035 = vadd.f32 0.0, %v2034
  %2036 = vmatprep.mubr.f32.mxu0 %v129
  %2037 = vmatmul.mubr.f32.gmra.mxu0 %v128
  %v2038 = vpop.f32.mrf.mxu0
  %v2039 = vadd.f32 0.0, %v2038
  %v2040 = vpop.f32.mrf.mxu0
  %v2041 = vadd.f32 0.0, %v2040
  %2042 = vmatprep.mubr.f32.mxu0 %v132
  %2043 = vmatmul.mubr.f32.gmra.mxu0 %v131
  %v2044 = vpop.f32.mrf.mxu0
  %v2045 = vadd.f32 0.0, %v2044
  %v2046 = vpop.f32.mrf.mxu0
  %v2047 = vadd.f32 0.0, %v2046
  %2048 = vmatprep.mubr.f32.mxu0 %v135
  %2049 = vmatmul.mubr.f32.gmra.mxu0 %v134
  %v2050 = vpop.f32.mrf.mxu0
  %v2051 = vadd.f32 0.0, %v2050
  %v2052 = vpop.f32.mrf.mxu0
  %v2053 = vadd.f32 0.0, %v2052
  %2054 = vdwg.mxu0
  %2055 = vmatprep.subr.mxu0 0.0
  %2056 = vmatpush1.msra.mxu0 0.0
  %2057 = vmatprep.subr.mxu0 0.0
  %2058 = vmatpush1.msra.mxu0 0.0
  %2059 = vmatprep.subr.mxu0 0.0
  %2060 = vmatpush1.msra.mxu0 0.0
  %2061 = vmatprep.subr.mxu0 0.0
  %2062 = vmatpush1.msra.mxu0 0.0
  %2063 = vmatprep.subr.mxu0 0.0
  %2064 = vmatpush1.msra.mxu0 0.0
  %2065 = vmatprep.subr.mxu0 0.0
  %2066 = vmatpush1.msra.mxu0 0.0
  %2067 = vmatprep.subr.mxu0 0.0
  %2068 = vmatpush1.msra.mxu0 0.0
  %2069 = vmatprep.subr.mxu0 0.0
  %2070 = vmatpush1.msra.mxu0 0.0
  %2071 = vmatprep.subr.mxu0 %v1749
  %2072 = vmatpush1.msra.mxu0 %v1748
  %2073 = vmatprep.subr.mxu0 %v1747
  %2074 = vmatpush1.msra.mxu0 %v1746
  %2075 = vmatprep.subr.mxu0 %v1745
  %2076 = vmatpush1.msra.mxu0 %v1744
  %2077 = vmatprep.subr.mxu0 %v1743
  %2078 = vmatpush1.msra.mxu0 %v1742
  %2079 = vmatprep.subr.mxu0 %v1741
  %2080 = vmatpush1.msra.mxu0 %v1740
  %2081 = vmatprep.subr.mxu0 %v1739
  %2082 = vmatpush1.msra.mxu0 %v1738
  %2083 = vmatprep.subr.mxu0 %v1737
  %2084 = vmatpush1.msra.mxu0 %v1736
  %2085 = vmatprep.subr.mxu0 %v1735
  %2086 = vmatpush1.msra.mxu0 %v1734
  %2087 = vmatprep.subr.mxu0 0.0
  %2088 = vmatpush2.msra.mxu0 0.0
  %2089 = vmatprep.subr.mxu0 0.0
  %2090 = vmatpush2.msra.mxu0 0.0
  %2091 = vmatprep.subr.mxu0 0.0
  %2092 = vmatpush2.msra.mxu0 0.0
  %2093 = vmatprep.subr.mxu0 0.0
  %2094 = vmatpush2.msra.mxu0 0.0
  %2095 = vmatprep.subr.mxu0 0.0
  %2096 = vmatpush2.msra.mxu0 0.0
  %2097 = vmatprep.subr.mxu0 0.0
  %2098 = vmatpush2.msra.mxu0 0.0
  %2099 = vmatprep.subr.mxu0 0.0
  %2100 = vmatpush2.msra.mxu0 0.0
  %2101 = vmatprep.subr.mxu0 0.0
  %2102 = vmatpush2.msra.mxu0 0.0
  %2103 = vmatprep.subr.mxu0 0.0
  %2104 = vmatpush2.msra.mxu0 0.0
  %2105 = vmatprep.subr.mxu0 0.0
  %2106 = vmatpush2.msra.mxu0 0.0
  %2107 = vmatprep.subr.mxu0 0.0
  %2108 = vmatpush2.msra.mxu0 0.0
  %2109 = vmatprep.subr.mxu0 0.0
  %2110 = vmatpush2.msra.mxu0 0.0
  %2111 = vmatprep.subr.mxu0 0.0
  %2112 = vmatpush2.msra.mxu0 0.0
  %2113 = vmatprep.subr.mxu0 0.0
  %2114 = vmatpush2.msra.mxu0 0.0
  %2115 = vmatprep.subr.mxu0 0.0
  %2116 = vmatpush2.msra.mxu0 0.0
  %2117 = vmatprep.subr.mxu0 0.0
  %2118 = vmatpush2.msra.mxu0 0.0
  %2119 = vmatprep.mubr.f32.mxu0 0.0
  %2120 = vmatmul.mubr.f32.gmra.mxu0 %v299
  %v2121 = vpop.f32.mrf.mxu0
  %v2122 = vadd.f32 %v1817, %v2121
  %v2123 = vpop.f32.mrf.mxu0
  %v2124 = vadd.f32 %v1819, %v2123
  %2125 = vmatprep.mubr.f32.mxu0 0.0
  %2126 = vmatmul.mubr.f32.gmra.mxu0 %v302
  %v2127 = vpop.f32.mrf.mxu0
  %v2128 = vadd.f32 %v1823, %v2127
  %v2129 = vpop.f32.mrf.mxu0
  %v2130 = vadd.f32 %v1825, %v2129
  %2131 = vmatprep.mubr.f32.mxu0 0.0
  %2132 = vmatmul.mubr.f32.gmra.mxu0 %v305
  %v2133 = vpop.f32.mrf.mxu0
  %v2134 = vadd.f32 %v1829, %v2133
  %v2135 = vpop.f32.mrf.mxu0
  %v2136 = vadd.f32 %v1831, %v2135
  %2137 = vmatprep.mubr.f32.mxu0 0.0
  %2138 = vmatmul.mubr.f32.gmra.mxu0 %v308
  %v2139 = vpop.f32.mrf.mxu0
  %v2140 = vadd.f32 %v1835, %v2139
  %v2141 = vpop.f32.mrf.mxu0
  %v2142 = vadd.f32 %v1837, %v2141
  %2143 = vmatprep.mubr.f32.mxu0 0.0
  %2144 = vmatmul.mubr.f32.gmra.mxu0 %v311
  %v2145 = vpop.f32.mrf.mxu0
  %v2146 = vadd.f32 %v1841, %v2145
  %v2147 = vpop.f32.mrf.mxu0
  %v2148 = vadd.f32 %v1843, %v2147
  %2149 = vmatprep.mubr.f32.mxu0 0.0
  %2150 = vmatmul.mubr.f32.gmra.mxu0 %v314
  %v2151 = vpop.f32.mrf.mxu0
  %v2152 = vadd.f32 %v1847, %v2151
  %v2153 = vpop.f32.mrf.mxu0
  %v2154 = vadd.f32 %v1849, %v2153
  %2155 = vmatprep.mubr.f32.mxu0 0.0
  %2156 = vmatmul.mubr.f32.gmra.mxu0 %v317
  %v2157 = vpop.f32.mrf.mxu0
  %v2158 = vadd.f32 %v1853, %v2157
  %v2159 = vpop.f32.mrf.mxu0
  %v2160 = vadd.f32 %v1855, %v2159
  %2161 = vmatprep.mubr.f32.mxu0 0.0
  %2162 = vmatmul.mubr.f32.gmra.mxu0 %v320
  %v2163 = vpop.f32.mrf.mxu0
  %v2164 = vadd.f32 %v1859, %v2163
  %v2165 = vpop.f32.mrf.mxu0
  %v2166 = vadd.f32 %v1861, %v2165
  %2167 = vmatprep.mubr.f32.mxu0 0.0
  %2168 = vmatmul.mubr.f32.gmra.mxu0 %v323
  %v2169 = vpop.f32.mrf.mxu0
  %v2170 = vadd.f32 %v1865, %v2169
  %v2171 = vpop.f32.mrf.mxu0
  %v2172 = vadd.f32 %v1867, %v2171
  %2173 = vmatprep.mubr.f32.mxu0 0.0
  %2174 = vmatmul.mubr.f32.gmra.mxu0 %v326
  %v2175 = vpop.f32.mrf.mxu0
  %v2176 = vadd.f32 %v1871, %v2175
  %v2177 = vpop.f32.mrf.mxu0
  %v2178 = vadd.f32 %v1873, %v2177
  %2179 = vmatprep.mubr.f32.mxu0 0.0
  %2180 = vmatmul.mubr.f32.gmra.mxu0 %v329
  %v2181 = vpop.f32.mrf.mxu0
  %v2182 = vadd.f32 %v1877, %v2181
  %v2183 = vpop.f32.mrf.mxu0
  %v2184 = vadd.f32 %v1879, %v2183
  %2185 = vmatprep.mubr.f32.mxu0 0.0
  %2186 = vmatmul.mubr.f32.gmra.mxu0 %v332
  %v2187 = vpop.f32.mrf.mxu0
  %v2188 = vadd.f32 %v1883, %v2187
  %v2189 = vpop.f32.mrf.mxu0
  %v2190 = vadd.f32 %v1885, %v2189
  %2191 = vmatprep.mubr.f32.mxu0 0.0
  %2192 = vmatmul.mubr.f32.gmra.mxu0 %v335
  %v2193 = vpop.f32.mrf.mxu0
  %v2194 = vadd.f32 %v1889, %v2193
  %v2195 = vpop.f32.mrf.mxu0
  %v2196 = vadd.f32 %v1891, %v2195
  %2197 = vmatprep.mubr.f32.mxu0 0.0
  %2198 = vmatmul.mubr.f32.gmra.mxu0 %v338
  %v2199 = vpop.f32.mrf.mxu0
  %v2200 = vadd.f32 %v1895, %v2199
  %v2201 = vpop.f32.mrf.mxu0
  %v2202 = vadd.f32 %v1897, %v2201
  %2203 = vmatprep.mubr.f32.mxu0 0.0
  %2204 = vmatmul.mubr.f32.gmra.mxu0 %v341
  %v2205 = vpop.f32.mrf.mxu0
  %v2206 = vadd.f32 %v1901, %v2205
  %v2207 = vpop.f32.mrf.mxu0
  %v2208 = vadd.f32 %v1903, %v2207
  %2209 = vmatprep.mubr.f32.mxu0 0.0
  %2210 = vmatmul.mubr.f32.gmra.mxu0 %v344
  %v2211 = vpop.f32.mrf.mxu0
  %v2212 = vadd.f32 %v1907, %v2211
  %v2213 = vpop.f32.mrf.mxu0
  %v2214 = vadd.f32 %v1909, %v2213
  %2215 = vmatprep.mubr.f32.mxu0 0.0
  %2216 = vmatmul.mubr.f32.gmra.mxu0 %v347
  %v2217 = vpop.f32.mrf.mxu0
  %v2218 = vadd.f32 %v1913, %v2217
  %v2219 = vpop.f32.mrf.mxu0
  %v2220 = vadd.f32 %v1915, %v2219
  %2221 = vmatprep.mubr.f32.mxu0 0.0
  %2222 = vmatmul.mubr.f32.gmra.mxu0 %v350
  %v2223 = vpop.f32.mrf.mxu0
  %v2224 = vadd.f32 %v1919, %v2223
  %v2225 = vpop.f32.mrf.mxu0
  %v2226 = vadd.f32 %v1921, %v2225
  %2227 = vmatprep.mubr.f32.mxu0 0.0
  %2228 = vmatmul.mubr.f32.gmra.mxu0 %v353
  %v2229 = vpop.f32.mrf.mxu0
  %v2230 = vadd.f32 %v1925, %v2229
  %v2231 = vpop.f32.mrf.mxu0
  %v2232 = vadd.f32 %v1927, %v2231
  %2233 = vmatprep.mubr.f32.mxu0 0.0
  %2234 = vmatmul.mubr.f32.gmra.mxu0 %v356
  %v2235 = vpop.f32.mrf.mxu0
  %v2236 = vadd.f32 %v1931, %v2235
  %v2237 = vpop.f32.mrf.mxu0
  %v2238 = vadd.f32 %v1933, %v2237
  %2239 = vmatprep.mubr.f32.mxu0 0.0
  %2240 = vmatmul.mubr.f32.gmra.mxu0 %v359
  %v2241 = vpop.f32.mrf.mxu0
  %v2242 = vadd.f32 %v1937, %v2241
  %v2243 = vpop.f32.mrf.mxu0
  %v2244 = vadd.f32 %v1939, %v2243
  %2245 = vmatprep.mubr.f32.mxu0 0.0
  %2246 = vmatmul.mubr.f32.gmra.mxu0 %v362
  %v2247 = vpop.f32.mrf.mxu0
  %v2248 = vadd.f32 %v1943, %v2247
  %v2249 = vpop.f32.mrf.mxu0
  %v2250 = vadd.f32 %v1945, %v2249
  %2251 = vmatprep.mubr.f32.mxu0 0.0
  %2252 = vmatmul.mubr.f32.gmra.mxu0 %v365
  %v2253 = vpop.f32.mrf.mxu0
  %v2254 = vadd.f32 %v1949, %v2253
  %v2255 = vpop.f32.mrf.mxu0
  %v2256 = vadd.f32 %v1951, %v2255
  %2257 = vmatprep.mubr.f32.mxu0 0.0
  %2258 = vmatmul.mubr.f32.gmra.mxu0 %v368
  %v2259 = vpop.f32.mrf.mxu0
  %v2260 = vadd.f32 %v1955, %v2259
  %v2261 = vpop.f32.mrf.mxu0
  %v2262 = vadd.f32 %v1957, %v2261
  %2263 = vmatprep.mubr.f32.mxu0 0.0
  %2264 = vmatmul.mubr.f32.gmra.mxu0 %v371
  %v2265 = vpop.f32.mrf.mxu0
  %v2266 = vadd.f32 %v1961, %v2265
  %v2267 = vpop.f32.mrf.mxu0
  %v2268 = vadd.f32 %v1963, %v2267
  %2269 = vmatprep.mubr.f32.mxu0 0.0
  %2270 = vmatmul.mubr.f32.gmra.mxu0 %v374
  %v2271 = vpop.f32.mrf.mxu0
  %v2272 = vadd.f32 %v1967, %v2271
  %v2273 = vpop.f32.mrf.mxu0
  %v2274 = vadd.f32 %v1969, %v2273
  %2275 = vmatprep.mubr.f32.mxu0 0.0
  %2276 = vmatmul.mubr.f32.gmra.mxu0 %v377
  %v2277 = vpop.f32.mrf.mxu0
  %v2278 = vadd.f32 %v1973, %v2277
  %v2279 = vpop.f32.mrf.mxu0
  %v2280 = vadd.f32 %v1975, %v2279
  %2281 = vmatprep.mubr.f32.mxu0 0.0
  %2282 = vmatmul.mubr.f32.gmra.mxu0 %v380
  %v2283 = vpop.f32.mrf.mxu0
  %v2284 = vadd.f32 %v1979, %v2283
  %v2285 = vpop.f32.mrf.mxu0
  %v2286 = vadd.f32 %v1981, %v2285
  %2287 = vmatprep.mubr.f32.mxu0 0.0
  %2288 = vmatmul.mubr.f32.gmra.mxu0 %v383
  %v2289 = vpop.f32.mrf.mxu0
  %v2290 = vadd.f32 %v1985, %v2289
  %v2291 = vpop.f32.mrf.mxu0
  %v2292 = vadd.f32 %v1987, %v2291
  %2293 = vmatprep.mubr.f32.mxu0 0.0
  %2294 = vmatmul.mubr.f32.gmra.mxu0 %v386
  %v2295 = vpop.f32.mrf.mxu0
  %v2296 = vadd.f32 %v1991, %v2295
  %v2297 = vpop.f32.mrf.mxu0
  %v2298 = vadd.f32 %v1993, %v2297
  %2299 = vmatprep.mubr.f32.mxu0 0.0
  %2300 = vmatmul.mubr.f32.gmra.mxu0 %v389
  %v2301 = vpop.f32.mrf.mxu0
  %v2302 = vadd.f32 %v1997, %v2301
  %v2303 = vpop.f32.mrf.mxu0
  %v2304 = vadd.f32 %v1999, %v2303
  %2305 = vmatprep.mubr.f32.mxu0 0.0
  %2306 = vmatmul.mubr.f32.gmra.mxu0 %v392
  %v2307 = vpop.f32.mrf.mxu0
  %v2308 = vadd.f32 %v2003, %v2307
  %v2309 = vpop.f32.mrf.mxu0
  %v2310 = vadd.f32 %v2005, %v2309
  %2311 = vmatprep.mubr.f32.mxu0 0.0
  %2312 = vmatmul.mubr.f32.gmra.mxu0 %v395
  %v2313 = vpop.f32.mrf.mxu0
  %v2314 = vadd.f32 %v2009, %v2313
  %v2315 = vpop.f32.mrf.mxu0
  %v2316 = vadd.f32 %v2011, %v2315
  %2317 = vmatprep.mubr.f32.mxu0 0.0
  %2318 = vmatmul.mubr.f32.gmra.mxu0 %v398
  %v2319 = vpop.f32.mrf.mxu0
  %v2320 = vadd.f32 %v2015, %v2319
  %v2321 = vpop.f32.mrf.mxu0
  %v2322 = vadd.f32 %v2017, %v2321
  %2323 = vmatprep.mubr.f32.mxu0 0.0
  %2324 = vmatmul.mubr.f32.gmra.mxu0 %v401
  %v2325 = vpop.f32.mrf.mxu0
  %v2326 = vadd.f32 %v2021, %v2325
  %v2327 = vpop.f32.mrf.mxu0
  %v2328 = vadd.f32 %v2023, %v2327
  %2329 = vmatprep.mubr.f32.mxu0 0.0
  %2330 = vmatmul.mubr.f32.gmra.mxu0 %v404
  %v2331 = vpop.f32.mrf.mxu0
  %v2332 = vadd.f32 %v2027, %v2331
  %v2333 = vpop.f32.mrf.mxu0
  %v2334 = vadd.f32 %v2029, %v2333
  %2335 = vmatprep.mubr.f32.mxu0 0.0
  %2336 = vmatmul.mubr.f32.gmra.mxu0 %v407
  %v2337 = vpop.f32.mrf.mxu0
  %v2338 = vadd.f32 %v2033, %v2337
  %v2339 = vpop.f32.mrf.mxu0
  %v2340 = vadd.f32 %v2035, %v2339
  %2341 = vmatprep.mubr.f32.mxu0 0.0
  %2342 = vmatmul.mubr.f32.gmra.mxu0 %v410
  %v2343 = vpop.f32.mrf.mxu0
  %v2344 = vadd.f32 %v2039, %v2343
  %v2345 = vpop.f32.mrf.mxu0
  %v2346 = vadd.f32 %v2041, %v2345
  %2347 = vmatprep.mubr.f32.mxu0 0.0
  %2348 = vmatmul.mubr.f32.gmra.mxu0 %v413
  %v2349 = vpop.f32.mrf.mxu0
  %v2350 = vadd.f32 %v2045, %v2349
  %v2351 = vpop.f32.mrf.mxu0
  %v2352 = vadd.f32 %v2047, %v2351
  %2353 = vmatprep.mubr.f32.mxu0 0.0
  %2354 = vmatmul.mubr.f32.gmra.mxu0 %v416
  %v2355 = vpop.f32.mrf.mxu0
  %v2356 = vadd.f32 %v2051, %v2355
  %v2357 = vpop.f32.mrf.mxu0
  %v2358 = vadd.f32 %v2053, %v2357
  %2359 = vdwg.mxu0
  %s2360 = scalar_lea.vmem %s4, 640
  %2361 = vst [vmem:[%s2360] sm:$0xff] %v2122
  %2362 = vst.msk [vmem:[%s2360 + $0x8] sm:$0xff] %vm1029, %v2124
  %2363 = vst [vmem:[%s2360 + $0x10] sm:$0xff] %v2128
  %2364 = vst.msk [vmem:[%s2360 + $0x18] sm:$0xff] %vm1029, %v2130
  %2365 = vst [vmem:[%s2360 + $0x20] sm:$0xff] %v2134
  %2366 = vst.msk [vmem:[%s2360 + $0x28] sm:$0xff] %vm1029, %v2136
  %2367 = vst [vmem:[%s2360 + $0x30] sm:$0xff] %v2140
  %2368 = vst.msk [vmem:[%s2360 + $0x38] sm:$0xff] %vm1029, %v2142
  %2369 = vst [vmem:[%s2360 + $0x40] sm:$0xff] %v2146
  %2370 = vst.msk [vmem:[%s2360 + $0x48] sm:$0xff] %vm1029, %v2148
  %2371 = vst [vmem:[%s2360 + $0x50] sm:$0xff] %v2152
  %2372 = vst.msk [vmem:[%s2360 + $0x58] sm:$0xff] %vm1029, %v2154
  %2373 = vst [vmem:[%s2360 + $0x60] sm:$0xff] %v2158
  %2374 = vst.msk [vmem:[%s2360 + $0x68] sm:$0xff] %vm1029, %v2160
  %2375 = vst [vmem:[%s2360 + $0x70] sm:$0xff] %v2164
  %2376 = vst.msk [vmem:[%s2360 + $0x78] sm:$0xff] %vm1029, %v2166
  %2377 = vst [vmem:[%s2360 + $0x80] sm:$0xff] %v2170
  %2378 = vst.msk [vmem:[%s2360 + $0x88] sm:$0xff] %vm1029, %v2172
  %2379 = vst [vmem:[%s2360 + $0x90] sm:$0xff] %v2176
  %2380 = vst.msk [vmem:[%s2360 + $0x98] sm:$0xff] %vm1029, %v2178
  %2381 = vst [vmem:[%s2360 + $0xa0] sm:$0xff] %v2182
  %2382 = vst.msk [vmem:[%s2360 + $0xa8] sm:$0xff] %vm1029, %v2184
  %2383 = vst [vmem:[%s2360 + $0xb0] sm:$0xff] %v2188
  %2384 = vst.msk [vmem:[%s2360 + $0xb8] sm:$0xff] %vm1029, %v2190
  %2385 = vst [vmem:[%s2360 + $0xc0] sm:$0xff] %v2194
  %2386 = vst.msk [vmem:[%s2360 + $0xc8] sm:$0xff] %vm1029, %v2196
  %2387 = vst [vmem:[%s2360 + $0xd0] sm:$0xff] %v2200
  %2388 = vst.msk [vmem:[%s2360 + $0xd8] sm:$0xff] %vm1029, %v2202
  %2389 = vst [vmem:[%s2360 + $0xe0] sm:$0xff] %v2206
  %2390 = vst.msk [vmem:[%s2360 + $0xe8] sm:$0xff] %vm1029, %v2208
  %2391 = vst [vmem:[%s2360 + $0xf0] sm:$0xff] %v2212
  %2392 = vst.msk [vmem:[%s2360 + $0xf8] sm:$0xff] %vm1029, %v2214
  %2393 = vst [vmem:[%s2360 + $0x100] sm:$0xff] %v2218
  %2394 = vst.msk [vmem:[%s2360 + $0x108] sm:$0xff] %vm1029, %v2220
  %2395 = vst [vmem:[%s2360 + $0x110] sm:$0xff] %v2224
  %2396 = vst.msk [vmem:[%s2360 + $0x118] sm:$0xff] %vm1029, %v2226
  %2397 = vst [vmem:[%s2360 + $0x120] sm:$0xff] %v2230
  %2398 = vst.msk [vmem:[%s2360 + $0x128] sm:$0xff] %vm1029, %v2232
  %2399 = vst [vmem:[%s2360 + $0x130] sm:$0xff] %v2236
  %2400 = vst.msk [vmem:[%s2360 + $0x138] sm:$0xff] %vm1029, %v2238
  %2401 = vst [vmem:[%s2360 + $0x140] sm:$0xff] %v2242
  %2402 = vst.msk [vmem:[%s2360 + $0x148] sm:$0xff] %vm1029, %v2244
  %2403 = vst [vmem:[%s2360 + $0x150] sm:$0xff] %v2248
  %2404 = vst.msk [vmem:[%s2360 + $0x158] sm:$0xff] %vm1029, %v2250
  %2405 = vst [vmem:[%s2360 + $0x160] sm:$0xff] %v2254
  %2406 = vst.msk [vmem:[%s2360 + $0x168] sm:$0xff] %vm1029, %v2256
  %2407 = vst [vmem:[%s2360 + $0x170] sm:$0xff] %v2260
  %2408 = vst.msk [vmem:[%s2360 + $0x178] sm:$0xff] %vm1029, %v2262
  %2409 = vst [vmem:[%s2360 + $0x180] sm:$0xff] %v2266
  %2410 = vst.msk [vmem:[%s2360 + $0x188] sm:$0xff] %vm1029, %v2268
  %2411 = vst [vmem:[%s2360 + $0x190] sm:$0xff] %v2272
  %2412 = vst.msk [vmem:[%s2360 + $0x198] sm:$0xff] %vm1029, %v2274
  %2413 = vst [vmem:[%s2360 + $0x1a0] sm:$0xff] %v2278
  %2414 = vst.msk [vmem:[%s2360 + $0x1a8] sm:$0xff] %vm1029, %v2280
  %2415 = vst [vmem:[%s2360 + $0x1b0] sm:$0xff] %v2284
  %2416 = vst.msk [vmem:[%s2360 + $0x1b8] sm:$0xff] %vm1029, %v2286
  %2417 = vst [vmem:[%s2360 + $0x1c0] sm:$0xff] %v2290
  %2418 = vst.msk [vmem:[%s2360 + $0x1c8] sm:$0xff] %vm1029, %v2292
  %2419 = vst [vmem:[%s2360 + $0x1d0] sm:$0xff] %v2296
  %2420 = vst.msk [vmem:[%s2360 + $0x1d8] sm:$0xff] %vm1029, %v2298
  %2421 = vst [vmem:[%s2360 + $0x1e0] sm:$0xff] %v2302
  %2422 = vst.msk [vmem:[%s2360 + $0x1e8] sm:$0xff] %vm1029, %v2304
  %2423 = vst [vmem:[%s2360 + $0x1f0] sm:$0xff] %v2308
  %2424 = vst.msk [vmem:[%s2360 + $0x1f8] sm:$0xff] %vm1029, %v2310
  %2425 = vst [vmem:[%s2360 + $0x200] sm:$0xff] %v2314
  %2426 = vst.msk [vmem:[%s2360 + $0x208] sm:$0xff] %vm1029, %v2316
  %2427 = vst [vmem:[%s2360 + $0x210] sm:$0xff] %v2320
  %2428 = vst.msk [vmem:[%s2360 + $0x218] sm:$0xff] %vm1029, %v2322
  %2429 = vst [vmem:[%s2360 + $0x220] sm:$0xff] %v2326
  %2430 = vst.msk [vmem:[%s2360 + $0x228] sm:$0xff] %vm1029, %v2328
  %2431 = vst [vmem:[%s2360 + $0x230] sm:$0xff] %v2332
  %2432 = vst.msk [vmem:[%s2360 + $0x238] sm:$0xff] %vm1029, %v2334
  %2433 = vst [vmem:[%s2360 + $0x240] sm:$0xff] %v2338
  %2434 = vst.msk [vmem:[%s2360 + $0x248] sm:$0xff] %vm1029, %v2340
  %2435 = vst [vmem:[%s2360 + $0x250] sm:$0xff] %v2344
  %2436 = vst.msk [vmem:[%s2360 + $0x258] sm:$0xff] %vm1029, %v2346
  %2437 = vst [vmem:[%s2360 + $0x260] sm:$0xff] %v2350
  %2438 = vst.msk [vmem:[%s2360 + $0x268] sm:$0xff] %vm1029, %v2352
  %2439 = vst [vmem:[%s2360 + $0x270] sm:$0xff] %v2356
  %2440 = vst.msk [vmem:[%s2360 + $0x278] sm:$0xff] %vm1029, %v2358
  %v2441 = vsel %vm1029, %v2124, 0.0
  %v2442 = vadd.f32 %v2122, %v2441
  %2443 = vadd.xlane.f32.xlu0 %v2442
  %v2444 = vpop.xlane.xlu0 %2443
  %v2445 = vsel %vm1029, %v2130, 0.0
  %v2446 = vadd.f32 %v2128, %v2445
  %2447 = vadd.xlane.f32.xlu0 %v2446
  %v2448 = vpop.xlane.xlu0 %2447
  %v2449 = vsel %vm1029, %v2136, 0.0
  %v2450 = vadd.f32 %v2134, %v2449
  %2451 = vadd.xlane.f32.xlu0 %v2450
  %v2452 = vpop.xlane.xlu0 %2451
  %v2453 = vsel %vm1029, %v2142, 0.0
  %v2454 = vadd.f32 %v2140, %v2453
  %2455 = vadd.xlane.f32.xlu0 %v2454
  %v2456 = vpop.xlane.xlu0 %2455
  %v2457 = vsel %vm1029, %v2148, 0.0
  %v2458 = vadd.f32 %v2146, %v2457
  %2459 = vadd.xlane.f32.xlu0 %v2458
  %v2460 = vpop.xlane.xlu0 %2459
  %v2461 = vsel %vm1029, %v2154, 0.0
  %v2462 = vadd.f32 %v2152, %v2461
  %2463 = vadd.xlane.f32.xlu0 %v2462
  %v2464 = vpop.xlane.xlu0 %2463
  %v2465 = vsel %vm1029, %v2160, 0.0
  %v2466 = vadd.f32 %v2158, %v2465
  %2467 = vadd.xlane.f32.xlu0 %v2466
  %v2468 = vpop.xlane.xlu0 %2467
  %v2469 = vsel %vm1029, %v2166, 0.0
  %v2470 = vadd.f32 %v2164, %v2469
  %2471 = vadd.xlane.f32.xlu0 %v2470
  %v2472 = vpop.xlane.xlu0 %2471
  %v2473 = vsel %vm1029, %v2172, 0.0
  %v2474 = vadd.f32 %v2170, %v2473
  %2475 = vadd.xlane.f32.xlu0 %v2474
  %v2476 = vpop.xlane.xlu0 %2475
  %v2477 = vsel %vm1029, %v2178, 0.0
  %v2478 = vadd.f32 %v2176, %v2477
  %2479 = vadd.xlane.f32.xlu0 %v2478
  %v2480 = vpop.xlane.xlu0 %2479
  %v2481 = vsel %vm1029, %v2184, 0.0
  %v2482 = vadd.f32 %v2182, %v2481
  %2483 = vadd.xlane.f32.xlu0 %v2482
  %v2484 = vpop.xlane.xlu0 %2483
  %v2485 = vsel %vm1029, %v2190, 0.0
  %v2486 = vadd.f32 %v2188, %v2485
  %2487 = vadd.xlane.f32.xlu0 %v2486
  %v2488 = vpop.xlane.xlu0 %2487
  %v2489 = vsel %vm1029, %v2196, 0.0
  %v2490 = vadd.f32 %v2194, %v2489
  %2491 = vadd.xlane.f32.xlu0 %v2490
  %v2492 = vpop.xlane.xlu0 %2491
  %v2493 = vsel %vm1029, %v2202, 0.0
  %v2494 = vadd.f32 %v2200, %v2493
  %2495 = vadd.xlane.f32.xlu0 %v2494
  %v2496 = vpop.xlane.xlu0 %2495
  %v2497 = vsel %vm1029, %v2208, 0.0
  %v2498 = vadd.f32 %v2206, %v2497
  %2499 = vadd.xlane.f32.xlu0 %v2498
  %v2500 = vpop.xlane.xlu0 %2499
  %v2501 = vsel %vm1029, %v2214, 0.0
  %v2502 = vadd.f32 %v2212, %v2501
  %2503 = vadd.xlane.f32.xlu0 %v2502
  %v2504 = vpop.xlane.xlu0 %2503
  %v2505 = vsel %vm1029, %v2220, 0.0
  %v2506 = vadd.f32 %v2218, %v2505
  %2507 = vadd.xlane.f32.xlu0 %v2506
  %v2508 = vpop.xlane.xlu0 %2507
  %v2509 = vsel %vm1029, %v2226, 0.0
  %v2510 = vadd.f32 %v2224, %v2509
  %2511 = vadd.xlane.f32.xlu0 %v2510
  %v2512 = vpop.xlane.xlu0 %2511
  %v2513 = vsel %vm1029, %v2232, 0.0
  %v2514 = vadd.f32 %v2230, %v2513
  %2515 = vadd.xlane.f32.xlu0 %v2514
  %v2516 = vpop.xlane.xlu0 %2515
  %v2517 = vsel %vm1029, %v2238, 0.0
  %v2518 = vadd.f32 %v2236, %v2517
  %2519 = vadd.xlane.f32.xlu0 %v2518
  %v2520 = vpop.xlane.xlu0 %2519
  %v2521 = vsel %vm1029, %v2244, 0.0
  %v2522 = vadd.f32 %v2242, %v2521
  %2523 = vadd.xlane.f32.xlu0 %v2522
  %v2524 = vpop.xlane.xlu0 %2523
  %v2525 = vsel %vm1029, %v2250, 0.0
  %v2526 = vadd.f32 %v2248, %v2525
  %2527 = vadd.xlane.f32.xlu0 %v2526
  %v2528 = vpop.xlane.xlu0 %2527
  %v2529 = vsel %vm1029, %v2256, 0.0
  %v2530 = vadd.f32 %v2254, %v2529
  %2531 = vadd.xlane.f32.xlu0 %v2530
  %v2532 = vpop.xlane.xlu0 %2531
  %v2533 = vsel %vm1029, %v2262, 0.0
  %v2534 = vadd.f32 %v2260, %v2533
  %2535 = vadd.xlane.f32.xlu0 %v2534
  %v2536 = vpop.xlane.xlu0 %2535
  %v2537 = vsel %vm1029, %v2268, 0.0
  %v2538 = vadd.f32 %v2266, %v2537
  %2539 = vadd.xlane.f32.xlu0 %v2538
  %v2540 = vpop.xlane.xlu0 %2539
  %v2541 = vsel %vm1029, %v2274, 0.0
  %v2542 = vadd.f32 %v2272, %v2541
  %2543 = vadd.xlane.f32.xlu0 %v2542
  %v2544 = vpop.xlane.xlu0 %2543
  %v2545 = vsel %vm1029, %v2280, 0.0
  %v2546 = vadd.f32 %v2278, %v2545
  %2547 = vadd.xlane.f32.xlu0 %v2546
  %v2548 = vpop.xlane.xlu0 %2547
  %v2549 = vsel %vm1029, %v2286, 0.0
  %v2550 = vadd.f32 %v2284, %v2549
  %2551 = vadd.xlane.f32.xlu0 %v2550
  %v2552 = vpop.xlane.xlu0 %2551
  %v2553 = vsel %vm1029, %v2292, 0.0
  %v2554 = vadd.f32 %v2290, %v2553
  %2555 = vadd.xlane.f32.xlu0 %v2554
  %v2556 = vpop.xlane.xlu0 %2555
  %v2557 = vsel %vm1029, %v2298, 0.0
  %v2558 = vadd.f32 %v2296, %v2557
  %2559 = vadd.xlane.f32.xlu0 %v2558
  %v2560 = vpop.xlane.xlu0 %2559
  %v2561 = vsel %vm1029, %v2304, 0.0
  %v2562 = vadd.f32 %v2302, %v2561
  %2563 = vadd.xlane.f32.xlu0 %v2562
  %v2564 = vpop.xlane.xlu0 %2563
  %v2565 = vsel %vm1029, %v2310, 0.0
  %v2566 = vadd.f32 %v2308, %v2565
  %2567 = vadd.xlane.f32.xlu0 %v2566
  %v2568 = vpop.xlane.xlu0 %2567
  %v2569 = vsel %vm1029, %v2316, 0.0
  %v2570 = vadd.f32 %v2314, %v2569
  %2571 = vadd.xlane.f32.xlu0 %v2570
  %v2572 = vpop.xlane.xlu0 %2571
  %v2573 = vsel %vm1029, %v2322, 0.0
  %v2574 = vadd.f32 %v2320, %v2573
  %2575 = vadd.xlane.f32.xlu0 %v2574
  %v2576 = vpop.xlane.xlu0 %2575
  %v2577 = vsel %vm1029, %v2328, 0.0
  %v2578 = vadd.f32 %v2326, %v2577
  %2579 = vadd.xlane.f32.xlu0 %v2578
  %v2580 = vpop.xlane.xlu0 %2579
  %v2581 = vsel %vm1029, %v2334, 0.0
  %v2582 = vadd.f32 %v2332, %v2581
  %2583 = vadd.xlane.f32.xlu0 %v2582
  %v2584 = vpop.xlane.xlu0 %2583
  %v2585 = vsel %vm1029, %v2340, 0.0
  %v2586 = vadd.f32 %v2338, %v2585
  %2587 = vadd.xlane.f32.xlu0 %v2586
  %v2588 = vpop.xlane.xlu0 %2587
  %v2589 = vsel %vm1029, %v2346, 0.0
  %v2590 = vadd.f32 %v2344, %v2589
  %2591 = vadd.xlane.f32.xlu0 %v2590
  %v2592 = vpop.xlane.xlu0 %2591
  %v2593 = vsel %vm1029, %v2352, 0.0
  %v2594 = vadd.f32 %v2350, %v2593
  %2595 = vadd.xlane.f32.xlu0 %v2594
  %v2596 = vpop.xlane.xlu0 %2595
  %v2597 = vsel %vm1029, %v2358, 0.0
  %v2598 = vadd.f32 %v2356, %v2597
  %2599 = vadd.xlane.f32.xlu0 %v2598
  %v2600 = vpop.xlane.xlu0 %2599
  %v2601 = vadd.f32 %v1269, %v2444
  %v2602 = vadd.f32 %v1270, %v2448
  %v2603 = vadd.f32 %v1271, %v2452
  %v2604 = vadd.f32 %v1272, %v2456
  %v2605 = vadd.f32 %v1273, %v2460
  %v2606 = vadd.f32 %v1274, %v2464
  %v2607 = vadd.f32 %v1275, %v2468
  %v2608 = vadd.f32 %v1276, %v2472
  %v2609 = vadd.f32 %v1277, %v2476
  %v2610 = vadd.f32 %v1278, %v2480
  %v2611 = vadd.f32 %v1279, %v2484
  %v2612 = vadd.f32 %v1280, %v2488
  %v2613 = vadd.f32 %v1281, %v2492
  %v2614 = vadd.f32 %v1282, %v2496
  %v2615 = vadd.f32 %v1283, %v2500
  %v2616 = vadd.f32 %v1284, %v2504
  %v2617 = vadd.f32 %v1285, %v2508
  %v2618 = vadd.f32 %v1286, %v2512
  %v2619 = vadd.f32 %v1287, %v2516
  %v2620 = vadd.f32 %v1288, %v2520
  %v2621 = vadd.f32 %v1289, %v2524
  %v2622 = vadd.f32 %v1290, %v2528
  %v2623 = vadd.f32 %v1291, %v2532
  %v2624 = vadd.f32 %v1292, %v2536
  %v2625 = vadd.f32 %v1293, %v2540
  %v2626 = vadd.f32 %v1294, %v2544
  %v2627 = vadd.f32 %v1295, %v2548
  %v2628 = vadd.f32 %v1296, %v2552
  %v2629 = vadd.f32 %v1297, %v2556
  %v2630 = vadd.f32 %v1298, %v2560
  %v2631 = vadd.f32 %v1299, %v2564
  %v2632 = vadd.f32 %v1300, %v2568
  %v2633 = vadd.f32 %v1301, %v2572
  %v2634 = vadd.f32 %v1302, %v2576
  %v2635 = vadd.f32 %v1303, %v2580
  %v2636 = vadd.f32 %v1304, %v2584
  %v2637 = vadd.f32 %v1305, %v2588
  %v2638 = vadd.f32 %v1306, %v2592
  %v2639 = vadd.f32 %v1307, %v2596
  %v2640 = vadd.f32 %v1308, %v2600
  %v2641 = vmul.f32 %v2122, %v2122
  %v2642 = vmul.f32 %v2124, %v2124
  %v2643 = vmul.f32 %v2128, %v2128
  %v2644 = vmul.f32 %v2130, %v2130
  %v2645 = vmul.f32 %v2134, %v2134
  %v2646 = vmul.f32 %v2136, %v2136
  %v2647 = vmul.f32 %v2140, %v2140
  %v2648 = vmul.f32 %v2142, %v2142
  %v2649 = vmul.f32 %v2146, %v2146
  %v2650 = vmul.f32 %v2148, %v2148
  %v2651 = vmul.f32 %v2152, %v2152
  %v2652 = vmul.f32 %v2154, %v2154
  %v2653 = vmul.f32 %v2158, %v2158
  %v2654 = vmul.f32 %v2160, %v2160
  %v2655 = vmul.f32 %v2164, %v2164
  %v2656 = vmul.f32 %v2166, %v2166
  %v2657 = vmul.f32 %v2170, %v2170
  %v2658 = vmul.f32 %v2172, %v2172
  %v2659 = vmul.f32 %v2176, %v2176
  %v2660 = vmul.f32 %v2178, %v2178
  %v2661 = vmul.f32 %v2182, %v2182
  %v2662 = vmul.f32 %v2184, %v2184
  %v2663 = vmul.f32 %v2188, %v2188
  %v2664 = vmul.f32 %v2190, %v2190
  %v2665 = vmul.f32 %v2194, %v2194
  %v2666 = vmul.f32 %v2196, %v2196
  %v2667 = vmul.f32 %v2200, %v2200
  %v2668 = vmul.f32 %v2202, %v2202
  %v2669 = vmul.f32 %v2206, %v2206
  %v2670 = vmul.f32 %v2208, %v2208
  %v2671 = vmul.f32 %v2212, %v2212
  %v2672 = vmul.f32 %v2214, %v2214
  %v2673 = vmul.f32 %v2218, %v2218
  %v2674 = vmul.f32 %v2220, %v2220
  %v2675 = vmul.f32 %v2224, %v2224
  %v2676 = vmul.f32 %v2226, %v2226
  %v2677 = vmul.f32 %v2230, %v2230
  %v2678 = vmul.f32 %v2232, %v2232
  %v2679 = vmul.f32 %v2236, %v2236
  %v2680 = vmul.f32 %v2238, %v2238
  %v2681 = vmul.f32 %v2242, %v2242
  %v2682 = vmul.f32 %v2244, %v2244
  %v2683 = vmul.f32 %v2248, %v2248
  %v2684 = vmul.f32 %v2250, %v2250
  %v2685 = vmul.f32 %v2254, %v2254
  %v2686 = vmul.f32 %v2256, %v2256
  %v2687 = vmul.f32 %v2260, %v2260
  %v2688 = vmul.f32 %v2262, %v2262
  %v2689 = vmul.f32 %v2266, %v2266
  %v2690 = vmul.f32 %v2268, %v2268
  %v2691 = vmul.f32 %v2272, %v2272
  %v2692 = vmul.f32 %v2274, %v2274
  %v2693 = vmul.f32 %v2278, %v2278
  %v2694 = vmul.f32 %v2280, %v2280
  %v2695 = vmul.f32 %v2284, %v2284
  %v2696 = vmul.f32 %v2286, %v2286
  %v2697 = vmul.f32 %v2290, %v2290
  %v2698 = vmul.f32 %v2292, %v2292
  %v2699 = vmul.f32 %v2296, %v2296
  %v2700 = vmul.f32 %v2298, %v2298
  %v2701 = vmul.f32 %v2302, %v2302
  %v2702 = vmul.f32 %v2304, %v2304
  %v2703 = vmul.f32 %v2308, %v2308
  %v2704 = vmul.f32 %v2310, %v2310
  %v2705 = vmul.f32 %v2314, %v2314
  %v2706 = vmul.f32 %v2316, %v2316
  %v2707 = vmul.f32 %v2320, %v2320
  %v2708 = vmul.f32 %v2322, %v2322
  %v2709 = vmul.f32 %v2326, %v2326
  %v2710 = vmul.f32 %v2328, %v2328
  %v2711 = vmul.f32 %v2332, %v2332
  %v2712 = vmul.f32 %v2334, %v2334
  %v2713 = vmul.f32 %v2338, %v2338
  %v2714 = vmul.f32 %v2340, %v2340
  %v2715 = vmul.f32 %v2344, %v2344
  %v2716 = vmul.f32 %v2346, %v2346
  %v2717 = vmul.f32 %v2350, %v2350
  %v2718 = vmul.f32 %v2352, %v2352
  %v2719 = vmul.f32 %v2356, %v2356
  %v2720 = vmul.f32 %v2358, %v2358
  %v2721 = vsel %vm1029, %v2642, 0.0
  %v2722 = vadd.f32 %v2641, %v2721
  %2723 = vadd.xlane.f32.xlu0 %v2722
  %v2724 = vpop.xlane.xlu0 %2723
  %v2725 = vsel %vm1029, %v2644, 0.0
  %v2726 = vadd.f32 %v2643, %v2725
  %2727 = vadd.xlane.f32.xlu0 %v2726
  %v2728 = vpop.xlane.xlu0 %2727
  %v2729 = vsel %vm1029, %v2646, 0.0
  %v2730 = vadd.f32 %v2645, %v2729
  %2731 = vadd.xlane.f32.xlu0 %v2730
  %v2732 = vpop.xlane.xlu0 %2731
  %v2733 = vsel %vm1029, %v2648, 0.0
  %v2734 = vadd.f32 %v2647, %v2733
  %2735 = vadd.xlane.f32.xlu0 %v2734
  %v2736 = vpop.xlane.xlu0 %2735
  %v2737 = vsel %vm1029, %v2650, 0.0
  %v2738 = vadd.f32 %v2649, %v2737
  %2739 = vadd.xlane.f32.xlu0 %v2738
  %v2740 = vpop.xlane.xlu0 %2739
  %v2741 = vsel %vm1029, %v2652, 0.0
  %v2742 = vadd.f32 %v2651, %v2741
  %2743 = vadd.xlane.f32.xlu0 %v2742
  %v2744 = vpop.xlane.xlu0 %2743
  %v2745 = vsel %vm1029, %v2654, 0.0
  %v2746 = vadd.f32 %v2653, %v2745
  %2747 = vadd.xlane.f32.xlu0 %v2746
  %v2748 = vpop.xlane.xlu0 %2747
  %v2749 = vsel %vm1029, %v2656, 0.0
  %v2750 = vadd.f32 %v2655, %v2749
  %2751 = vadd.xlane.f32.xlu0 %v2750
  %v2752 = vpop.xlane.xlu0 %2751
  %v2753 = vsel %vm1029, %v2658, 0.0
  %v2754 = vadd.f32 %v2657, %v2753
  %2755 = vadd.xlane.f32.xlu0 %v2754
  %v2756 = vpop.xlane.xlu0 %2755
  %v2757 = vsel %vm1029, %v2660, 0.0
  %v2758 = vadd.f32 %v2659, %v2757
  %2759 = vadd.xlane.f32.xlu0 %v2758
  %v2760 = vpop.xlane.xlu0 %2759
  %v2761 = vsel %vm1029, %v2662, 0.0
  %v2762 = vadd.f32 %v2661, %v2761
  %2763 = vadd.xlane.f32.xlu0 %v2762
  %v2764 = vpop.xlane.xlu0 %2763
  %v2765 = vsel %vm1029, %v2664, 0.0
  %v2766 = vadd.f32 %v2663, %v2765
  %2767 = vadd.xlane.f32.xlu0 %v2766
  %v2768 = vpop.xlane.xlu0 %2767
  %v2769 = vsel %vm1029, %v2666, 0.0
  %v2770 = vadd.f32 %v2665, %v2769
  %2771 = vadd.xlane.f32.xlu0 %v2770
  %v2772 = vpop.xlane.xlu0 %2771
  %v2773 = vsel %vm1029, %v2668, 0.0
  %v2774 = vadd.f32 %v2667, %v2773
  %2775 = vadd.xlane.f32.xlu0 %v2774
  %v2776 = vpop.xlane.xlu0 %2775
  %v2777 = vsel %vm1029, %v2670, 0.0
  %v2778 = vadd.f32 %v2669, %v2777
  %2779 = vadd.xlane.f32.xlu0 %v2778
  %v2780 = vpop.xlane.xlu0 %2779
  %v2781 = vsel %vm1029, %v2672, 0.0
  %v2782 = vadd.f32 %v2671, %v2781
  %2783 = vadd.xlane.f32.xlu0 %v2782
  %v2784 = vpop.xlane.xlu0 %2783
  %v2785 = vsel %vm1029, %v2674, 0.0
  %v2786 = vadd.f32 %v2673, %v2785
  %2787 = vadd.xlane.f32.xlu0 %v2786
  %v2788 = vpop.xlane.xlu0 %2787
  %v2789 = vsel %vm1029, %v2676, 0.0
  %v2790 = vadd.f32 %v2675, %v2789
  %2791 = vadd.xlane.f32.xlu0 %v2790
  %v2792 = vpop.xlane.xlu0 %2791
  %v2793 = vsel %vm1029, %v2678, 0.0
  %v2794 = vadd.f32 %v2677, %v2793
  %2795 = vadd.xlane.f32.xlu0 %v2794
  %v2796 = vpop.xlane.xlu0 %2795
  %v2797 = vsel %vm1029, %v2680, 0.0
  %v2798 = vadd.f32 %v2679, %v2797
  %2799 = vadd.xlane.f32.xlu0 %v2798
  %v2800 = vpop.xlane.xlu0 %2799
  %v2801 = vsel %vm1029, %v2682, 0.0
  %v2802 = vadd.f32 %v2681, %v2801
  %2803 = vadd.xlane.f32.xlu0 %v2802
  %v2804 = vpop.xlane.xlu0 %2803
  %v2805 = vsel %vm1029, %v2684, 0.0
  %v2806 = vadd.f32 %v2683, %v2805
  %2807 = vadd.xlane.f32.xlu0 %v2806
  %v2808 = vpop.xlane.xlu0 %2807
  %v2809 = vsel %vm1029, %v2686, 0.0
  %v2810 = vadd.f32 %v2685, %v2809
  %2811 = vadd.xlane.f32.xlu0 %v2810
  %v2812 = vpop.xlane.xlu0 %2811
  %v2813 = vsel %vm1029, %v2688, 0.0
  %v2814 = vadd.f32 %v2687, %v2813
  %2815 = vadd.xlane.f32.xlu0 %v2814
  %v2816 = vpop.xlane.xlu0 %2815
  %v2817 = vsel %vm1029, %v2690, 0.0
  %v2818 = vadd.f32 %v2689, %v2817
  %2819 = vadd.xlane.f32.xlu0 %v2818
  %v2820 = vpop.xlane.xlu0 %2819
  %v2821 = vsel %vm1029, %v2692, 0.0
  %v2822 = vadd.f32 %v2691, %v2821
  %2823 = vadd.xlane.f32.xlu0 %v2822
  %v2824 = vpop.xlane.xlu0 %2823
  %v2825 = vsel %vm1029, %v2694, 0.0
  %v2826 = vadd.f32 %v2693, %v2825
  %2827 = vadd.xlane.f32.xlu0 %v2826
  %v2828 = vpop.xlane.xlu0 %2827
  %v2829 = vsel %vm1029, %v2696, 0.0
  %v2830 = vadd.f32 %v2695, %v2829
  %2831 = vadd.xlane.f32.xlu0 %v2830
  %v2832 = vpop.xlane.xlu0 %2831
  %v2833 = vsel %vm1029, %v2698, 0.0
  %v2834 = vadd.f32 %v2697, %v2833
  %2835 = vadd.xlane.f32.xlu0 %v2834
  %v2836 = vpop.xlane.xlu0 %2835
  %v2837 = vsel %vm1029, %v2700, 0.0
  %v2838 = vadd.f32 %v2699, %v2837
  %2839 = vadd.xlane.f32.xlu0 %v2838
  %v2840 = vpop.xlane.xlu0 %2839
  %v2841 = vsel %vm1029, %v2702, 0.0
  %v2842 = vadd.f32 %v2701, %v2841
  %2843 = vadd.xlane.f32.xlu0 %v2842
  %v2844 = vpop.xlane.xlu0 %2843
  %v2845 = vsel %vm1029, %v2704, 0.0
  %v2846 = vadd.f32 %v2703, %v2845
  %2847 = vadd.xlane.f32.xlu0 %v2846
  %v2848 = vpop.xlane.xlu0 %2847
  %v2849 = vsel %vm1029, %v2706, 0.0
  %v2850 = vadd.f32 %v2705, %v2849
  %2851 = vadd.xlane.f32.xlu0 %v2850
  %v2852 = vpop.xlane.xlu0 %2851
  %v2853 = vsel %vm1029, %v2708, 0.0
  %v2854 = vadd.f32 %v2707, %v2853
  %2855 = vadd.xlane.f32.xlu0 %v2854
  %v2856 = vpop.xlane.xlu0 %2855
  %v2857 = vsel %vm1029, %v2710, 0.0
  %v2858 = vadd.f32 %v2709, %v2857
  %2859 = vadd.xlane.f32.xlu0 %v2858
  %v2860 = vpop.xlane.xlu0 %2859
  %v2861 = vsel %vm1029, %v2712, 0.0
  %v2862 = vadd.f32 %v2711, %v2861
  %2863 = vadd.xlane.f32.xlu0 %v2862
  %v2864 = vpop.xlane.xlu0 %2863
  %v2865 = vsel %vm1029, %v2714, 0.0
  %v2866 = vadd.f32 %v2713, %v2865
  %2867 = vadd.xlane.f32.xlu0 %v2866
  %v2868 = vpop.xlane.xlu0 %2867
  %v2869 = vsel %vm1029, %v2716, 0.0
  %v2870 = vadd.f32 %v2715, %v2869
  %2871 = vadd.xlane.f32.xlu0 %v2870
  %v2872 = vpop.xlane.xlu0 %2871
  %v2873 = vsel %vm1029, %v2718, 0.0
  %v2874 = vadd.f32 %v2717, %v2873
  %2875 = vadd.xlane.f32.xlu0 %v2874
  %v2876 = vpop.xlane.xlu0 %2875
  %v2877 = vsel %vm1029, %v2720, 0.0
  %v2878 = vadd.f32 %v2719, %v2877
  %2879 = vadd.xlane.f32.xlu0 %v2878
  %v2880 = vpop.xlane.xlu0 %2879
  %v2881 = vadd.f32 %v1549, %v2724
  %v2882 = vadd.f32 %v1550, %v2728
  %v2883 = vadd.f32 %v1551, %v2732
  %v2884 = vadd.f32 %v1552, %v2736
  %v2885 = vadd.f32 %v1553, %v2740
  %v2886 = vadd.f32 %v1554, %v2744
  %v2887 = vadd.f32 %v1555, %v2748
  %v2888 = vadd.f32 %v1556, %v2752
  %v2889 = vadd.f32 %v1557, %v2756
  %v2890 = vadd.f32 %v1558, %v2760
  %v2891 = vadd.f32 %v1559, %v2764
  %v2892 = vadd.f32 %v1560, %v2768
  %v2893 = vadd.f32 %v1561, %v2772
  %v2894 = vadd.f32 %v1562, %v2776
  %v2895 = vadd.f32 %v1563, %v2780
  %v2896 = vadd.f32 %v1564, %v2784
  %v2897 = vadd.f32 %v1565, %v2788
  %v2898 = vadd.f32 %v1566, %v2792
  %v2899 = vadd.f32 %v1567, %v2796
  %v2900 = vadd.f32 %v1568, %v2800
  %v2901 = vadd.f32 %v1569, %v2804
  %v2902 = vadd.f32 %v1570, %v2808
  %v2903 = vadd.f32 %v1571, %v2812
  %v2904 = vadd.f32 %v1572, %v2816
  %v2905 = vadd.f32 %v1573, %v2820
  %v2906 = vadd.f32 %v1574, %v2824
  %v2907 = vadd.f32 %v1575, %v2828
  %v2908 = vadd.f32 %v1576, %v2832
  %v2909 = vadd.f32 %v1577, %v2836
  %v2910 = vadd.f32 %v1578, %v2840
  %v2911 = vadd.f32 %v1579, %v2844
  %v2912 = vadd.f32 %v1580, %v2848
  %v2913 = vadd.f32 %v1581, %v2852
  %v2914 = vadd.f32 %v1582, %v2856
  %v2915 = vadd.f32 %v1583, %v2860
  %v2916 = vadd.f32 %v1584, %v2864
  %v2917 = vadd.f32 %v1585, %v2868
  %v2918 = vadd.f32 %v1586, %v2872
  %v2919 = vadd.f32 %v1587, %v2876
  %v2920 = vadd.f32 %v1588, %v2880
  %v2921 = vmul.f32 %v2601, 0.0025510204
  %v2922 = vmul.f32 %v2602, 0.0025510204
  %v2923 = vmul.f32 %v2603, 0.0025510204
  %v2924 = vmul.f32 %v2604, 0.0025510204
  %v2925 = vmul.f32 %v2605, 0.0025510204
  %v2926 = vmul.f32 %v2606, 0.0025510204
  %v2927 = vmul.f32 %v2607, 0.0025510204
  %v2928 = vmul.f32 %v2608, 0.0025510204
  %v2929 = vmul.f32 %v2609, 0.0025510204
  %v2930 = vmul.f32 %v2610, 0.0025510204
  %v2931 = vmul.f32 %v2611, 0.0025510204
  %v2932 = vmul.f32 %v2612, 0.0025510204
  %v2933 = vmul.f32 %v2613, 0.0025510204
  %v2934 = vmul.f32 %v2614, 0.0025510204
  %v2935 = vmul.f32 %v2615, 0.0025510204
  %v2936 = vmul.f32 %v2616, 0.0025510204
  %v2937 = vmul.f32 %v2617, 0.0025510204
  %v2938 = vmul.f32 %v2618, 0.0025510204
  %v2939 = vmul.f32 %v2619, 0.0025510204
  %v2940 = vmul.f32 %v2620, 0.0025510204
  %v2941 = vmul.f32 %v2621, 0.0025510204
  %v2942 = vmul.f32 %v2622, 0.0025510204
  %v2943 = vmul.f32 %v2623, 0.0025510204
  %v2944 = vmul.f32 %v2624, 0.0025510204
  %v2945 = vmul.f32 %v2625, 0.0025510204
  %v2946 = vmul.f32 %v2626, 0.0025510204
  %v2947 = vmul.f32 %v2627, 0.0025510204
  %v2948 = vmul.f32 %v2628, 0.0025510204
  %v2949 = vmul.f32 %v2629, 0.0025510204
  %v2950 = vmul.f32 %v2630, 0.0025510204
  %v2951 = vmul.f32 %v2631, 0.0025510204
  %v2952 = vmul.f32 %v2632, 0.0025510204
  %v2953 = vmul.f32 %v2633, 0.0025510204
  %v2954 = vmul.f32 %v2634, 0.0025510204
  %v2955 = vmul.f32 %v2635, 0.0025510204
  %v2956 = vmul.f32 %v2636, 0.0025510204
  %v2957 = vmul.f32 %v2637, 0.0025510204
  %v2958 = vmul.f32 %v2638, 0.0025510204
  %v2959 = vmul.f32 %v2639, 0.0025510204
  %v2960 = vmul.f32 %v2640, 0.0025510204
  %v2961 = vmul.f32 %v2881, 0.0025510204
  %v2962 = vmul.f32 %v2882, 0.0025510204
  %v2963 = vmul.f32 %v2883, 0.0025510204
  %v2964 = vmul.f32 %v2884, 0.0025510204
  %v2965 = vmul.f32 %v2885, 0.0025510204
  %v2966 = vmul.f32 %v2886, 0.0025510204
  %v2967 = vmul.f32 %v2887, 0.0025510204
  %v2968 = vmul.f32 %v2888, 0.0025510204
  %v2969 = vmul.f32 %v2889, 0.0025510204
  %v2970 = vmul.f32 %v2890, 0.0025510204
  %v2971 = vmul.f32 %v2891, 0.0025510204
  %v2972 = vmul.f32 %v2892, 0.0025510204
  %v2973 = vmul.f32 %v2893, 0.0025510204
  %v2974 = vmul.f32 %v2894, 0.0025510204
  %v2975 = vmul.f32 %v2895, 0.0025510204
  %v2976 = vmul.f32 %v2896, 0.0025510204
  %v2977 = vmul.f32 %v2897, 0.0025510204
  %v2978 = vmul.f32 %v2898, 0.0025510204
  %v2979 = vmul.f32 %v2899, 0.0025510204
  %v2980 = vmul.f32 %v2900, 0.0025510204
  %v2981 = vmul.f32 %v2901, 0.0025510204
  %v2982 = vmul.f32 %v2902, 0.0025510204
  %v2983 = vmul.f32 %v2903, 0.0025510204
  %v2984 = vmul.f32 %v2904, 0.0025510204
  %v2985 = vmul.f32 %v2905, 0.0025510204
  %v2986 = vmul.f32 %v2906, 0.0025510204
  %v2987 = vmul.f32 %v2907, 0.0025510204
  %v2988 = vmul.f32 %v2908, 0.0025510204
  %v2989 = vmul.f32 %v2909, 0.0025510204
  %v2990 = vmul.f32 %v2910, 0.0025510204
  %v2991 = vmul.f32 %v2911, 0.0025510204
  %v2992 = vmul.f32 %v2912, 0.0025510204
  %v2993 = vmul.f32 %v2913, 0.0025510204
  %v2994 = vmul.f32 %v2914, 0.0025510204
  %v2995 = vmul.f32 %v2915, 0.0025510204
  %v2996 = vmul.f32 %v2916, 0.0025510204
  %v2997 = vmul.f32 %v2917, 0.0025510204
  %v2998 = vmul.f32 %v2918, 0.0025510204
  %v2999 = vmul.f32 %v2919, 0.0025510204
  %v3000 = vmul.f32 %v2920, 0.0025510204
  %v3001 = vmul.f32 %v2921, %v2921
  %v3002 = vmul.f32 %v2922, %v2922
  %v3003 = vmul.f32 %v2923, %v2923
  %v3004 = vmul.f32 %v2924, %v2924
  %v3005 = vmul.f32 %v2925, %v2925
  %v3006 = vmul.f32 %v2926, %v2926
  %v3007 = vmul.f32 %v2927, %v2927
  %v3008 = vmul.f32 %v2928, %v2928
  %v3009 = vmul.f32 %v2929, %v2929
  %v3010 = vmul.f32 %v2930, %v2930
  %v3011 = vmul.f32 %v2931, %v2931
  %v3012 = vmul.f32 %v2932, %v2932
  %v3013 = vmul.f32 %v2933, %v2933
  %v3014 = vmul.f32 %v2934, %v2934
  %v3015 = vmul.f32 %v2935, %v2935
  %v3016 = vmul.f32 %v2936, %v2936
  %v3017 = vmul.f32 %v2937, %v2937
  %v3018 = vmul.f32 %v2938, %v2938
  %v3019 = vmul.f32 %v2939, %v2939
  %v3020 = vmul.f32 %v2940, %v2940
  %v3021 = vmul.f32 %v2941, %v2941
  %v3022 = vmul.f32 %v2942, %v2942
  %v3023 = vmul.f32 %v2943, %v2943
  %v3024 = vmul.f32 %v2944, %v2944
  %v3025 = vmul.f32 %v2945, %v2945
  %v3026 = vmul.f32 %v2946, %v2946
  %v3027 = vmul.f32 %v2947, %v2947
  %v3028 = vmul.f32 %v2948, %v2948
  %v3029 = vmul.f32 %v2949, %v2949
  %v3030 = vmul.f32 %v2950, %v2950
  %v3031 = vmul.f32 %v2951, %v2951
  %v3032 = vmul.f32 %v2952, %v2952
  %v3033 = vmul.f32 %v2953, %v2953
  %v3034 = vmul.f32 %v2954, %v2954
  %v3035 = vmul.f32 %v2955, %v2955
  %v3036 = vmul.f32 %v2956, %v2956
  %v3037 = vmul.f32 %v2957, %v2957
  %v3038 = vmul.f32 %v2958, %v2958
  %v3039 = vmul.f32 %v2959, %v2959
  %v3040 = vmul.f32 %v2960, %v2960
  %v3041 = vsub.f32 %v2961, %v3001
  %v3042 = vsub.f32 %v2962, %v3002
  %v3043 = vsub.f32 %v2963, %v3003
  %v3044 = vsub.f32 %v2964, %v3004
  %v3045 = vsub.f32 %v2965, %v3005
  %v3046 = vsub.f32 %v2966, %v3006
  %v3047 = vsub.f32 %v2967, %v3007
  %v3048 = vsub.f32 %v2968, %v3008
  %v3049 = vsub.f32 %v2969, %v3009
  %v3050 = vsub.f32 %v2970, %v3010
  %v3051 = vsub.f32 %v2971, %v3011
  %v3052 = vsub.f32 %v2972, %v3012
  %v3053 = vsub.f32 %v2973, %v3013
  %v3054 = vsub.f32 %v2974, %v3014
  %v3055 = vsub.f32 %v2975, %v3015
  %v3056 = vsub.f32 %v2976, %v3016
  %v3057 = vsub.f32 %v2977, %v3017
  %v3058 = vsub.f32 %v2978, %v3018
  %v3059 = vsub.f32 %v2979, %v3019
  %v3060 = vsub.f32 %v2980, %v3020
  %v3061 = vsub.f32 %v2981, %v3021
  %v3062 = vsub.f32 %v2982, %v3022
  %v3063 = vsub.f32 %v2983, %v3023
  %v3064 = vsub.f32 %v2984, %v3024
  %v3065 = vsub.f32 %v2985, %v3025
  %v3066 = vsub.f32 %v2986, %v3026
  %v3067 = vsub.f32 %v2987, %v3027
  %v3068 = vsub.f32 %v2988, %v3028
  %v3069 = vsub.f32 %v2989, %v3029
  %v3070 = vsub.f32 %v2990, %v3030
  %v3071 = vsub.f32 %v2991, %v3031
  %v3072 = vsub.f32 %v2992, %v3032
  %v3073 = vsub.f32 %v2993, %v3033
  %v3074 = vsub.f32 %v2994, %v3034
  %v3075 = vsub.f32 %v2995, %v3035
  %v3076 = vsub.f32 %v2996, %v3036
  %v3077 = vsub.f32 %v2997, %v3037
  %v3078 = vsub.f32 %v2998, %v3038
  %v3079 = vsub.f32 %v2999, %v3039
  %v3080 = vsub.f32 %v3000, %v3040
  %v3081 = vadd.f32 %v3041, 1e-05
  %v3082 = vadd.f32 %v3042, 1e-05
  %v3083 = vadd.f32 %v3043, 1e-05
  %v3084 = vadd.f32 %v3044, 1e-05
  %v3085 = vadd.f32 %v3045, 1e-05
  %v3086 = vadd.f32 %v3046, 1e-05
  %v3087 = vadd.f32 %v3047, 1e-05
  %v3088 = vadd.f32 %v3048, 1e-05
  %v3089 = vadd.f32 %v3049, 1e-05
  %v3090 = vadd.f32 %v3050, 1e-05
  %v3091 = vadd.f32 %v3051, 1e-05
  %v3092 = vadd.f32 %v3052, 1e-05
  %v3093 = vadd.f32 %v3053, 1e-05
  %v3094 = vadd.f32 %v3054, 1e-05
  %v3095 = vadd.f32 %v3055, 1e-05
  %v3096 = vadd.f32 %v3056, 1e-05
  %v3097 = vadd.f32 %v3057, 1e-05
  %v3098 = vadd.f32 %v3058, 1e-05
  %v3099 = vadd.f32 %v3059, 1e-05
  %v3100 = vadd.f32 %v3060, 1e-05
  %v3101 = vadd.f32 %v3061, 1e-05
  %v3102 = vadd.f32 %v3062, 1e-05
  %v3103 = vadd.f32 %v3063, 1e-05
  %v3104 = vadd.f32 %v3064, 1e-05
  %v3105 = vadd.f32 %v3065, 1e-05
  %v3106 = vadd.f32 %v3066, 1e-05
  %v3107 = vadd.f32 %v3067, 1e-05
  %v3108 = vadd.f32 %v3068, 1e-05
  %v3109 = vadd.f32 %v3069, 1e-05
  %v3110 = vadd.f32 %v3070, 1e-05
  %v3111 = vadd.f32 %v3071, 1e-05
  %v3112 = vadd.f32 %v3072, 1e-05
  %v3113 = vadd.f32 %v3073, 1e-05
  %v3114 = vadd.f32 %v3074, 1e-05
  %v3115 = vadd.f32 %v3075, 1e-05
  %v3116 = vadd.f32 %v3076, 1e-05
  %v3117 = vadd.f32 %v3077, 1e-05
  %v3118 = vadd.f32 %v3078, 1e-05
  %v3119 = vadd.f32 %v3079, 1e-05
  %v3120 = vadd.f32 %v3080, 1e-05
  %v3121 = vrsqrt.pop %v3081
  %v3122 = vrsqrt.pop %v3082
  %v3123 = vrsqrt.pop %v3083
  %v3124 = vrsqrt.pop %v3084
  %v3125 = vrsqrt.pop %v3085
  %v3126 = vrsqrt.pop %v3086
  %v3127 = vrsqrt.pop %v3087
  %v3128 = vrsqrt.pop %v3088
  %v3129 = vrsqrt.pop %v3089
  %v3130 = vrsqrt.pop %v3090
  %v3131 = vrsqrt.pop %v3091
  %v3132 = vrsqrt.pop %v3092
  %v3133 = vrsqrt.pop %v3093
  %v3134 = vrsqrt.pop %v3094
  %v3135 = vrsqrt.pop %v3095
  %v3136 = vrsqrt.pop %v3096
  %v3137 = vrsqrt.pop %v3097
  %v3138 = vrsqrt.pop %v3098
  %v3139 = vrsqrt.pop %v3099
  %v3140 = vrsqrt.pop %v3100
  %v3141 = vrsqrt.pop %v3101
  %v3142 = vrsqrt.pop %v3102
  %v3143 = vrsqrt.pop %v3103
  %v3144 = vrsqrt.pop %v3104
  %v3145 = vrsqrt.pop %v3105
  %v3146 = vrsqrt.pop %v3106
  %v3147 = vrsqrt.pop %v3107
  %v3148 = vrsqrt.pop %v3108
  %v3149 = vrsqrt.pop %v3109
  %v3150 = vrsqrt.pop %v3110
  %v3151 = vrsqrt.pop %v3111
  %v3152 = vrsqrt.pop %v3112
  %v3153 = vrsqrt.pop %v3113
  %v3154 = vrsqrt.pop %v3114
  %v3155 = vrsqrt.pop %v3115
  %v3156 = vrsqrt.pop %v3116
  %v3157 = vrsqrt.pop %v3117
  %v3158 = vrsqrt.pop %v3118
  %v3159 = vrsqrt.pop %v3119
  %v3160 = vrsqrt.pop %v3120
  %v3161 = vld [vmem:[%s2] sm:$0xff]
  %v3162 = vld [vmem:[%s2 + $0x8] sm:$0xff]
  %v3163 = vld [vmem:[%s2 + $0x10] sm:$0xff]
  %v3164 = vld [vmem:[%s2 + $0x18] sm:$0xff]
  %v3165 = vld [vmem:[%s2 + $0x20] sm:$0xff]
  %v3166 = vld [vmem:[%s2 + $0x28] sm:$0xff]
  %v3167 = vld [vmem:[%s2 + $0x30] sm:$0xff]
  %v3168 = vld [vmem:[%s2 + $0x38] sm:$0xff]
  %v3169 = vld [vmem:[%s2 + $0x40] sm:$0xff]
  %v3170 = vld [vmem:[%s2 + $0x48] sm:$0xff]
  %v3171 = vld [vmem:[%s2 + $0x50] sm:$0xff]
  %v3172 = vld [vmem:[%s2 + $0x58] sm:$0xff]
  %v3173 = vld [vmem:[%s2 + $0x60] sm:$0xff]
  %v3174 = vld [vmem:[%s2 + $0x68] sm:$0xff]
  %v3175 = vld [vmem:[%s2 + $0x70] sm:$0xff]
  %v3176 = vld [vmem:[%s2 + $0x78] sm:$0xff]
  %v3177 = vld [vmem:[%s2 + $0x80] sm:$0xff]
  %v3178 = vld [vmem:[%s2 + $0x88] sm:$0xff]
  %v3179 = vld [vmem:[%s2 + $0x90] sm:$0xff]
  %v3180 = vld [vmem:[%s2 + $0x98] sm:$0xff]
  %v3181 = vld [vmem:[%s2 + $0xa0] sm:$0xff]
  %v3182 = vld [vmem:[%s2 + $0xa8] sm:$0xff]
  %v3183 = vld [vmem:[%s2 + $0xb0] sm:$0xff]
  %v3184 = vld [vmem:[%s2 + $0xb8] sm:$0xff]
  %v3185 = vld [vmem:[%s2 + $0xc0] sm:$0xff]
  %v3186 = vld [vmem:[%s2 + $0xc8] sm:$0xff]
  %v3187 = vld [vmem:[%s2 + $0xd0] sm:$0xff]
  %v3188 = vld [vmem:[%s2 + $0xd8] sm:$0xff]
  %v3189 = vld [vmem:[%s2 + $0xe0] sm:$0xff]
  %v3190 = vld [vmem:[%s2 + $0xe8] sm:$0xff]
  %v3191 = vld [vmem:[%s2 + $0xf0] sm:$0xff]
  %v3192 = vld [vmem:[%s2 + $0xf8] sm:$0xff]
  %v3193 = vld [vmem:[%s2 + $0x100] sm:$0xff]
  %v3194 = vld [vmem:[%s2 + $0x108] sm:$0xff]
  %v3195 = vld [vmem:[%s2 + $0x110] sm:$0xff]
  %v3196 = vld [vmem:[%s2 + $0x118] sm:$0xff]
  %v3197 = vld [vmem:[%s2 + $0x120] sm:$0xff]
  %v3198 = vld [vmem:[%s2 + $0x128] sm:$0xff]
  %v3199 = vld [vmem:[%s2 + $0x130] sm:$0xff]
  %v3200 = vld [vmem:[%s2 + $0x138] sm:$0xff]
  %v3201 = vmul.f32 %v3161, %v3121
  %v3202 = vmul.f32 %v3162, %v3122
  %v3203 = vmul.f32 %v3163, %v3123
  %v3204 = vmul.f32 %v3164, %v3124
  %v3205 = vmul.f32 %v3165, %v3125
  %v3206 = vmul.f32 %v3166, %v3126
  %v3207 = vmul.f32 %v3167, %v3127
  %v3208 = vmul.f32 %v3168, %v3128
  %v3209 = vmul.f32 %v3169, %v3129
  %v3210 = vmul.f32 %v3170, %v3130
  %v3211 = vmul.f32 %v3171, %v3131
  %v3212 = vmul.f32 %v3172, %v3132
  %v3213 = vmul.f32 %v3173, %v3133
  %v3214 = vmul.f32 %v3174, %v3134
  %v3215 = vmul.f32 %v3175, %v3135
  %v3216 = vmul.f32 %v3176, %v3136
  %v3217 = vmul.f32 %v3177, %v3137
  %v3218 = vmul.f32 %v3178, %v3138
  %v3219 = vmul.f32 %v3179, %v3139
  %v3220 = vmul.f32 %v3180, %v3140
  %v3221 = vmul.f32 %v3181, %v3141
  %v3222 = vmul.f32 %v3182, %v3142
  %v3223 = vmul.f32 %v3183, %v3143
  %v3224 = vmul.f32 %v3184, %v3144
  %v3225 = vmul.f32 %v3185, %v3145
  %v3226 = vmul.f32 %v3186, %v3146
  %v3227 = vmul.f32 %v3187, %v3147
  %v3228 = vmul.f32 %v3188, %v3148
  %v3229 = vmul.f32 %v3189, %v3149
  %v3230 = vmul.f32 %v3190, %v3150
  %v3231 = vmul.f32 %v3191, %v3151
  %v3232 = vmul.f32 %v3192, %v3152
  %v3233 = vmul.f32 %v3193, %v3153
  %v3234 = vmul.f32 %v3194, %v3154
  %v3235 = vmul.f32 %v3195, %v3155
  %v3236 = vmul.f32 %v3196, %v3156
  %v3237 = vmul.f32 %v3197, %v3157
  %v3238 = vmul.f32 %v3198, %v3158
  %v3239 = vmul.f32 %v3199, %v3159
  %v3240 = vmul.f32 %v3200, %v3160
  %v3241 = vld [vmem:[%s3] sm:$0xff]
  %v3242 = vld [vmem:[%s3 + $0x8] sm:$0xff]
  %v3243 = vld [vmem:[%s3 + $0x10] sm:$0xff]
  %v3244 = vld [vmem:[%s3 + $0x18] sm:$0xff]
  %v3245 = vld [vmem:[%s3 + $0x20] sm:$0xff]
  %v3246 = vld [vmem:[%s3 + $0x28] sm:$0xff]
  %v3247 = vld [vmem:[%s3 + $0x30] sm:$0xff]
  %v3248 = vld [vmem:[%s3 + $0x38] sm:$0xff]
  %v3249 = vld [vmem:[%s3 + $0x40] sm:$0xff]
  %v3250 = vld [vmem:[%s3 + $0x48] sm:$0xff]
  %v3251 = vld [vmem:[%s3 + $0x50] sm:$0xff]
  %v3252 = vld [vmem:[%s3 + $0x58] sm:$0xff]
  %v3253 = vld [vmem:[%s3 + $0x60] sm:$0xff]
  %v3254 = vld [vmem:[%s3 + $0x68] sm:$0xff]
  %v3255 = vld [vmem:[%s3 + $0x70] sm:$0xff]
  %v3256 = vld [vmem:[%s3 + $0x78] sm:$0xff]
  %v3257 = vld [vmem:[%s3 + $0x80] sm:$0xff]
  %v3258 = vld [vmem:[%s3 + $0x88] sm:$0xff]
  %v3259 = vld [vmem:[%s3 + $0x90] sm:$0xff]
  %v3260 = vld [vmem:[%s3 + $0x98] sm:$0xff]
  %v3261 = vld [vmem:[%s3 + $0xa0] sm:$0xff]
  %v3262 = vld [vmem:[%s3 + $0xa8] sm:$0xff]
  %v3263 = vld [vmem:[%s3 + $0xb0] sm:$0xff]
  %v3264 = vld [vmem:[%s3 + $0xb8] sm:$0xff]
  %v3265 = vld [vmem:[%s3 + $0xc0] sm:$0xff]
  %v3266 = vld [vmem:[%s3 + $0xc8] sm:$0xff]
  %v3267 = vld [vmem:[%s3 + $0xd0] sm:$0xff]
  %v3268 = vld [vmem:[%s3 + $0xd8] sm:$0xff]
  %v3269 = vld [vmem:[%s3 + $0xe0] sm:$0xff]
  %v3270 = vld [vmem:[%s3 + $0xe8] sm:$0xff]
  %v3271 = vld [vmem:[%s3 + $0xf0] sm:$0xff]
  %v3272 = vld [vmem:[%s3 + $0xf8] sm:$0xff]
  %v3273 = vld [vmem:[%s3 + $0x100] sm:$0xff]
  %v3274 = vld [vmem:[%s3 + $0x108] sm:$0xff]
  %v3275 = vld [vmem:[%s3 + $0x110] sm:$0xff]
  %v3276 = vld [vmem:[%s3 + $0x118] sm:$0xff]
  %v3277 = vld [vmem:[%s3 + $0x120] sm:$0xff]
  %v3278 = vld [vmem:[%s3 + $0x128] sm:$0xff]
  %v3279 = vld [vmem:[%s3 + $0x130] sm:$0xff]
  %v3280 = vld [vmem:[%s3 + $0x138] sm:$0xff]
  %v3281 = vmul.f32 %v2921, %v3201
  %v3282 = vmul.f32 %v2922, %v3202
  %v3283 = vmul.f32 %v2923, %v3203
  %v3284 = vmul.f32 %v2924, %v3204
  %v3285 = vmul.f32 %v2925, %v3205
  %v3286 = vmul.f32 %v2926, %v3206
  %v3287 = vmul.f32 %v2927, %v3207
  %v3288 = vmul.f32 %v2928, %v3208
  %v3289 = vmul.f32 %v2929, %v3209
  %v3290 = vmul.f32 %v2930, %v3210
  %v3291 = vmul.f32 %v2931, %v3211
  %v3292 = vmul.f32 %v2932, %v3212
  %v3293 = vmul.f32 %v2933, %v3213
  %v3294 = vmul.f32 %v2934, %v3214
  %v3295 = vmul.f32 %v2935, %v3215
  %v3296 = vmul.f32 %v2936, %v3216
  %v3297 = vmul.f32 %v2937, %v3217
  %v3298 = vmul.f32 %v2938, %v3218
  %v3299 = vmul.f32 %v2939, %v3219
  %v3300 = vmul.f32 %v2940, %v3220
  %v3301 = vmul.f32 %v2941, %v3221
  %v3302 = vmul.f32 %v2942, %v3222
  %v3303 = vmul.f32 %v2943, %v3223
  %v3304 = vmul.f32 %v2944, %v3224
  %v3305 = vmul.f32 %v2945, %v3225
  %v3306 = vmul.f32 %v2946, %v3226
  %v3307 = vmul.f32 %v2947, %v3227
  %v3308 = vmul.f32 %v2948, %v3228
  %v3309 = vmul.f32 %v2949, %v3229
  %v3310 = vmul.f32 %v2950, %v3230
  %v3311 = vmul.f32 %v2951, %v3231
  %v3312 = vmul.f32 %v2952, %v3232
  %v3313 = vmul.f32 %v2953, %v3233
  %v3314 = vmul.f32 %v2954, %v3234
  %v3315 = vmul.f32 %v2955, %v3235
  %v3316 = vmul.f32 %v2956, %v3236
  %v3317 = vmul.f32 %v2957, %v3237
  %v3318 = vmul.f32 %v2958, %v3238
  %v3319 = vmul.f32 %v2959, %v3239
  %v3320 = vmul.f32 %v2960, %v3240
  %v3321 = vsub.f32 %v3241, %v3281
  %v3322 = vsub.f32 %v3242, %v3282
  %v3323 = vsub.f32 %v3243, %v3283
  %v3324 = vsub.f32 %v3244, %v3284
  %v3325 = vsub.f32 %v3245, %v3285
  %v3326 = vsub.f32 %v3246, %v3286
  %v3327 = vsub.f32 %v3247, %v3287
  %v3328 = vsub.f32 %v3248, %v3288
  %v3329 = vsub.f32 %v3249, %v3289
  %v3330 = vsub.f32 %v3250, %v3290
  %v3331 = vsub.f32 %v3251, %v3291
  %v3332 = vsub.f32 %v3252, %v3292
  %v3333 = vsub.f32 %v3253, %v3293
  %v3334 = vsub.f32 %v3254, %v3294
  %v3335 = vsub.f32 %v3255, %v3295
  %v3336 = vsub.f32 %v3256, %v3296
  %v3337 = vsub.f32 %v3257, %v3297
  %v3338 = vsub.f32 %v3258, %v3298
  %v3339 = vsub.f32 %v3259, %v3299
  %v3340 = vsub.f32 %v3260, %v3300
  %v3341 = vsub.f32 %v3261, %v3301
  %v3342 = vsub.f32 %v3262, %v3302
  %v3343 = vsub.f32 %v3263, %v3303
  %v3344 = vsub.f32 %v3264, %v3304
  %v3345 = vsub.f32 %v3265, %v3305
  %v3346 = vsub.f32 %v3266, %v3306
  %v3347 = vsub.f32 %v3267, %v3307
  %v3348 = vsub.f32 %v3268, %v3308
  %v3349 = vsub.f32 %v3269, %v3309
  %v3350 = vsub.f32 %v3270, %v3310
  %v3351 = vsub.f32 %v3271, %v3311
  %v3352 = vsub.f32 %v3272, %v3312
  %v3353 = vsub.f32 %v3273, %v3313
  %v3354 = vsub.f32 %v3274, %v3314
  %v3355 = vsub.f32 %v3275, %v3315
  %v3356 = vsub.f32 %v3276, %v3316
  %v3357 = vsub.f32 %v3277, %v3317
  %v3358 = vsub.f32 %v3278, %v3318
  %v3359 = vsub.f32 %v3279, %v3319
  %v3360 = vsub.f32 %v3280, %v3320
  %v3361 = vld [vmem:[%s4] sm:$0xff]
  %v3362 = vld [vmem:[%s4 + $0x8] sm:$0xff]
  %v3363 = vld [vmem:[%s4 + $0x10] sm:$0xff]
  %v3364 = vld [vmem:[%s4 + $0x18] sm:$0xff]
  %v3365 = vld [vmem:[%s4 + $0x20] sm:$0xff]
  %v3366 = vld [vmem:[%s4 + $0x28] sm:$0xff]
  %v3367 = vld [vmem:[%s4 + $0x30] sm:$0xff]
  %v3368 = vld [vmem:[%s4 + $0x38] sm:$0xff]
  %v3369 = vld [vmem:[%s4 + $0x40] sm:$0xff]
  %v3370 = vld [vmem:[%s4 + $0x48] sm:$0xff]
  %v3371 = vld [vmem:[%s4 + $0x50] sm:$0xff]
  %v3372 = vld [vmem:[%s4 + $0x58] sm:$0xff]
  %v3373 = vld [vmem:[%s4 + $0x60] sm:$0xff]
  %v3374 = vld [vmem:[%s4 + $0x68] sm:$0xff]
  %v3375 = vld [vmem:[%s4 + $0x70] sm:$0xff]
  %v3376 = vld [vmem:[%s4 + $0x78] sm:$0xff]
  %v3377 = vld [vmem:[%s4 + $0x80] sm:$0xff]
  %v3378 = vld [vmem:[%s4 + $0x88] sm:$0xff]
  %v3379 = vld [vmem:[%s4 + $0x90] sm:$0xff]
  %v3380 = vld [vmem:[%s4 + $0x98] sm:$0xff]
  %v3381 = vld [vmem:[%s4 + $0xa0] sm:$0xff]
  %v3382 = vld [vmem:[%s4 + $0xa8] sm:$0xff]
  %v3383 = vld [vmem:[%s4 + $0xb0] sm:$0xff]
  %v3384 = vld [vmem:[%s4 + $0xb8] sm:$0xff]
  %v3385 = vld [vmem:[%s4 + $0xc0] sm:$0xff]
  %v3386 = vld [vmem:[%s4 + $0xc8] sm:$0xff]
  %v3387 = vld [vmem:[%s4 + $0xd0] sm:$0xff]
  %v3388 = vld [vmem:[%s4 + $0xd8] sm:$0xff]
  %v3389 = vld [vmem:[%s4 + $0xe0] sm:$0xff]
  %v3390 = vld [vmem:[%s4 + $0xe8] sm:$0xff]
  %v3391 = vld [vmem:[%s4 + $0xf0] sm:$0xff]
  %v3392 = vld [vmem:[%s4 + $0xf8] sm:$0xff]
  %v3393 = vld [vmem:[%s4 + $0x100] sm:$0xff]
  %v3394 = vld [vmem:[%s4 + $0x108] sm:$0xff]
  %v3395 = vld [vmem:[%s4 + $0x110] sm:$0xff]
  %v3396 = vld [vmem:[%s4 + $0x118] sm:$0xff]
  %v3397 = vld [vmem:[%s4 + $0x120] sm:$0xff]
  %v3398 = vld [vmem:[%s4 + $0x128] sm:$0xff]
  %v3399 = vld [vmem:[%s4 + $0x130] sm:$0xff]
  %v3400 = vld [vmem:[%s4 + $0x138] sm:$0xff]
  %v3401 = vld [vmem:[%s4 + $0x140] sm:$0xff]
  %v3402 = vld [vmem:[%s4 + $0x148] sm:$0xff]
  %v3403 = vld [vmem:[%s4 + $0x150] sm:$0xff]
  %v3404 = vld [vmem:[%s4 + $0x158] sm:$0xff]
  %v3405 = vld [vmem:[%s4 + $0x160] sm:$0xff]
  %v3406 = vld [vmem:[%s4 + $0x168] sm:$0xff]
  %v3407 = vld [vmem:[%s4 + $0x170] sm:$0xff]
  %v3408 = vld [vmem:[%s4 + $0x178] sm:$0xff]
  %v3409 = vld [vmem:[%s4 + $0x180] sm:$0xff]
  %v3410 = vld [vmem:[%s4 + $0x188] sm:$0xff]
  %v3411 = vld [vmem:[%s4 + $0x190] sm:$0xff]
  %v3412 = vld [vmem:[%s4 + $0x198] sm:$0xff]
  %v3413 = vld [vmem:[%s4 + $0x1a0] sm:$0xff]
  %v3414 = vld [vmem:[%s4 + $0x1a8] sm:$0xff]
  %v3415 = vld [vmem:[%s4 + $0x1b0] sm:$0xff]
  %v3416 = vld [vmem:[%s4 + $0x1b8] sm:$0xff]
  %v3417 = vld [vmem:[%s4 + $0x1c0] sm:$0xff]
  %v3418 = vld [vmem:[%s4 + $0x1c8] sm:$0xff]
  %v3419 = vld [vmem:[%s4 + $0x1d0] sm:$0xff]
  %v3420 = vld [vmem:[%s4 + $0x1d8] sm:$0xff]
  %v3421 = vld [vmem:[%s4 + $0x1e0] sm:$0xff]
  %v3422 = vld [vmem:[%s4 + $0x1e8] sm:$0xff]
  %v3423 = vld [vmem:[%s4 + $0x1f0] sm:$0xff]
  %v3424 = vld [vmem:[%s4 + $0x1f8] sm:$0xff]
  %v3425 = vld [vmem:[%s4 + $0x200] sm:$0xff]
  %v3426 = vld [vmem:[%s4 + $0x208] sm:$0xff]
  %v3427 = vld [vmem:[%s4 + $0x210] sm:$0xff]
  %v3428 = vld [vmem:[%s4 + $0x218] sm:$0xff]
  %v3429 = vld [vmem:[%s4 + $0x220] sm:$0xff]
  %v3430 = vld [vmem:[%s4 + $0x228] sm:$0xff]
  %v3431 = vld [vmem:[%s4 + $0x230] sm:$0xff]
  %v3432 = vld [vmem:[%s4 + $0x238] sm:$0xff]
  %v3433 = vld [vmem:[%s4 + $0x240] sm:$0xff]
  %v3434 = vld [vmem:[%s4 + $0x248] sm:$0xff]
  %v3435 = vld [vmem:[%s4 + $0x250] sm:$0xff]
  %v3436 = vld [vmem:[%s4 + $0x258] sm:$0xff]
  %v3437 = vld [vmem:[%s4 + $0x260] sm:$0xff]
  %v3438 = vld [vmem:[%s4 + $0x268] sm:$0xff]
  %v3439 = vld [vmem:[%s4 + $0x270] sm:$0xff]
  %v3440 = vld [vmem:[%s4 + $0x278] sm:$0xff]
  %3442 = vset.pattern.permute.xlu0 0
  %3443 = vperm.xlu0 %3442, %v3201
  %v3444 = vpop.permute.xlu0 %3443
  %3447 = vset.pattern.permute.xlu0 0
  %3448 = vperm.xlu0 %3447, %v3202
  %v3449 = vpop.permute.xlu0 %3448
  %3452 = vset.pattern.permute.xlu0 0
  %3453 = vperm.xlu0 %3452, %v3203
  %v3454 = vpop.permute.xlu0 %3453
  %3457 = vset.pattern.permute.xlu0 0
  %3458 = vperm.xlu0 %3457, %v3204
  %v3459 = vpop.permute.xlu0 %3458
  %3462 = vset.pattern.permute.xlu0 0
  %3463 = vperm.xlu0 %3462, %v3205
  %v3464 = vpop.permute.xlu0 %3463
  %3467 = vset.pattern.permute.xlu0 0
  %3468 = vperm.xlu0 %3467, %v3206
  %v3469 = vpop.permute.xlu0 %3468
  %3472 = vset.pattern.permute.xlu0 0
  %3473 = vperm.xlu0 %3472, %v3207
  %v3474 = vpop.permute.xlu0 %3473
  %3477 = vset.pattern.permute.xlu0 0
  %3478 = vperm.xlu0 %3477, %v3208
  %v3479 = vpop.permute.xlu0 %3478
  %3482 = vset.pattern.permute.xlu0 0
  %3483 = vperm.xlu0 %3482, %v3209
  %v3484 = vpop.permute.xlu0 %3483
  %3487 = vset.pattern.permute.xlu0 0
  %3488 = vperm.xlu0 %3487, %v3210
  %v3489 = vpop.permute.xlu0 %3488
  %3492 = vset.pattern.permute.xlu0 0
  %3493 = vperm.xlu0 %3492, %v3211
  %v3494 = vpop.permute.xlu0 %3493
  %3497 = vset.pattern.permute.xlu0 0
  %3498 = vperm.xlu0 %3497, %v3212
  %v3499 = vpop.permute.xlu0 %3498
  %3502 = vset.pattern.permute.xlu0 0
  %3503 = vperm.xlu0 %3502, %v3213
  %v3504 = vpop.permute.xlu0 %3503
  %3507 = vset.pattern.permute.xlu0 0
  %3508 = vperm.xlu0 %3507, %v3214
  %v3509 = vpop.permute.xlu0 %3508
  %3512 = vset.pattern.permute.xlu0 0
  %3513 = vperm.xlu0 %3512, %v3215
  %v3514 = vpop.permute.xlu0 %3513
  %3517 = vset.pattern.permute.xlu0 0
  %3518 = vperm.xlu0 %3517, %v3216
  %v3519 = vpop.permute.xlu0 %3518
  %3522 = vset.pattern.permute.xlu0 0
  %3523 = vperm.xlu0 %3522, %v3217
  %v3524 = vpop.permute.xlu0 %3523
  %3527 = vset.pattern.permute.xlu0 0
  %3528 = vperm.xlu0 %3527, %v3218
  %v3529 = vpop.permute.xlu0 %3528
  %3532 = vset.pattern.permute.xlu0 0
  %3533 = vperm.xlu0 %3532, %v3219
  %v3534 = vpop.permute.xlu0 %3533
  %3537 = vset.pattern.permute.xlu0 0
  %3538 = vperm.xlu0 %3537, %v3220
  %v3539 = vpop.permute.xlu0 %3538
  %3542 = vset.pattern.permute.xlu0 0
  %3543 = vperm.xlu0 %3542, %v3221
  %v3544 = vpop.permute.xlu0 %3543
  %3547 = vset.pattern.permute.xlu0 0
  %3548 = vperm.xlu0 %3547, %v3222
  %v3549 = vpop.permute.xlu0 %3548
  %3552 = vset.pattern.permute.xlu0 0
  %3553 = vperm.xlu0 %3552, %v3223
  %v3554 = vpop.permute.xlu0 %3553
  %3557 = vset.pattern.permute.xlu0 0
  %3558 = vperm.xlu0 %3557, %v3224
  %v3559 = vpop.permute.xlu0 %3558
  %3562 = vset.pattern.permute.xlu0 0
  %3563 = vperm.xlu0 %3562, %v3225
  %v3564 = vpop.permute.xlu0 %3563
  %3567 = vset.pattern.permute.xlu0 0
  %3568 = vperm.xlu0 %3567, %v3226
  %v3569 = vpop.permute.xlu0 %3568
  %3572 = vset.pattern.permute.xlu0 0
  %3573 = vperm.xlu0 %3572, %v3227
  %v3574 = vpop.permute.xlu0 %3573
  %3577 = vset.pattern.permute.xlu0 0
  %3578 = vperm.xlu0 %3577, %v3228
  %v3579 = vpop.permute.xlu0 %3578
  %3582 = vset.pattern.permute.xlu0 0
  %3583 = vperm.xlu0 %3582, %v3229
  %v3584 = vpop.permute.xlu0 %3583
  %3587 = vset.pattern.permute.xlu0 0
  %3588 = vperm.xlu0 %3587, %v3230
  %v3589 = vpop.permute.xlu0 %3588
  %3592 = vset.pattern.permute.xlu0 0
  %3593 = vperm.xlu0 %3592, %v3231
  %v3594 = vpop.permute.xlu0 %3593
  %3597 = vset.pattern.permute.xlu0 0
  %3598 = vperm.xlu0 %3597, %v3232
  %v3599 = vpop.permute.xlu0 %3598
  %3602 = vset.pattern.permute.xlu0 0
  %3603 = vperm.xlu0 %3602, %v3233
  %v3604 = vpop.permute.xlu0 %3603
  %3607 = vset.pattern.permute.xlu0 0
  %3608 = vperm.xlu0 %3607, %v3234
  %v3609 = vpop.permute.xlu0 %3608
  %3612 = vset.pattern.permute.xlu0 0
  %3613 = vperm.xlu0 %3612, %v3235
  %v3614 = vpop.permute.xlu0 %3613
  %3617 = vset.pattern.permute.xlu0 0
  %3618 = vperm.xlu0 %3617, %v3236
  %v3619 = vpop.permute.xlu0 %3618
  %3622 = vset.pattern.permute.xlu0 0
  %3623 = vperm.xlu0 %3622, %v3237
  %v3624 = vpop.permute.xlu0 %3623
  %3627 = vset.pattern.permute.xlu0 0
  %3628 = vperm.xlu0 %3627, %v3238
  %v3629 = vpop.permute.xlu0 %3628
  %3632 = vset.pattern.permute.xlu0 0
  %3633 = vperm.xlu0 %3632, %v3239
  %v3634 = vpop.permute.xlu0 %3633
  %3637 = vset.pattern.permute.xlu0 0
  %3638 = vperm.xlu0 %3637, %v3240
  %v3639 = vpop.permute.xlu0 %3638
  %v3641 = vmul.f32 %v3361, %v3444
  %v3642 = vmul.f32 %v3362, %v3444
  %v3643 = vmul.f32 %v3363, %v3449
  %v3644 = vmul.f32 %v3364, %v3449
  %v3645 = vmul.f32 %v3365, %v3454
  %v3646 = vmul.f32 %v3366, %v3454
  %v3647 = vmul.f32 %v3367, %v3459
  %v3648 = vmul.f32 %v3368, %v3459
  %v3649 = vmul.f32 %v3369, %v3464
  %v3650 = vmul.f32 %v3370, %v3464
  %v3651 = vmul.f32 %v3371, %v3469
  %v3652 = vmul.f32 %v3372, %v3469
  %v3653 = vmul.f32 %v3373, %v3474
  %v3654 = vmul.f32 %v3374, %v3474
  %v3655 = vmul.f32 %v3375, %v3479
  %v3656 = vmul.f32 %v3376, %v3479
  %v3657 = vmul.f32 %v3377, %v3484
  %v3658 = vmul.f32 %v3378, %v3484
  %v3659 = vmul.f32 %v3379, %v3489
  %v3660 = vmul.f32 %v3380, %v3489
  %v3661 = vmul.f32 %v3381, %v3494
  %v3662 = vmul.f32 %v3382, %v3494
  %v3663 = vmul.f32 %v3383, %v3499
  %v3664 = vmul.f32 %v3384, %v3499
  %v3665 = vmul.f32 %v3385, %v3504
  %v3666 = vmul.f32 %v3386, %v3504
  %v3667 = vmul.f32 %v3387, %v3509
  %v3668 = vmul.f32 %v3388, %v3509
  %v3669 = vmul.f32 %v3389, %v3514
  %v3670 = vmul.f32 %v3390, %v3514
  %v3671 = vmul.f32 %v3391, %v3519
  %v3672 = vmul.f32 %v3392, %v3519
  %v3673 = vmul.f32 %v3393, %v3524
  %v3674 = vmul.f32 %v3394, %v3524
  %v3675 = vmul.f32 %v3395, %v3529
  %v3676 = vmul.f32 %v3396, %v3529
  %v3677 = vmul.f32 %v3397, %v3534
  %v3678 = vmul.f32 %v3398, %v3534
  %v3679 = vmul.f32 %v3399, %v3539
  %v3680 = vmul.f32 %v3400, %v3539
  %v3681 = vmul.f32 %v3401, %v3544
  %v3682 = vmul.f32 %v3402, %v3544
  %v3683 = vmul.f32 %v3403, %v3549
  %v3684 = vmul.f32 %v3404, %v3549
  %v3685 = vmul.f32 %v3405, %v3554
  %v3686 = vmul.f32 %v3406, %v3554
  %v3687 = vmul.f32 %v3407, %v3559
  %v3688 = vmul.f32 %v3408, %v3559
  %v3689 = vmul.f32 %v3409, %v3564
  %v3690 = vmul.f32 %v3410, %v3564
  %v3691 = vmul.f32 %v3411, %v3569
  %v3692 = vmul.f32 %v3412, %v3569
  %v3693 = vmul.f32 %v3413, %v3574
  %v3694 = vmul.f32 %v3414, %v3574
  %v3695 = vmul.f32 %v3415, %v3579
  %v3696 = vmul.f32 %v3416, %v3579
  %v3697 = vmul.f32 %v3417, %v3584
  %v3698 = vmul.f32 %v3418, %v3584
  %v3699 = vmul.f32 %v3419, %v3589
  %v3700 = vmul.f32 %v3420, %v3589
  %v3701 = vmul.f32 %v3421, %v3594
  %v3702 = vmul.f32 %v3422, %v3594
  %v3703 = vmul.f32 %v3423, %v3599
  %v3704 = vmul.f32 %v3424, %v3599
  %v3705 = vmul.f32 %v3425, %v3604
  %v3706 = vmul.f32 %v3426, %v3604
  %v3707 = vmul.f32 %v3427, %v3609
  %v3708 = vmul.f32 %v3428, %v3609
  %v3709 = vmul.f32 %v3429, %v3614
  %v3710 = vmul.f32 %v3430, %v3614
  %v3711 = vmul.f32 %v3431, %v3619
  %v3712 = vmul.f32 %v3432, %v3619
  %v3713 = vmul.f32 %v3433, %v3624
  %v3714 = vmul.f32 %v3434, %v3624
  %v3715 = vmul.f32 %v3435, %v3629
  %v3716 = vmul.f32 %v3436, %v3629
  %v3717 = vmul.f32 %v3437, %v3634
  %v3718 = vmul.f32 %v3438, %v3634
  %v3719 = vmul.f32 %v3439, %v3639
  %v3720 = vmul.f32 %v3440, %v3639
  %3722 = vset.pattern.permute.xlu0 0
  %3723 = vperm.xlu0 %3722, %v3321
  %v3724 = vpop.permute.xlu0 %3723
  %3727 = vset.pattern.permute.xlu0 0
  %3728 = vperm.xlu0 %3727, %v3322
  %v3729 = vpop.permute.xlu0 %3728
  %3732 = vset.pattern.permute.xlu0 0
  %3733 = vperm.xlu0 %3732, %v3323
  %v3734 = vpop.permute.xlu0 %3733
  %3737 = vset.pattern.permute.xlu0 0
  %3738 = vperm.xlu0 %3737, %v3324
  %v3739 = vpop.permute.xlu0 %3738
  %3742 = vset.pattern.permute.xlu0 0
  %3743 = vperm.xlu0 %3742, %v3325
  %v3744 = vpop.permute.xlu0 %3743
  %3747 = vset.pattern.permute.xlu0 0
  %3748 = vperm.xlu0 %3747, %v3326
  %v3749 = vpop.permute.xlu0 %3748
  %3752 = vset.pattern.permute.xlu0 0
  %3753 = vperm.xlu0 %3752, %v3327
  %v3754 = vpop.permute.xlu0 %3753
  %3757 = vset.pattern.permute.xlu0 0
  %3758 = vperm.xlu0 %3757, %v3328
  %v3759 = vpop.permute.xlu0 %3758
  %3762 = vset.pattern.permute.xlu0 0
  %3763 = vperm.xlu0 %3762, %v3329
  %v3764 = vpop.permute.xlu0 %3763
  %3767 = vset.pattern.permute.xlu0 0
  %3768 = vperm.xlu0 %3767, %v3330
  %v3769 = vpop.permute.xlu0 %3768
  %3772 = vset.pattern.permute.xlu0 0
  %3773 = vperm.xlu0 %3772, %v3331
  %v3774 = vpop.permute.xlu0 %3773
  %3777 = vset.pattern.permute.xlu0 0
  %3778 = vperm.xlu0 %3777, %v3332
  %v3779 = vpop.permute.xlu0 %3778
  %3782 = vset.pattern.permute.xlu0 0
  %3783 = vperm.xlu0 %3782, %v3333
  %v3784 = vpop.permute.xlu0 %3783
  %3787 = vset.pattern.permute.xlu0 0
  %3788 = vperm.xlu0 %3787, %v3334
  %v3789 = vpop.permute.xlu0 %3788
  %3792 = vset.pattern.permute.xlu0 0
  %3793 = vperm.xlu0 %3792, %v3335
  %v3794 = vpop.permute.xlu0 %3793
  %3797 = vset.pattern.permute.xlu0 0
  %3798 = vperm.xlu0 %3797, %v3336
  %v3799 = vpop.permute.xlu0 %3798
  %3802 = vset.pattern.permute.xlu0 0
  %3803 = vperm.xlu0 %3802, %v3337
  %v3804 = vpop.permute.xlu0 %3803
  %3807 = vset.pattern.permute.xlu0 0
  %3808 = vperm.xlu0 %3807, %v3338
  %v3809 = vpop.permute.xlu0 %3808
  %3812 = vset.pattern.permute.xlu0 0
  %3813 = vperm.xlu0 %3812, %v3339
  %v3814 = vpop.permute.xlu0 %3813
  %3817 = vset.pattern.permute.xlu0 0
  %3818 = vperm.xlu0 %3817, %v3340
  %v3819 = vpop.permute.xlu0 %3818
  %3822 = vset.pattern.permute.xlu0 0
  %3823 = vperm.xlu0 %3822, %v3341
  %v3824 = vpop.permute.xlu0 %3823
  %3827 = vset.pattern.permute.xlu0 0
  %3828 = vperm.xlu0 %3827, %v3342
  %v3829 = vpop.permute.xlu0 %3828
  %3832 = vset.pattern.permute.xlu0 0
  %3833 = vperm.xlu0 %3832, %v3343
  %v3834 = vpop.permute.xlu0 %3833
  %3837 = vset.pattern.permute.xlu0 0
  %3838 = vperm.xlu0 %3837, %v3344
  %v3839 = vpop.permute.xlu0 %3838
  %3842 = vset.pattern.permute.xlu0 0
  %3843 = vperm.xlu0 %3842, %v3345
  %v3844 = vpop.permute.xlu0 %3843
  %3847 = vset.pattern.permute.xlu0 0
  %3848 = vperm.xlu0 %3847, %v3346
  %v3849 = vpop.permute.xlu0 %3848
  %3852 = vset.pattern.permute.xlu0 0
  %3853 = vperm.xlu0 %3852, %v3347
  %v3854 = vpop.permute.xlu0 %3853
  %3857 = vset.pattern.permute.xlu0 0
  %3858 = vperm.xlu0 %3857, %v3348
  %v3859 = vpop.permute.xlu0 %3858
  %3862 = vset.pattern.permute.xlu0 0
  %3863 = vperm.xlu0 %3862, %v3349
  %v3864 = vpop.permute.xlu0 %3863
  %3867 = vset.pattern.permute.xlu0 0
  %3868 = vperm.xlu0 %3867, %v3350
  %v3869 = vpop.permute.xlu0 %3868
  %3872 = vset.pattern.permute.xlu0 0
  %3873 = vperm.xlu0 %3872, %v3351
  %v3874 = vpop.permute.xlu0 %3873
  %3877 = vset.pattern.permute.xlu0 0
  %3878 = vperm.xlu0 %3877, %v3352
  %v3879 = vpop.permute.xlu0 %3878
  %3882 = vset.pattern.permute.xlu0 0
  %3883 = vperm.xlu0 %3882, %v3353
  %v3884 = vpop.permute.xlu0 %3883
  %3887 = vset.pattern.permute.xlu0 0
  %3888 = vperm.xlu0 %3887, %v3354
  %v3889 = vpop.permute.xlu0 %3888
  %3892 = vset.pattern.permute.xlu0 0
  %3893 = vperm.xlu0 %3892, %v3355
  %v3894 = vpop.permute.xlu0 %3893
  %3897 = vset.pattern.permute.xlu0 0
  %3898 = vperm.xlu0 %3897, %v3356
  %v3899 = vpop.permute.xlu0 %3898
  %3902 = vset.pattern.permute.xlu0 0
  %3903 = vperm.xlu0 %3902, %v3357
  %v3904 = vpop.permute.xlu0 %3903
  %3907 = vset.pattern.permute.xlu0 0
  %3908 = vperm.xlu0 %3907, %v3358
  %v3909 = vpop.permute.xlu0 %3908
  %3912 = vset.pattern.permute.xlu0 0
  %3913 = vperm.xlu0 %3912, %v3359
  %v3914 = vpop.permute.xlu0 %3913
  %3917 = vset.pattern.permute.xlu0 0
  %3918 = vperm.xlu0 %3917, %v3360
  %v3919 = vpop.permute.xlu0 %3918
  %v3921 = vadd.f32 %v3641, %v3724
  %v3922 = vadd.f32 %v3642, %v3724
  %v3923 = vadd.f32 %v3643, %v3729
  %v3924 = vadd.f32 %v3644, %v3729
  %v3925 = vadd.f32 %v3645, %v3734
  %v3926 = vadd.f32 %v3646, %v3734
  %v3927 = vadd.f32 %v3647, %v3739
  %v3928 = vadd.f32 %v3648, %v3739
  %v3929 = vadd.f32 %v3649, %v3744
  %v3930 = vadd.f32 %v3650, %v3744
  %v3931 = vadd.f32 %v3651, %v3749
  %v3932 = vadd.f32 %v3652, %v3749
  %v3933 = vadd.f32 %v3653, %v3754
  %v3934 = vadd.f32 %v3654, %v3754
  %v3935 = vadd.f32 %v3655, %v3759
  %v3936 = vadd.f32 %v3656, %v3759
  %v3937 = vadd.f32 %v3657, %v3764
  %v3938 = vadd.f32 %v3658, %v3764
  %v3939 = vadd.f32 %v3659, %v3769
  %v3940 = vadd.f32 %v3660, %v3769
  %v3941 = vadd.f32 %v3661, %v3774
  %v3942 = vadd.f32 %v3662, %v3774
  %v3943 = vadd.f32 %v3663, %v3779
  %v3944 = vadd.f32 %v3664, %v3779
  %v3945 = vadd.f32 %v3665, %v3784
  %v3946 = vadd.f32 %v3666, %v3784
  %v3947 = vadd.f32 %v3667, %v3789
  %v3948 = vadd.f32 %v3668, %v3789
  %v3949 = vadd.f32 %v3669, %v3794
  %v3950 = vadd.f32 %v3670, %v3794
  %v3951 = vadd.f32 %v3671, %v3799
  %v3952 = vadd.f32 %v3672, %v3799
  %v3953 = vadd.f32 %v3673, %v3804
  %v3954 = vadd.f32 %v3674, %v3804
  %v3955 = vadd.f32 %v3675, %v3809
  %v3956 = vadd.f32 %v3676, %v3809
  %v3957 = vadd.f32 %v3677, %v3814
  %v3958 = vadd.f32 %v3678, %v3814
  %v3959 = vadd.f32 %v3679, %v3819
  %v3960 = vadd.f32 %v3680, %v3819
  %v3961 = vadd.f32 %v3681, %v3824
  %v3962 = vadd.f32 %v3682, %v3824
  %v3963 = vadd.f32 %v3683, %v3829
  %v3964 = vadd.f32 %v3684, %v3829
  %v3965 = vadd.f32 %v3685, %v3834
  %v3966 = vadd.f32 %v3686, %v3834
  %v3967 = vadd.f32 %v3687, %v3839
  %v3968 = vadd.f32 %v3688, %v3839
  %v3969 = vadd.f32 %v3689, %v3844
  %v3970 = vadd.f32 %v3690, %v3844
  %v3971 = vadd.f32 %v3691, %v3849
  %v3972 = vadd.f32 %v3692, %v3849
  %v3973 = vadd.f32 %v3693, %v3854
  %v3974 = vadd.f32 %v3694, %v3854
  %v3975 = vadd.f32 %v3695, %v3859
  %v3976 = vadd.f32 %v3696, %v3859
  %v3977 = vadd.f32 %v3697, %v3864
  %v3978 = vadd.f32 %v3698, %v3864
  %v3979 = vadd.f32 %v3699, %v3869
  %v3980 = vadd.f32 %v3700, %v3869
  %v3981 = vadd.f32 %v3701, %v3874
  %v3982 = vadd.f32 %v3702, %v3874
  %v3983 = vadd.f32 %v3703, %v3879
  %v3984 = vadd.f32 %v3704, %v3879
  %v3985 = vadd.f32 %v3705, %v3884
  %v3986 = vadd.f32 %v3706, %v3884
  %v3987 = vadd.f32 %v3707, %v3889
  %v3988 = vadd.f32 %v3708, %v3889
  %v3989 = vadd.f32 %v3709, %v3894
  %v3990 = vadd.f32 %v3710, %v3894
  %v3991 = vadd.f32 %v3711, %v3899
  %v3992 = vadd.f32 %v3712, %v3899
  %v3993 = vadd.f32 %v3713, %v3904
  %v3994 = vadd.f32 %v3714, %v3904
  %v3995 = vadd.f32 %v3715, %v3909
  %v3996 = vadd.f32 %v3716, %v3909
  %v3997 = vadd.f32 %v3717, %v3914
  %v3998 = vadd.f32 %v3718, %v3914
  %v3999 = vadd.f32 %v3719, %v3919
  %v4000 = vadd.f32 %v3720, %v3919
  %4001 = vst [vmem:[%s4] sm:$0xff] %v3921
  %4002 = vst.msk [vmem:[%s4 + $0x8] sm:$0xff] %vm1029, %v3922
  %4003 = vst [vmem:[%s4 + $0x10] sm:$0xff] %v3923
  %4004 = vst.msk [vmem:[%s4 + $0x18] sm:$0xff] %vm1029, %v3924
  %4005 = vst [vmem:[%s4 + $0x20] sm:$0xff] %v3925
  %4006 = vst.msk [vmem:[%s4 + $0x28] sm:$0xff] %vm1029, %v3926
  %4007 = vst [vmem:[%s4 + $0x30] sm:$0xff] %v3927
  %4008 = vst.msk [vmem:[%s4 + $0x38] sm:$0xff] %vm1029, %v3928
  %4009 = vst [vmem:[%s4 + $0x40] sm:$0xff] %v3929
  %4010 = vst.msk [vmem:[%s4 + $0x48] sm:$0xff] %vm1029, %v3930
  %4011 = vst [vmem:[%s4 + $0x50] sm:$0xff] %v3931
  %4012 = vst.msk [vmem:[%s4 + $0x58] sm:$0xff] %vm1029, %v3932
  %4013 = vst [vmem:[%s4 + $0x60] sm:$0xff] %v3933
  %4014 = vst.msk [vmem:[%s4 + $0x68] sm:$0xff] %vm1029, %v3934
  %4015 = vst [vmem:[%s4 + $0x70] sm:$0xff] %v3935
  %4016 = vst.msk [vmem:[%s4 + $0x78] sm:$0xff] %vm1029, %v3936
  %4017 = vst [vmem:[%s4 + $0x80] sm:$0xff] %v3937
  %4018 = vst.msk [vmem:[%s4 + $0x88] sm:$0xff] %vm1029, %v3938
  %4019 = vst [vmem:[%s4 + $0x90] sm:$0xff] %v3939
  %4020 = vst.msk [vmem:[%s4 + $0x98] sm:$0xff] %vm1029, %v3940
  %4021 = vst [vmem:[%s4 + $0xa0] sm:$0xff] %v3941
  %4022 = vst.msk [vmem:[%s4 + $0xa8] sm:$0xff] %vm1029, %v3942
  %4023 = vst [vmem:[%s4 + $0xb0] sm:$0xff] %v3943
  %4024 = vst.msk [vmem:[%s4 + $0xb8] sm:$0xff] %vm1029, %v3944
  %4025 = vst [vmem:[%s4 + $0xc0] sm:$0xff] %v3945
  %4026 = vst.msk [vmem:[%s4 + $0xc8] sm:$0xff] %vm1029, %v3946
  %4027 = vst [vmem:[%s4 + $0xd0] sm:$0xff] %v3947
  %4028 = vst.msk [vmem:[%s4 + $0xd8] sm:$0xff] %vm1029, %v3948
  %4029 = vst [vmem:[%s4 + $0xe0] sm:$0xff] %v3949
  %4030 = vst.msk [vmem:[%s4 + $0xe8] sm:$0xff] %vm1029, %v3950
  %4031 = vst [vmem:[%s4 + $0xf0] sm:$0xff] %v3951
  %4032 = vst.msk [vmem:[%s4 + $0xf8] sm:$0xff] %vm1029, %v3952
  %4033 = vst [vmem:[%s4 + $0x100] sm:$0xff] %v3953
  %4034 = vst.msk [vmem:[%s4 + $0x108] sm:$0xff] %vm1029, %v3954
  %4035 = vst [vmem:[%s4 + $0x110] sm:$0xff] %v3955
  %4036 = vst.msk [vmem:[%s4 + $0x118] sm:$0xff] %vm1029, %v3956
  %4037 = vst [vmem:[%s4 + $0x120] sm:$0xff] %v3957
  %4038 = vst.msk [vmem:[%s4 + $0x128] sm:$0xff] %vm1029, %v3958
  %4039 = vst [vmem:[%s4 + $0x130] sm:$0xff] %v3959
  %4040 = vst.msk [vmem:[%s4 + $0x138] sm:$0xff] %vm1029, %v3960
  %4041 = vst [vmem:[%s4 + $0x140] sm:$0xff] %v3961
  %4042 = vst.msk [vmem:[%s4 + $0x148] sm:$0xff] %vm1029, %v3962
  %4043 = vst [vmem:[%s4 + $0x150] sm:$0xff] %v3963
  %4044 = vst.msk [vmem:[%s4 + $0x158] sm:$0xff] %vm1029, %v3964
  %4045 = vst [vmem:[%s4 + $0x160] sm:$0xff] %v3965
  %4046 = vst.msk [vmem:[%s4 + $0x168] sm:$0xff] %vm1029, %v3966
  %4047 = vst [vmem:[%s4 + $0x170] sm:$0xff] %v3967
  %4048 = vst.msk [vmem:[%s4 + $0x178] sm:$0xff] %vm1029, %v3968
  %4049 = vst [vmem:[%s4 + $0x180] sm:$0xff] %v3969
  %4050 = vst.msk [vmem:[%s4 + $0x188] sm:$0xff] %vm1029, %v3970
  %4051 = vst [vmem:[%s4 + $0x190] sm:$0xff] %v3971
  %4052 = vst.msk [vmem:[%s4 + $0x198] sm:$0xff] %vm1029, %v3972
  %4053 = vst [vmem:[%s4 + $0x1a0] sm:$0xff] %v3973
  %4054 = vst.msk [vmem:[%s4 + $0x1a8] sm:$0xff] %vm1029, %v3974
  %4055 = vst [vmem:[%s4 + $0x1b0] sm:$0xff] %v3975
  %4056 = vst.msk [vmem:[%s4 + $0x1b8] sm:$0xff] %vm1029, %v3976
  %4057 = vst [vmem:[%s4 + $0x1c0] sm:$0xff] %v3977
  %4058 = vst.msk [vmem:[%s4 + $0x1c8] sm:$0xff] %vm1029, %v3978
  %4059 = vst [vmem:[%s4 + $0x1d0] sm:$0xff] %v3979
  %4060 = vst.msk [vmem:[%s4 + $0x1d8] sm:$0xff] %vm1029, %v3980
  %4061 = vst [vmem:[%s4 + $0x1e0] sm:$0xff] %v3981
  %4062 = vst.msk [vmem:[%s4 + $0x1e8] sm:$0xff] %vm1029, %v3982
  %4063 = vst [vmem:[%s4 + $0x1f0] sm:$0xff] %v3983
  %4064 = vst.msk [vmem:[%s4 + $0x1f8] sm:$0xff] %vm1029, %v3984
  %4065 = vst [vmem:[%s4 + $0x200] sm:$0xff] %v3985
  %4066 = vst.msk [vmem:[%s4 + $0x208] sm:$0xff] %vm1029, %v3986
  %4067 = vst [vmem:[%s4 + $0x210] sm:$0xff] %v3987
  %4068 = vst.msk [vmem:[%s4 + $0x218] sm:$0xff] %vm1029, %v3988
  %4069 = vst [vmem:[%s4 + $0x220] sm:$0xff] %v3989
  %4070 = vst.msk [vmem:[%s4 + $0x228] sm:$0xff] %vm1029, %v3990
  %4071 = vst [vmem:[%s4 + $0x230] sm:$0xff] %v3991
  %4072 = vst.msk [vmem:[%s4 + $0x238] sm:$0xff] %vm1029, %v3992
  %4073 = vst [vmem:[%s4 + $0x240] sm:$0xff] %v3993
  %4074 = vst.msk [vmem:[%s4 + $0x248] sm:$0xff] %vm1029, %v3994
  %4075 = vst [vmem:[%s4 + $0x250] sm:$0xff] %v3995
  %4076 = vst.msk [vmem:[%s4 + $0x258] sm:$0xff] %vm1029, %v3996
  %4077 = vst [vmem:[%s4 + $0x260] sm:$0xff] %v3997
  %4078 = vst.msk [vmem:[%s4 + $0x268] sm:$0xff] %vm1029, %v3998
  %4079 = vst [vmem:[%s4 + $0x270] sm:$0xff] %v3999
  %4080 = vst.msk [vmem:[%s4 + $0x278] sm:$0xff] %vm1029, %v4000
  %v4081 = vld [vmem:[%s2360] sm:$0xff]
  %v4082 = vld [vmem:[%s2360 + $0x8] sm:$0xff]
  %v4083 = vld [vmem:[%s2360 + $0x10] sm:$0xff]
  %v4084 = vld [vmem:[%s2360 + $0x18] sm:$0xff]
  %v4085 = vld [vmem:[%s2360 + $0x20] sm:$0xff]
  %v4086 = vld [vmem:[%s2360 + $0x28] sm:$0xff]
  %v4087 = vld [vmem:[%s2360 + $0x30] sm:$0xff]
  %v4088 = vld [vmem:[%s2360 + $0x38] sm:$0xff]
  %v4089 = vld [vmem:[%s2360 + $0x40] sm:$0xff]
  %v4090 = vld [vmem:[%s2360 + $0x48] sm:$0xff]
  %v4091 = vld [vmem:[%s2360 + $0x50] sm:$0xff]
  %v4092 = vld [vmem:[%s2360 + $0x58] sm:$0xff]
  %v4093 = vld [vmem:[%s2360 + $0x60] sm:$0xff]
  %v4094 = vld [vmem:[%s2360 + $0x68] sm:$0xff]
  %v4095 = vld [vmem:[%s2360 + $0x70] sm:$0xff]
  %v4096 = vld [vmem:[%s2360 + $0x78] sm:$0xff]
  %v4097 = vld [vmem:[%s2360 + $0x80] sm:$0xff]
  %v4098 = vld [vmem:[%s2360 + $0x88] sm:$0xff]
  %v4099 = vld [vmem:[%s2360 + $0x90] sm:$0xff]
  %v4100 = vld [vmem:[%s2360 + $0x98] sm:$0xff]
  %v4101 = vld [vmem:[%s2360 + $0xa0] sm:$0xff]
  %v4102 = vld [vmem:[%s2360 + $0xa8] sm:$0xff]
  %v4103 = vld [vmem:[%s2360 + $0xb0] sm:$0xff]
  %v4104 = vld [vmem:[%s2360 + $0xb8] sm:$0xff]
  %v4105 = vld [vmem:[%s2360 + $0xc0] sm:$0xff]
  %v4106 = vld [vmem:[%s2360 + $0xc8] sm:$0xff]
  %v4107 = vld [vmem:[%s2360 + $0xd0] sm:$0xff]
  %v4108 = vld [vmem:[%s2360 + $0xd8] sm:$0xff]
  %v4109 = vld [vmem:[%s2360 + $0xe0] sm:$0xff]
  %v4110 = vld [vmem:[%s2360 + $0xe8] sm:$0xff]
  %v4111 = vld [vmem:[%s2360 + $0xf0] sm:$0xff]
  %v4112 = vld [vmem:[%s2360 + $0xf8] sm:$0xff]
  %v4113 = vld [vmem:[%s2360 + $0x100] sm:$0xff]
  %v4114 = vld [vmem:[%s2360 + $0x108] sm:$0xff]
  %v4115 = vld [vmem:[%s2360 + $0x110] sm:$0xff]
  %v4116 = vld [vmem:[%s2360 + $0x118] sm:$0xff]
  %v4117 = vld [vmem:[%s2360 + $0x120] sm:$0xff]
  %v4118 = vld [vmem:[%s2360 + $0x128] sm:$0xff]
  %v4119 = vld [vmem:[%s2360 + $0x130] sm:$0xff]
  %v4120 = vld [vmem:[%s2360 + $0x138] sm:$0xff]
  %v4121 = vld [vmem:[%s2360 + $0x140] sm:$0xff]
  %v4122 = vld [vmem:[%s2360 + $0x148] sm:$0xff]
  %v4123 = vld [vmem:[%s2360 + $0x150] sm:$0xff]
  %v4124 = vld [vmem:[%s2360 + $0x158] sm:$0xff]
  %v4125 = vld [vmem:[%s2360 + $0x160] sm:$0xff]
  %v4126 = vld [vmem:[%s2360 + $0x168] sm:$0xff]
  %v4127 = vld [vmem:[%s2360 + $0x170] sm:$0xff]
  %v4128 = vld [vmem:[%s2360 + $0x178] sm:$0xff]
  %v4129 = vld [vmem:[%s2360 + $0x180] sm:$0xff]
  %v4130 = vld [vmem:[%s2360 + $0x188] sm:$0xff]
  %v4131 = vld [vmem:[%s2360 + $0x190] sm:$0xff]
  %v4132 = vld [vmem:[%s2360 + $0x198] sm:$0xff]
  %v4133 = vld [vmem:[%s2360 + $0x1a0] sm:$0xff]
  %v4134 = vld [vmem:[%s2360 + $0x1a8] sm:$0xff]
  %v4135 = vld [vmem:[%s2360 + $0x1b0] sm:$0xff]
  %v4136 = vld [vmem:[%s2360 + $0x1b8] sm:$0xff]
  %v4137 = vld [vmem:[%s2360 + $0x1c0] sm:$0xff]
  %v4138 = vld [vmem:[%s2360 + $0x1c8] sm:$0xff]
  %v4139 = vld [vmem:[%s2360 + $0x1d0] sm:$0xff]
  %v4140 = vld [vmem:[%s2360 + $0x1d8] sm:$0xff]
  %v4141 = vld [vmem:[%s2360 + $0x1e0] sm:$0xff]
  %v4142 = vld [vmem:[%s2360 + $0x1e8] sm:$0xff]
  %v4143 = vld [vmem:[%s2360 + $0x1f0] sm:$0xff]
  %v4144 = vld [vmem:[%s2360 + $0x1f8] sm:$0xff]
  %v4145 = vld [vmem:[%s2360 + $0x200] sm:$0xff]
  %v4146 = vld [vmem:[%s2360 + $0x208] sm:$0xff]
  %v4147 = vld [vmem:[%s2360 + $0x210] sm:$0xff]
  %v4148 = vld [vmem:[%s2360 + $0x218] sm:$0xff]
  %v4149 = vld [vmem:[%s2360 + $0x220] sm:$0xff]
  %v4150 = vld [vmem:[%s2360 + $0x228] sm:$0xff]
  %v4151 = vld [vmem:[%s2360 + $0x230] sm:$0xff]
  %v4152 = vld [vmem:[%s2360 + $0x238] sm:$0xff]
  %v4153 = vld [vmem:[%s2360 + $0x240] sm:$0xff]
  %v4154 = vld [vmem:[%s2360 + $0x248] sm:$0xff]
  %v4155 = vld [vmem:[%s2360 + $0x250] sm:$0xff]
  %v4156 = vld [vmem:[%s2360 + $0x258] sm:$0xff]
  %v4157 = vld [vmem:[%s2360 + $0x260] sm:$0xff]
  %v4158 = vld [vmem:[%s2360 + $0x268] sm:$0xff]
  %v4159 = vld [vmem:[%s2360 + $0x270] sm:$0xff]
  %v4160 = vld [vmem:[%s2360 + $0x278] sm:$0xff]
  %v4161 = vmul.f32 %v4081, %v3444
  %v4162 = vmul.f32 %v4082, %v3444
  %v4163 = vmul.f32 %v4083, %v3449
  %v4164 = vmul.f32 %v4084, %v3449
  %v4165 = vmul.f32 %v4085, %v3454
  %v4166 = vmul.f32 %v4086, %v3454
  %v4167 = vmul.f32 %v4087, %v3459
  %v4168 = vmul.f32 %v4088, %v3459
  %v4169 = vmul.f32 %v4089, %v3464
  %v4170 = vmul.f32 %v4090, %v3464
  %v4171 = vmul.f32 %v4091, %v3469
  %v4172 = vmul.f32 %v4092, %v3469
  %v4173 = vmul.f32 %v4093, %v3474
  %v4174 = vmul.f32 %v4094, %v3474
  %v4175 = vmul.f32 %v4095, %v3479
  %v4176 = vmul.f32 %v4096, %v3479
  %v4177 = vmul.f32 %v4097, %v3484
  %v4178 = vmul.f32 %v4098, %v3484
  %v4179 = vmul.f32 %v4099, %v3489
  %v4180 = vmul.f32 %v4100, %v3489
  %v4181 = vmul.f32 %v4101, %v3494
  %v4182 = vmul.f32 %v4102, %v3494
  %v4183 = vmul.f32 %v4103, %v3499
  %v4184 = vmul.f32 %v4104, %v3499
  %v4185 = vmul.f32 %v4105, %v3504
  %v4186 = vmul.f32 %v4106, %v3504
  %v4187 = vmul.f32 %v4107, %v3509
  %v4188 = vmul.f32 %v4108, %v3509
  %v4189 = vmul.f32 %v4109, %v3514
  %v4190 = vmul.f32 %v4110, %v3514
  %v4191 = vmul.f32 %v4111, %v3519
  %v4192 = vmul.f32 %v4112, %v3519
  %v4193 = vmul.f32 %v4113, %v3524
  %v4194 = vmul.f32 %v4114, %v3524
  %v4195 = vmul.f32 %v4115, %v3529
  %v4196 = vmul.f32 %v4116, %v3529
  %v4197 = vmul.f32 %v4117, %v3534
  %v4198 = vmul.f32 %v4118, %v3534
  %v4199 = vmul.f32 %v4119, %v3539
  %v4200 = vmul.f32 %v4120, %v3539
  %v4201 = vmul.f32 %v4121, %v3544
  %v4202 = vmul.f32 %v4122, %v3544
  %v4203 = vmul.f32 %v4123, %v3549
  %v4204 = vmul.f32 %v4124, %v3549
  %v4205 = vmul.f32 %v4125, %v3554
  %v4206 = vmul.f32 %v4126, %v3554
  %v4207 = vmul.f32 %v4127, %v3559
  %v4208 = vmul.f32 %v4128, %v3559
  %v4209 = vmul.f32 %v4129, %v3564
  %v4210 = vmul.f32 %v4130, %v3564
  %v4211 = vmul.f32 %v4131, %v3569
  %v4212 = vmul.f32 %v4132, %v3569
  %v4213 = vmul.f32 %v4133, %v3574
  %v4214 = vmul.f32 %v4134, %v3574
  %v4215 = vmul.f32 %v4135, %v3579
  %v4216 = vmul.f32 %v4136, %v3579
  %v4217 = vmul.f32 %v4137, %v3584
  %v4218 = vmul.f32 %v4138, %v3584
  %v4219 = vmul.f32 %v4139, %v3589
  %v4220 = vmul.f32 %v4140, %v3589
  %v4221 = vmul.f32 %v4141, %v3594
  %v4222 = vmul.f32 %v4142, %v3594
  %v4223 = vmul.f32 %v4143, %v3599
  %v4224 = vmul.f32 %v4144, %v3599
  %v4225 = vmul.f32 %v4145, %v3604
  %v4226 = vmul.f32 %v4146, %v3604
  %v4227 = vmul.f32 %v4147, %v3609
  %v4228 = vmul.f32 %v4148, %v3609
  %v4229 = vmul.f32 %v4149, %v3614
  %v4230 = vmul.f32 %v4150, %v3614
  %v4231 = vmul.f32 %v4151, %v3619
  %v4232 = vmul.f32 %v4152, %v3619
  %v4233 = vmul.f32 %v4153, %v3624
  %v4234 = vmul.f32 %v4154, %v3624
  %v4235 = vmul.f32 %v4155, %v3629
  %v4236 = vmul.f32 %v4156, %v3629
  %v4237 = vmul.f32 %v4157, %v3634
  %v4238 = vmul.f32 %v4158, %v3634
  %v4239 = vmul.f32 %v4159, %v3639
  %v4240 = vmul.f32 %v4160, %v3639
  %v4241 = vadd.f32 %v4161, %v3724
  %v4242 = vadd.f32 %v4162, %v3724
  %v4243 = vadd.f32 %v4163, %v3729
  %v4244 = vadd.f32 %v4164, %v3729
  %v4245 = vadd.f32 %v4165, %v3734
  %v4246 = vadd.f32 %v4166, %v3734
  %v4247 = vadd.f32 %v4167, %v3739
  %v4248 = vadd.f32 %v4168, %v3739
  %v4249 = vadd.f32 %v4169, %v3744
  %v4250 = vadd.f32 %v4170, %v3744
  %v4251 = vadd.f32 %v4171, %v3749
  %v4252 = vadd.f32 %v4172, %v3749
  %v4253 = vadd.f32 %v4173, %v3754
  %v4254 = vadd.f32 %v4174, %v3754
  %v4255 = vadd.f32 %v4175, %v3759
  %v4256 = vadd.f32 %v4176, %v3759
  %v4257 = vadd.f32 %v4177, %v3764
  %v4258 = vadd.f32 %v4178, %v3764
  %v4259 = vadd.f32 %v4179, %v3769
  %v4260 = vadd.f32 %v4180, %v3769
  %v4261 = vadd.f32 %v4181, %v3774
  %v4262 = vadd.f32 %v4182, %v3774
  %v4263 = vadd.f32 %v4183, %v3779
  %v4264 = vadd.f32 %v4184, %v3779
  %v4265 = vadd.f32 %v4185, %v3784
  %v4266 = vadd.f32 %v4186, %v3784
  %v4267 = vadd.f32 %v4187, %v3789
  %v4268 = vadd.f32 %v4188, %v3789
  %v4269 = vadd.f32 %v4189, %v3794
  %v4270 = vadd.f32 %v4190, %v3794
  %v4271 = vadd.f32 %v4191, %v3799
  %v4272 = vadd.f32 %v4192, %v3799
  %v4273 = vadd.f32 %v4193, %v3804
  %v4274 = vadd.f32 %v4194, %v3804
  %v4275 = vadd.f32 %v4195, %v3809
  %v4276 = vadd.f32 %v4196, %v3809
  %v4277 = vadd.f32 %v4197, %v3814
  %v4278 = vadd.f32 %v4198, %v3814
  %v4279 = vadd.f32 %v4199, %v3819
  %v4280 = vadd.f32 %v4200, %v3819
  %v4281 = vadd.f32 %v4201, %v3824
  %v4282 = vadd.f32 %v4202, %v3824
  %v4283 = vadd.f32 %v4203, %v3829
  %v4284 = vadd.f32 %v4204, %v3829
  %v4285 = vadd.f32 %v4205, %v3834
  %v4286 = vadd.f32 %v4206, %v3834
  %v4287 = vadd.f32 %v4207, %v3839
  %v4288 = vadd.f32 %v4208, %v3839
  %v4289 = vadd.f32 %v4209, %v3844
  %v4290 = vadd.f32 %v4210, %v3844
  %v4291 = vadd.f32 %v4211, %v3849
  %v4292 = vadd.f32 %v4212, %v3849
  %v4293 = vadd.f32 %v4213, %v3854
  %v4294 = vadd.f32 %v4214, %v3854
  %v4295 = vadd.f32 %v4215, %v3859
  %v4296 = vadd.f32 %v4216, %v3859
  %v4297 = vadd.f32 %v4217, %v3864
  %v4298 = vadd.f32 %v4218, %v3864
  %v4299 = vadd.f32 %v4219, %v3869
  %v4300 = vadd.f32 %v4220, %v3869
  %v4301 = vadd.f32 %v4221, %v3874
  %v4302 = vadd.f32 %v4222, %v3874
  %v4303 = vadd.f32 %v4223, %v3879
  %v4304 = vadd.f32 %v4224, %v3879
  %v4305 = vadd.f32 %v4225, %v3884
  %v4306 = vadd.f32 %v4226, %v3884
  %v4307 = vadd.f32 %v4227, %v3889
  %v4308 = vadd.f32 %v4228, %v3889
  %v4309 = vadd.f32 %v4229, %v3894
  %v4310 = vadd.f32 %v4230, %v3894
  %v4311 = vadd.f32 %v4231, %v3899
  %v4312 = vadd.f32 %v4232, %v3899
  %v4313 = vadd.f32 %v4233, %v3904
  %v4314 = vadd.f32 %v4234, %v3904
  %v4315 = vadd.f32 %v4235, %v3909
  %v4316 = vadd.f32 %v4236, %v3909
  %v4317 = vadd.f32 %v4237, %v3914
  %v4318 = vadd.f32 %v4238, %v3914
  %v4319 = vadd.f32 %v4239, %v3919
  %v4320 = vadd.f32 %v4240, %v3919
  %4321 = vst [vmem:[%s2360] sm:$0xff] %v4241
  %4322 = vst.msk [vmem:[%s2360 + $0x8] sm:$0xff] %vm1029, %v4242
  %4323 = vst [vmem:[%s2360 + $0x10] sm:$0xff] %v4243
  %4324 = vst.msk [vmem:[%s2360 + $0x18] sm:$0xff] %vm1029, %v4244
  %4325 = vst [vmem:[%s2360 + $0x20] sm:$0xff] %v4245
  %4326 = vst.msk [vmem:[%s2360 + $0x28] sm:$0xff] %vm1029, %v4246
  %4327 = vst [vmem:[%s2360 + $0x30] sm:$0xff] %v4247
  %4328 = vst.msk [vmem:[%s2360 + $0x38] sm:$0xff] %vm1029, %v4248
  %4329 = vst [vmem:[%s2360 + $0x40] sm:$0xff] %v4249
  %4330 = vst.msk [vmem:[%s2360 + $0x48] sm:$0xff] %vm1029, %v4250
  %4331 = vst [vmem:[%s2360 + $0x50] sm:$0xff] %v4251
  %4332 = vst.msk [vmem:[%s2360 + $0x58] sm:$0xff] %vm1029, %v4252
  %4333 = vst [vmem:[%s2360 + $0x60] sm:$0xff] %v4253
  %4334 = vst.msk [vmem:[%s2360 + $0x68] sm:$0xff] %vm1029, %v4254
  %4335 = vst [vmem:[%s2360 + $0x70] sm:$0xff] %v4255
  %4336 = vst.msk [vmem:[%s2360 + $0x78] sm:$0xff] %vm1029, %v4256
  %4337 = vst [vmem:[%s2360 + $0x80] sm:$0xff] %v4257
  %4338 = vst.msk [vmem:[%s2360 + $0x88] sm:$0xff] %vm1029, %v4258
  %4339 = vst [vmem:[%s2360 + $0x90] sm:$0xff] %v4259
  %4340 = vst.msk [vmem:[%s2360 + $0x98] sm:$0xff] %vm1029, %v4260
  %4341 = vst [vmem:[%s2360 + $0xa0] sm:$0xff] %v4261
  %4342 = vst.msk [vmem:[%s2360 + $0xa8] sm:$0xff] %vm1029, %v4262
  %4343 = vst [vmem:[%s2360 + $0xb0] sm:$0xff] %v4263
  %4344 = vst.msk [vmem:[%s2360 + $0xb8] sm:$0xff] %vm1029, %v4264
  %4345 = vst [vmem:[%s2360 + $0xc0] sm:$0xff] %v4265
  %4346 = vst.msk [vmem:[%s2360 + $0xc8] sm:$0xff] %vm1029, %v4266
  %4347 = vst [vmem:[%s2360 + $0xd0] sm:$0xff] %v4267
  %4348 = vst.msk [vmem:[%s2360 + $0xd8] sm:$0xff] %vm1029, %v4268
  %4349 = vst [vmem:[%s2360 + $0xe0] sm:$0xff] %v4269
  %4350 = vst.msk [vmem:[%s2360 + $0xe8] sm:$0xff] %vm1029, %v4270
  %4351 = vst [vmem:[%s2360 + $0xf0] sm:$0xff] %v4271
  %4352 = vst.msk [vmem:[%s2360 + $0xf8] sm:$0xff] %vm1029, %v4272
  %4353 = vst [vmem:[%s2360 + $0x100] sm:$0xff] %v4273
  %4354 = vst.msk [vmem:[%s2360 + $0x108] sm:$0xff] %vm1029, %v4274
  %4355 = vst [vmem:[%s2360 + $0x110] sm:$0xff] %v4275
  %4356 = vst.msk [vmem:[%s2360 + $0x118] sm:$0xff] %vm1029, %v4276
  %4357 = vst [vmem:[%s2360 + $0x120] sm:$0xff] %v4277
  %4358 = vst.msk [vmem:[%s2360 + $0x128] sm:$0xff] %vm1029, %v4278
  %4359 = vst [vmem:[%s2360 + $0x130] sm:$0xff] %v4279
  %4360 = vst.msk [vmem:[%s2360 + $0x138] sm:$0xff] %vm1029, %v4280
  %4361 = vst [vmem:[%s2360 + $0x140] sm:$0xff] %v4281
  %4362 = vst.msk [vmem:[%s2360 + $0x148] sm:$0xff] %vm1029, %v4282
  %4363 = vst [vmem:[%s2360 + $0x150] sm:$0xff] %v4283
  %4364 = vst.msk [vmem:[%s2360 + $0x158] sm:$0xff] %vm1029, %v4284
  %4365 = vst [vmem:[%s2360 + $0x160] sm:$0xff] %v4285
  %4366 = vst.msk [vmem:[%s2360 + $0x168] sm:$0xff] %vm1029, %v4286
  %4367 = vst [vmem:[%s2360 + $0x170] sm:$0xff] %v4287
  %4368 = vst.msk [vmem:[%s2360 + $0x178] sm:$0xff] %vm1029, %v4288
  %4369 = vst [vmem:[%s2360 + $0x180] sm:$0xff] %v4289
  %4370 = vst.msk [vmem:[%s2360 + $0x188] sm:$0xff] %vm1029, %v4290
  %4371 = vst [vmem:[%s2360 + $0x190] sm:$0xff] %v4291
  %4372 = vst.msk [vmem:[%s2360 + $0x198] sm:$0xff] %vm1029, %v4292
  %4373 = vst [vmem:[%s2360 + $0x1a0] sm:$0xff] %v4293
  %4374 = vst.msk [vmem:[%s2360 + $0x1a8] sm:$0xff] %vm1029, %v4294
  %4375 = vst [vmem:[%s2360 + $0x1b0] sm:$0xff] %v4295
  %4376 = vst.msk [vmem:[%s2360 + $0x1b8] sm:$0xff] %vm1029, %v4296
  %4377 = vst [vmem:[%s2360 + $0x1c0] sm:$0xff] %v4297
  %4378 = vst.msk [vmem:[%s2360 + $0x1c8] sm:$0xff] %vm1029, %v4298
  %4379 = vst [vmem:[%s2360 + $0x1d0] sm:$0xff] %v4299
  %4380 = vst.msk [vmem:[%s2360 + $0x1d8] sm:$0xff] %vm1029, %v4300
  %4381 = vst [vmem:[%s2360 + $0x1e0] sm:$0xff] %v4301
  %4382 = vst.msk [vmem:[%s2360 + $0x1e8] sm:$0xff] %vm1029, %v4302
  %4383 = vst [vmem:[%s2360 + $0x1f0] sm:$0xff] %v4303
  %4384 = vst.msk [vmem:[%s2360 + $0x1f8] sm:$0xff] %vm1029, %v4304
  %4385 = vst [vmem:[%s2360 + $0x200] sm:$0xff] %v4305
  %4386 = vst.msk [vmem:[%s2360 + $0x208] sm:$0xff] %vm1029, %v4306
  %4387 = vst [vmem:[%s2360 + $0x210] sm:$0xff] %v4307
  %4388 = vst.msk [vmem:[%s2360 + $0x218] sm:$0xff] %vm1029, %v4308
  %4389 = vst [vmem:[%s2360 + $0x220] sm:$0xff] %v4309
  %4390 = vst.msk [vmem:[%s2360 + $0x228] sm:$0xff] %vm1029, %v4310
  %4391 = vst [vmem:[%s2360 + $0x230] sm:$0xff] %v4311
  %4392 = vst.msk [vmem:[%s2360 + $0x238] sm:$0xff] %vm1029, %v4312
  %4393 = vst [vmem:[%s2360 + $0x240] sm:$0xff] %v4313
  %4394 = vst.msk [vmem:[%s2360 + $0x248] sm:$0xff] %vm1029, %v4314
  %4395 = vst [vmem:[%s2360 + $0x250] sm:$0xff] %v4315
  %4396 = vst.msk [vmem:[%s2360 + $0x258] sm:$0xff] %vm1029, %v4316
  %4397 = vst [vmem:[%s2360 + $0x260] sm:$0xff] %v4317
  %4398 = vst.msk [vmem:[%s2360 + $0x268] sm:$0xff] %vm1029, %v4318
  %4399 = vst [vmem:[%s2360 + $0x270] sm:$0xff] %v4319
  %4400 = vst.msk [vmem:[%s2360 + $0x278] sm:$0xff] %vm1029, %v4320
  // Predicated region
  $region18: #{tpu_custom_call.1} parent=0 // pred_check
    _
  $region19: #{tpu_custom_call.1} parent=0 // pred_check_branch
    %4402 = sbr.rel (0) target = $region21
  $region20: #{tpu_custom_call.1} parent=0 // pred_region
    _
  $region21: #{tpu_custom_call.1} parent=0 // pred_fallthru
    _
  // Predicated region
  $region22: #{tpu_custom_call.1} parent=0 // pred_check
    _
  $region23: #{tpu_custom_call.1} parent=0 // pred_check_branch
    %4404 = sbr.rel (0) target = $region25
  $region24: #{tpu_custom_call.1} parent=0 // pred_region
    _
  $region25: #{tpu_custom_call.1} parent=0 // pred_fallthru
    _

</llo_original>
